<compile_context>
chip_gen: v7x
topology: tpu7x:2x2x1
jax: 0.10.0
libtpu: 0.0.40
codegen_flags: <defaults>
</compile_context>

<pallas_src>
import functools

import jax
import jax.numpy as jnp
from jax.experimental import pallas as pl
from jax.experimental.pallas import tpu as pltpu

BN_EPS = 1e-5

# MXU / lane-aligned tile sizes (multiples of 128; M tile a multiple of 256).
TILE_M = 256
TILE_K = 128
TILE_C = 128


def _round_up(x, m):
    return (x + m - 1) // m * m


def _pad2(a, rows, cols):
    return jnp.pad(a, ((0, rows - a.shape[0]), (0, cols - a.shape[1])))


# ---------------------------------------------------------------------------
# Pass 1: tiled matmul (bf16 inputs -> f32 accumulate) + per-channel stats.
# ---------------------------------------------------------------------------
def _matmul_stats_kernel(p_ref, w_ref, y_ref, sum_ref, sq_ref, acc_ref):
    mi = pl.program_id(1)
    ki = pl.program_id(2)
    nk = pl.num_programs(2)

    @pl.when((mi == 0) & (ki == 0))
    def _init_stats():
        sum_ref[...] = jnp.zeros_like(sum_ref)
        sq_ref[...] = jnp.zeros_like(sq_ref)

    @pl.when(ki == 0)
    def _init_acc():
        acc_ref[...] = jnp.zeros_like(acc_ref)

    acc_ref[...] += jnp.dot(p_ref[...], w_ref[...],
                            preferred_element_type=jnp.float32)

    @pl.when(ki == nk - 1)
    def _finalize():
        y = acc_ref[...]
        y_ref[...] = y.astype(y_ref.dtype)
        sum_ref[...] += jnp.sum(y, axis=0, keepdims=True)
        sq_ref[...] += jnp.sum(y * y, axis=0, keepdims=True)


def _matmul_stats(patches, w_mat, *, tm=TILE_M, tk=TILE_K, tc=TILE_C):
    """patches[M,K] @ w_mat[K,C] -> (y[Mp,Cp] f32, sum[1,Cp], sumsq[1,Cp]).

    Inputs are zero-padded (M->Mp, K->Kp, C->Cp) and cast to bf16 for the MXU;
    the zero padding contributes nothing to the matmul or to the statistics.
    """
    m, k = patches.shape
    k2, c = w_mat.shape
    assert k == k2
    mp, kp, cp = _round_up(m, tm), _round_up(k, tk), _round_up(c, tc)

    p = _pad2(patches.astype(jnp.bfloat16), mp, kp)
    w = _pad2(w_mat.astype(jnp.bfloat16), kp, cp)

    n_m, n_k, n_c = mp // tm, kp // tk, cp // tc

    # double-buffered bf16 inputs + f32 y/acc/stat buffers, with headroom.
    vmem_bytes = 2 * (tm * tk * 2 + tk * tc * 2) + 3 * tm * tc * 4 + 8 * tc * 4
    vmem_limit = int(min(max(4 * vmem_bytes, 32 * 1024 * 1024),
                         64 * 1024 * 1024))

    y, ssum, ssq = pl.pallas_call(
        _matmul_stats_kernel,
        out_shape=(
            jax.ShapeDtypeStruct((mp, cp), jnp.float32),
            jax.ShapeDtypeStruct((1, cp), jnp.float32),
            jax.ShapeDtypeStruct((1, cp), jnp.float32),
        ),
        grid_spec=pltpu.PrefetchScalarGridSpec(
            num_scalar_prefetch=0,
            grid=(n_c, n_m, n_k),
            in_specs=[
                pl.BlockSpec((tm, tk), lambda ci, mi, ki: (mi, ki)),
                pl.BlockSpec((tk, tc), lambda ci, mi, ki: (ki, ci)),
            ],
            out_specs=(
                pl.BlockSpec((tm, tc), lambda ci, mi, ki: (mi, ci)),
                pl.BlockSpec((1, tc), lambda ci, mi, ki: (0, ci)),
                pl.BlockSpec((1, tc), lambda ci, mi, ki: (0, ci)),
            ),
            scratch_shapes=[pltpu.VMEM((tm, tc), jnp.float32)],
        ),
        compiler_params=pltpu.CompilerParams(
            # Cout tiles are independent -> "parallel" (megacore / 2nd TC).
            # M and K carry accumulators (BN stats / matmul) -> "arbitrary".
            # TODO(synk): per-core partial BN sums + cross-core combine would
            # also let the M axis go "parallel" on v7x.
            dimension_semantics=("parallel", "arbitrary", "arbitrary"),
            vmem_limit_bytes=vmem_limit,
        ),
    )(p, w)
    return y, ssum, ssq


# ---------------------------------------------------------------------------
# Pass 2: lane-dense elementwise scale/shift (+ReLU, + optional residual add).
# ---------------------------------------------------------------------------
def _affine_act_kernel(y_ref, scale_ref, shift_ref, out_ref, *, relu):
    v = y_ref[...] * scale_ref[...] + shift_ref[...]
    if relu:
        v = jnp.maximum(v, 0.0)
    out_ref[...] = v.astype(out_ref.dtype)


def _affine_act_add_kernel(y_ref, scale_ref, shift_ref, res_ref, out_ref, *,
                           relu):
    v = y_ref[...] * scale_ref[...] + shift_ref[...]
    if relu:
        v = jnp.maximum(v, 0.0)
    out_ref[...] = (v + res_ref[...]).astype(out_ref.dtype)


def _affine_act(y_pad, scale, shift, residual_pad=None, *, relu,
                tm=TILE_M, tc=TILE_C):
    """out = [relu](y * scale + shift) [+ residual]; all operands [Mp, Cp]."""
    mp, cp = y_pad.shape
    n_m, n_c = mp // tm, cp // tc

    in_specs = [
        pl.BlockSpec((tm, tc), lambda mi, ci: (mi, ci)),
        pl.BlockSpec((1, tc), lambda mi, ci: (0, ci)),
        pl.BlockSpec((1, tc), lambda mi, ci: (0, ci)),
    ]
    args = [y_pad, scale, shift]
    if residual_pad is None:
        kernel = functools.partial(_affine_act_kernel, relu=relu)
    else:
        kernel = functools.partial(_affine_act_add_kernel, relu=relu)
        in_specs.append(pl.BlockSpec((tm, tc), lambda mi, ci: (mi, ci)))
        args.append(residual_pad)

    vmem_bytes = (len(args) + 1) * 2 * tm * tc * 4
    vmem_limit = int(min(max(4 * vmem_bytes, 16 * 1024 * 1024),
                         64 * 1024 * 1024))

    return pl.pallas_call(
        kernel,
        out_shape=jax.ShapeDtypeStruct((mp, cp), jnp.float32),
        grid_spec=pltpu.PrefetchScalarGridSpec(
            num_scalar_prefetch=0,
            grid=(n_m, n_c),
            in_specs=in_specs,
            out_specs=pl.BlockSpec((tm, tc), lambda mi, ci: (mi, ci)),
        ),
        compiler_params=pltpu.CompilerParams(
            dimension_semantics=("parallel", "parallel"),
            vmem_limit_bytes=vmem_limit,
        ),
    )(*args)


def _bn_scale_shift(ssum, ssq, m_real, gamma, beta):
    """Fused per-channel scale/shift from global (over M=N*OH*OW) batch stats."""
    cp = ssum.shape[1]
    g = jnp.zeros((1, cp), jnp.float32).at[0, :gamma.shape[0]].set(
        gamma.astype(jnp.float32))
    b = jnp.zeros((1, cp), jnp.float32).at[0, :beta.shape[0]].set(
        beta.astype(jnp.float32))
    mean = ssum / float(m_real)
    # Clamp: E[y^2] - mean^2 can go slightly negative from cancellation.
    var = jnp.maximum(ssq / float(m_real) - mean * mean, 0.0)
    scale = g * jax.lax.rsqrt(var + BN_EPS)
    shift = b - mean * scale
    return scale, shift


# ---------------------------------------------------------------------------
# Conv wrappers (NHWC in / NHWC out).
# ---------------------------------------------------------------------------
def _conv_patches_nhwc(x, kh, kw, stride, padding):
    """NHWC -> ([M, KH*KW*C] patches, OH, OW). 1x1 convs skip im2col entirely."""
    n, h, w, c = x.shape
    if kh == 1 and kw == 1 and padding == 0:
        if stride != 1:
            x = x[:, ::stride, ::stride, :]
        oh, ow = x.shape[1], x.shape[2]
        return x.reshape(n * oh * ow, c), oh, ow
    # TODO(synk): build the KxK patches inside the kernel (halo row loads)
    # instead of materializing the im2col buffer in HBM.
    xp = jnp.pad(x, ((0, 0), (padding, padding), (padding, padding), (0, 0)))
    oh = (h + 2 * padding - kh) // stride + 1
    ow = (w + 2 * padding - kw) // stride + 1
    cols = []
    for i in range(kh):
        for j in range(kw):
            cols.append(xp[:, i:i + stride * oh:stride,
                           j:j + stride * ow:stride, :])
    p = jnp.stack(cols, axis=3)                      # [N, OH, OW, KH*KW, C]
    return p.reshape(n * oh * ow, kh * kw * c), oh, ow


def _weight_matrix(weight):
    cout, cin, kh, kw = weight.shape
    # row order (kh, kw, cin) matches the patch layout above.
    return weight.transpose(2, 3, 1, 0).reshape(kh * kw * cin, cout)


def conv_bn_relu_nhwc(x, weight, gamma, beta, *, stride=1, relu=True):
    """Conv2d(bias=False) -> BatchNorm2d (batch stats) -> ReLU."""
    cout, _, kh, kw = weight.shape
    n = x.shape[0]
    patches, oh, ow = _conv_patches_nhwc(x, kh, kw, stride, kh // 2)
    y_pad, ssum, ssq = _matmul_stats(patches, _weight_matrix(weight))
    m = n * oh * ow
    scale, shift = _bn_scale_shift(ssum, ssq, m, gamma, beta)
    out_pad = _affine_act(y_pad, scale, shift, relu=relu)
    return out_pad[:m, :cout].reshape(n, oh, ow, cout)


def conv_bias_nhwc(x, weight, bias, *, stride=1):
    """Plain 1x1 Conv2d (with bias), no BN / activation (residual projection)."""
    cout, _, kh, kw = weight.shape
    n = x.shape[0]
    patches, oh, ow = _conv_patches_nhwc(x, kh, kw, stride, kh // 2)
    y_pad, _, _ = _matmul_stats(patches, _weight_matrix(weight))
    cp = y_pad.shape[1]
    scale = jnp.ones((1, cp), jnp.float32)
    shift = jnp.zeros((1, cp), jnp.float32).at[0, :cout].set(
        bias.astype(jnp.float32))
    m = n * oh * ow
    out_pad = _affine_act(y_pad, scale, shift, relu=False)
    return out_pad[:m, :cout].reshape(n, oh, ow, cout)


def conv_bn_relu_add_nhwc(x, weight, gamma, beta, residual, *, relu=True):
    """1x1 conv -> BN -> [ReLU] -> + residual, with the add fused into pass 2."""
    cout, _, kh, kw = weight.shape
    n = x.shape[0]
    patches, oh, ow = _conv_patches_nhwc(x, kh, kw, 1, kh // 2)
    y_pad, ssum, ssq = _matmul_stats(patches, _weight_matrix(weight))
    m = n * oh * ow
    scale, shift = _bn_scale_shift(ssum, ssq, m, gamma, beta)
    mp, cp = y_pad.shape
    res_pad = _pad2(residual.reshape(m, cout).astype(jnp.float32), mp, cp)
    out_pad = _affine_act(y_pad, scale, shift, res_pad, relu=relu)
    return out_pad[:m, :cout].reshape(n, oh, ow, cout)


def maxpool_nhwc(x, kernel, stride, padding):
    # TODO(synk): pooling stays in plain JAX (lax.reduce_window), no Pallas kernel.
    return jax.lax.reduce_window(
        x, jnp.array(-jnp.inf, x.dtype), jax.lax.max,
        window_dimensions=(1, kernel, kernel, 1),
        window_strides=(1, stride, stride, 1),
        padding=((0, 0), (padding, padding), (padding, padding), (0, 0)))


# ---------------------------------------------------------------------------
# Inception forward (branch_0: 1x1; branch_1: 1x1->3x3; branch_2: maxpool->1x1;
# then concat -> last_conv(1x1) -> last_bn -> ReLU -> + proj(x) residual).
# ---------------------------------------------------------------------------
def inception_forward(params, x_nchw, *, in_stride=1, pre_act=False,
                      last_act=True):
    x = jnp.transpose(x_nchw, (0, 2, 3, 1))          # NCHW -> NHWC (once)
    x_sc = x
    if pre_act:
        x = jnp.maximum(x, 0.0)

    b0 = params['branch0']
    h0 = conv_bn_relu_nhwc(x, b0['w'], b0['gamma'], b0['beta'],
                           stride=in_stride)

    b1 = params['branch1']
    h1 = conv_bn_relu_nhwc(x, b1['w0'], b1['g0'], b1['b0'], stride=in_stride)
    h1 = conv_bn_relu_nhwc(h1, b1['w1'], b1['g1'], b1['b1'], stride=1)

    b2 = params['branch2']
    hp = maxpool_nhwc(x, 3, in_stride, 1)
    # nn.Conv2d bias followed by BatchNorm cancels exactly in the
    # normalization, so the kernel path drops it (reference keeps it).
    h2 = conv_bn_relu_nhwc(hp, b2['w'], b2['gamma'], b2['beta'], stride=1)

    cat = jnp.concatenate([h0, h1, h2], axis=-1)

    if 'proj' in params:
        res = conv_bias_nhwc(x_sc, params['proj']['w'], params['proj']['b'],
                             stride=in_stride)
    else:
        res = x_sc

    last = params['last']
    out = conv_bn_relu_add_nhwc(cat, last['w'], last['gamma'], last['beta'],
                                res, relu=last_act)
    return jnp.transpose(out, (0, 3, 1, 2))          # NHWC -> NCHW (once)


# ---------------------------------------------------------------------------
# Pure-JAX reference (NCHW, faithful to the PyTorch module incl. conv biases).
# ---------------------------------------------------------------------------
def _ref_conv(x, w, stride, padding, bias=None):
    y = jax.lax.conv_general_dilated(
        x.astype(jnp.bfloat16), w.astype(jnp.bfloat16),
        window_strides=(stride, stride),
        padding=[(padding, padding), (padding, padding)],
        dimension_numbers=("NCHW", "OIHW", "NCHW"),
        preferred_element_type=jnp.float32)
    if bias is not None:
        y = y + bias.reshape(1, -1, 1, 1).astype(jnp.float32)
    return y


def _ref_bn(y, gamma, beta, relu=True):
    mean = jnp.mean(y, axis=(0, 2, 3), keepdims=True)
    var = jnp.var(y, axis=(0, 2, 3), keepdims=True)
    y = (y - mean) * jax.lax.rsqrt(var + BN_EPS)
    y = y * gamma.reshape(1, -1, 1, 1) + beta.reshape(1, -1, 1, 1)
    return jnp.maximum(y, 0.0) if relu else y


def _ref_maxpool(x, k, stride, pad):
    return jax.lax.reduce_window(
        x, jnp.array(-jnp.inf, x.dtype), jax.lax.max,
        (1, 1, k, k), (1, 1, stride, stride),
        ((0, 0), (0, 0), (pad, pad), (pad, pad)))


def inception_reference(params, x, *, in_stride=1, pre_act=False,
                        last_act=True):
    x_sc = x
    if pre_act:
        x = jnp.maximum(x, 0.0)
    b0 = params['branch0']
    h0 = _ref_bn(_ref_conv(x, b0['w'], in_stride, 0), b0['gamma'], b0['beta'])
    b1 = params['branch1']
    h1 = _ref_bn(_ref_conv(x, b1['w0'], in_stride, 0), b1['g0'], b1['b0'])
    h1 = _ref_bn(_ref_conv(h1, b1['w1'], 1, 1), b1['g1'], b1['b1'])
    b2 = params['branch2']
    hp = _ref_maxpool(x, 3, in_stride, 1)
    h2 = _ref_bn(_ref_conv(hp, b2['w'], 1, 0, bias=b2['bias']),
                 b2['gamma'], b2['beta'])
    cat = jnp.concatenate([h0, h1, h2], axis=1)
    last = params['last']
    y = _ref_bn(_ref_conv(cat, last['w'], 1, 0, bias=last['bias']),
                last['gamma'], last['beta'], relu=last_act)
    if 'proj' in params:
        res = _ref_conv(x_sc, params['proj']['w'], in_stride, 0,
                        bias=params['proj']['b'])
    else:
        res = x_sc
    return y + res


if __name__ == "__main__":
    key = jax.random.PRNGKey(0)
    ks = jax.random.split(key, 24)

    N, CIN, H, W = 2, 8, 16, 16
    N_OUT = 16
    C_B0, C_B1A, C_B1B, C_B2 = 8, 8, 16, 8            # branch widths; cat = 32

    def rn(k, shape, s=1.0):
        return s * jax.random.normal(k, shape, dtype=jnp.float32)

    params = {
        'branch0': dict(w=rn(ks[0], (C_B0, CIN, 1, 1), 0.35),
                        gamma=1.0 + rn(ks[1], (C_B0,), 0.1),
                        beta=rn(ks[2], (C_B0,), 0.1)),
        'branch1': dict(w0=rn(ks[3], (C_B1A, CIN, 1, 1), 0.35),
                        g0=1.0 + rn(ks[4], (C_B1A,), 0.1),
                        b0=rn(ks[5], (C_B1A,), 0.1),
                        w1=rn(ks[6], (C_B1B, C_B1A, 3, 3), 0.12),
                        g1=1.0 + rn(ks[7], (C_B1B,), 0.1),
                        b1=rn(ks[8], (C_B1B,), 0.1)),
        'branch2': dict(w=rn(ks[9], (C_B2, CIN, 1, 1), 0.35),
                        bias=rn(ks[10], (C_B2,), 0.1),
                        gamma=1.0 + rn(ks[11], (C_B2,), 0.1),
                        beta=rn(ks[12], (C_B2,), 0.1)),
        'last': dict(w=rn(ks[13], (N_OUT, C_B0 + C_B1B + C_B2, 1, 1), 0.18),
                     bias=rn(ks[14], (N_OUT,), 0.1),
                     gamma=1.0 + rn(ks[15], (N_OUT,), 0.1),
                     beta=rn(ks[16], (N_OUT,), 0.1)),
        'proj': dict(w=rn(ks[17], (N_OUT, CIN, 1, 1), 0.3),
                     b=rn(ks[18], (N_OUT,), 0.1)),
    }
    x = rn(ks[19], (N, CIN, H, W), 1.0)

    fwd = jax.jit(functools.partial(inception_forward,
                                    in_stride=1, pre_act=False, last_act=True))
    out = jax.block_until_ready(fwd(params, x))

    ref = inception_reference(params, x, in_stride=1, pre_act=False,
                              last_act=True)
    assert out.shape == (N, N_OUT, H, W), out.shape
    err = float(jnp.max(jnp.abs(out - ref)))
    # Both paths feed bf16 to the MXU with f32 accumulation; remaining error is
    # accumulation order plus occasional one-ulp bf16 re-rounding of
    # intermediate activations.
    assert err < 5e-2, err
    print("KERNEL_OK")
</pallas_src>

<mosaic_0001>
module attributes {stable_mosaic.version = 11 : i64} {
  func.func @_affine_act_kernel(%arg0: i32, %arg1: i32, %arg2: memref<256x128xf32, #tpu.memory_space<vmem>>, %arg3: memref<1x128xf32, #tpu.memory_space<vmem>>, %arg4: memref<1x128xf32, #tpu.memory_space<vmem>>, %arg5: memref<256x128xf32, #tpu.memory_space<vmem>>) attributes {dimension_semantics = [#tpu.dimension_semantics<parallel>, #tpu.dimension_semantics<parallel>], iteration_bounds = array<i64: 2, 1>, scalar_prefetch = 0 : i64, scratch_operands = 0 : i64, tpu.core_type = #tpu.core_type<tc>, window_params = [{transform_indices = @transform_0, window_bounds = array<i64: 256, 128>}, {transform_indices = @transform_1, window_bounds = array<i64: 1, 128>}, {transform_indices = @transform_2, window_bounds = array<i64: 1, 128>}, {transform_indices = @transform_3, window_bounds = array<i64: 256, 128>}]} {
    %c0 = arith.constant 0 : index
    %c0_0 = arith.constant 0 : index
    %0 = vector.load %arg2[%c0, %c0_0] : memref<256x128xf32, #tpu.memory_space<vmem>>, vector<256x128xf32>
    %c0_1 = arith.constant 0 : index
    %c0_2 = arith.constant 0 : index
    %1 = vector.load %arg3[%c0_1, %c0_2] : memref<1x128xf32, #tpu.memory_space<vmem>>, vector<1x128xf32>
    %2 = vector.broadcast %1 : vector<1x128xf32> to vector<256x128xf32>
    %3 = arith.mulf %0, %2 : vector<256x128xf32>
    %c0_3 = arith.constant 0 : index
    %c0_4 = arith.constant 0 : index
    %4 = vector.load %arg4[%c0_3, %c0_4] : memref<1x128xf32, #tpu.memory_space<vmem>>, vector<1x128xf32>
    %5 = vector.broadcast %4 : vector<1x128xf32> to vector<256x128xf32>
    %6 = arith.addf %3, %5 : vector<256x128xf32>
    %cst = arith.constant 0.000000e+00 : f32
    %7 = vector.broadcast %cst : f32 to vector<256x128xf32>
    %8 = arith.maximumf %6, %7 : vector<256x128xf32>
    %c0_5 = arith.constant 0 : index
    %c0_6 = arith.constant 0 : index
    %9 = vector.load %arg5[%c0_5, %c0_6] : memref<256x128xf32, #tpu.memory_space<vmem>>, vector<256x128xf32>
    tpu.vector_store %arg5[%c0_5, %c0_6], %8 {strides = array<i32>} : memref<256x128xf32, #tpu.memory_space<vmem>>, vector<256x128xf32>,
    return
  }
  func.func @transform_0(%arg0: i32, %arg1: i32) -> (i32, i32) {
    %c0_i32 = arith.constant 0 : i32
    return %arg0, %arg1 : i32, i32
  }
  func.func @transform_1(%arg0: i32, %arg1: i32) -> (i32, i32) {
    %c0_i32 = arith.constant 0 : i32
    %c0_i32_0 = arith.constant 0 : i32
    return %c0_i32, %arg1 : i32, i32
  }
  func.func @transform_2(%arg0: i32, %arg1: i32) -> (i32, i32) {
    %c0_i32 = arith.constant 0 : i32
    %c0_i32_0 = arith.constant 0 : i32
    return %c0_i32, %arg1 : i32, i32
  }
  func.func @transform_3(%arg0: i32, %arg1: i32) -> (i32, i32) {
    %c0_i32 = arith.constant 0 : i32
    return %arg0, %arg1 : i32, i32
  }
}

module attributes {stable_mosaic.version = 11 : i64} {
  func.func @_matmul_stats_kernel(%arg0: i32, %arg1: i32, %arg2: i32, %arg3: memref<256x128xbf16, #tpu.memory_space<vmem>>, %arg4: memref<128x128xbf16, #tpu.memory_space<vmem>>, %arg5: memref<256x128xf32, #tpu.memory_space<vmem>>, %arg6: memref<1x128xf32, #tpu.memory_space<vmem>>, %arg7: memref<1x128xf32, #tpu.memory_space<vmem>>, %arg8: memref<256x128xf32, #tpu.memory_space<vmem>>) attributes {dimension_semantics = [#tpu.dimension_semantics<parallel>, #tpu.dimension_semantics<arbitrary>, #tpu.dimension_semantics<arbitrary>], iteration_bounds = array<i64: 1, 2, 1>, scalar_prefetch = 0 : i64, scratch_operands = 1 : i64, tpu.core_type = #tpu.core_type<tc>, window_params = [{transform_indices = @transform_0, window_bounds = array<i64: 256, 128>}, {transform_indices = @transform_1, window_bounds = array<i64: 128, 128>}, {transform_indices = @transform_2, window_bounds = array<i64: 256, 128>}, {transform_indices = @transform_3, window_bounds = array<i64: 1, 128>}, {transform_indices = @transform_4, window_bounds = array<i64: 1, 128>}]} {
    %c0_i32 = arith.constant 0 : i32
    %0 = arith.cmpi eq, %arg1, %c0_i32 : i32
    %c0_i32_0 = arith.constant 0 : i32
    %1 = arith.cmpi eq, %arg2, %c0_i32_0 : i32
    %2 = arith.andi %0, %1 : i1
    %3 = arith.extui %2 : i1 to i32
    %c0_i32_1 = arith.constant 0 : i32
    %4 = arith.cmpi ne, %3, %c0_i32_1 : i32
    scf.if %4 {
      %cst_13 = arith.constant 0.000000e+00 : f32
      %17 = vector.broadcast %cst_13 : f32 to vector<1x128xf32>
      %c0_14 = arith.constant 0 : index
      %c0_15 = arith.constant 0 : index
      %18 = vector.load %arg6[%c0_14, %c0_15] : memref<1x128xf32, #tpu.memory_space<vmem>>, vector<1x128xf32>
      tpu.vector_store %arg6[%c0_14, %c0_15], %17 {strides = array<i32>} : memref<1x128xf32, #tpu.memory_space<vmem>>, vector<1x128xf32>,
      %cst_16 = arith.constant 0.000000e+00 : f32
      %19 = vector.broadcast %cst_16 : f32 to vector<1x128xf32>
      %c0_17 = arith.constant 0 : index
      %c0_18 = arith.constant 0 : index
      %20 = vector.load %arg7[%c0_17, %c0_18] : memref<1x128xf32, #tpu.memory_space<vmem>>, vector<1x128xf32>
      tpu.vector_store %arg7[%c0_17, %c0_18], %19 {strides = array<i32>} : memref<1x128xf32, #tpu.memory_space<vmem>>, vector<1x128xf32>,
    } else {
    }
    %c0_i32_2 = arith.constant 0 : i32
    %5 = arith.cmpi eq, %arg2, %c0_i32_2 : i32
    %6 = arith.extui %5 : i1 to i32
    %c0_i32_3 = arith.constant 0 : i32
    %7 = arith.cmpi ne, %6, %c0_i32_3 : i32
    scf.if %7 {
      %cst_13 = arith.constant 0.000000e+00 : f32
      %17 = vector.broadcast %cst_13 : f32 to vector<256x128xf32>
      %c0_14 = arith.constant 0 : index
      %c0_15 = arith.constant 0 : index
      %18 = vector.load %arg8[%c0_14, %c0_15] : memref<256x128xf32, #tpu.memory_space<vmem>>, vector<256x128xf32>
      tpu.vector_store %arg8[%c0_14, %c0_15], %17 {strides = array<i32>} : memref<256x128xf32, #tpu.memory_space<vmem>>, vector<256x128xf32>,
    } else {
    }
    %c0 = arith.constant 0 : index
    %c0_4 = arith.constant 0 : index
    %8 = vector.load %arg8[%c0, %c0_4] : memref<256x128xf32, #tpu.memory_space<vmem>>, vector<256x128xf32>
    %c0_5 = arith.constant 0 : index
    %c0_6 = arith.constant 0 : index
    %9 = vector.load %arg3[%c0_5, %c0_6] : memref<256x128xbf16, #tpu.memory_space<vmem>>, vector<256x128xbf16>
    %c0_7 = arith.constant 0 : index
    %c0_8 = arith.constant 0 : index
    %10 = vector.load %arg4[%c0_7, %c0_8] : memref<128x128xbf16, #tpu.memory_space<vmem>>, vector<128x128xbf16>
    %cst = arith.constant dense<0.000000e+00> : vector<256x128xf32>
    %11 = tpu.matmul %9, %10, %cst {dimension_numbers = #tpu.dot_dimension_numbers<[1], [0], [0], [1], [0, 0, 1, 1], [], []>} : vector<256x128xbf16>, vector<128x128xbf16>, vector<256x128xf32> -> vector<256x128xf32>
    %12 = arith.addf %8, %11 : vector<256x128xf32>
    %c0_9 = arith.constant 0 : index
    %c0_10 = arith.constant 0 : index
    %13 = vector.load %arg8[%c0_9, %c0_10] : memref<256x128xf32, #tpu.memory_space<vmem>>, vector<256x128xf32>
    tpu.vector_store %arg8[%c0_9, %c0_10], %12 {strides = array<i32>} : memref<256x128xf32, #tpu.memory_space<vmem>>, vector<256x128xf32>,
    %c0_i32_11 = arith.constant 0 : i32
    %14 = arith.cmpi eq, %arg2, %c0_i32_11 : i32
    %15 = arith.extui %14 : i1 to i32
    %c0_i32_12 = arith.constant 0 : i32
    %16 = arith.cmpi ne, %15, %c0_i32_12 : i32
    scf.if %16 {
      %c0_13 = arith.constant 0 : index
      %c0_14 = arith.constant 0 : index
      %17 = vector.load %arg8[%c0_13, %c0_14] : memref<256x128xf32, #tpu.memory_space<vmem>>, vector<256x128xf32>
      %c0_15 = arith.constant 0 : index
      %c0_16 = arith.constant 0 : index
      %18 = vector.load %arg5[%c0_15, %c0_16] : memref<256x128xf32, #tpu.memory_space<vmem>>, vector<256x128xf32>
      tpu.vector_store %arg5[%c0_15, %c0_16], %17 {strides = array<i32>} : memref<256x128xf32, #tpu.memory_space<vmem>>, vector<256x128xf32>,
      %c0_17 = arith.constant 0 : index
      %c0_18 = arith.constant 0 : index
      %19 = vector.load %arg6[%c0_17, %c0_18] : memref<1x128xf32, #tpu.memory_space<vmem>>, vector<1x128xf32>
      %cst_19 = arith.constant dense<0.000000e+00> : vector<128xf32>
      %20 = vector.multi_reduction <add>, %17, %cst_19 [0] : vector<256x128xf32> to vector<128xf32>
      %21 = vector.shape_cast %20 : vector<128xf32> to vector<1x128xf32>
      %22 = arith.addf %19, %21 : vector<1x128xf32>
      %c0_20 = arith.constant 0 : index
      %c0_21 = arith.constant 0 : index
      %23 = vector.load %arg6[%c0_20, %c0_21] : memref<1x128xf32, #tpu.memory_space<vmem>>, vector<1x128xf32>
      tpu.vector_store %arg6[%c0_20, %c0_21], %22 {strides = array<i32>} : memref<1x128xf32, #tpu.memory_space<vmem>>, vector<1x128xf32>,
      %c0_22 = arith.constant 0 : index
      %c0_23 = arith.constant 0 : index
      %24 = vector.load %arg7[%c0_22, %c0_23] : memref<1x128xf32, #tpu.memory_space<vmem>>, vector<1x128xf32>
      %25 = arith.mulf %17, %17 : vector<256x128xf32>
      %cst_24 = arith.constant dense<0.000000e+00> : vector<128xf32>
      %26 = vector.multi_reduction <add>, %25, %cst_24 [0] : vector<256x128xf32> to vector<128xf32>
      %27 = vector.shape_cast %26 : vector<128xf32> to vector<1x128xf32>
      %28 = arith.addf %24, %27 : vector<1x128xf32>
      %c0_25 = arith.constant 0 : index
      %c0_26 = arith.constant 0 : index
      %29 = vector.load %arg7[%c0_25, %c0_26] : memref<1x128xf32, #tpu.memory_space<vmem>>, vector<1x128xf32>
      tpu.vector_store %arg7[%c0_25, %c0_26], %28 {strides = array<i32>} : memref<1x128xf32, #tpu.memory_space<vmem>>, vector<1x128xf32>,
    } else {
    }
    return
  }
  func.func @transform_0(%arg0: i32, %arg1: i32, %arg2: i32) -> (i32, i32) {
    %c0_i32 = arith.constant 0 : i32
    return %arg1, %arg2 : i32, i32
  }
  func.func @transform_1(%arg0: i32, %arg1: i32, %arg2: i32) -> (i32, i32) {
    %c0_i32 = arith.constant 0 : i32
    return %arg2, %arg0 : i32, i32
  }
  func.func @transform_2(%arg0: i32, %arg1: i32, %arg2: i32) -> (i32, i32) {
    %c0_i32 = arith.constant 0 : i32
    return %arg1, %arg0 : i32, i32
  }
  func.func @transform_3(%arg0: i32, %arg1: i32, %arg2: i32) -> (i32, i32) {
    %c0_i32 = arith.constant 0 : i32
    %c0_i32_0 = arith.constant 0 : i32
    return %c0_i32, %arg0 : i32, i32
  }
  func.func @transform_4(%arg0: i32, %arg1: i32, %arg2: i32) -> (i32, i32) {
    %c0_i32 = arith.constant 0 : i32
    %c0_i32_0 = arith.constant 0 : i32
    return %c0_i32, %arg0 : i32, i32
  }
}

module attributes {stable_mosaic.version = 11 : i64} {
  func.func @_matmul_stats_kernel(%arg0: i32, %arg1: i32, %arg2: i32, %arg3: memref<256x128xbf16, #tpu.memory_space<vmem>>, %arg4: memref<128x128xbf16, #tpu.memory_space<vmem>>, %arg5: memref<256x128xf32, #tpu.memory_space<vmem>>, %arg6: memref<1x128xf32, #tpu.memory_space<vmem>>, %arg7: memref<1x128xf32, #tpu.memory_space<vmem>>, %arg8: memref<256x128xf32, #tpu.memory_space<vmem>>) attributes {dimension_semantics = [#tpu.dimension_semantics<parallel>, #tpu.dimension_semantics<arbitrary>, #tpu.dimension_semantics<arbitrary>], iteration_bounds = array<i64: 1, 2, 1>, scalar_prefetch = 0 : i64, scratch_operands = 1 : i64, tpu.core_type = #tpu.core_type<tc>, window_params = [{transform_indices = @transform_0, window_bounds = array<i64: 256, 128>}, {transform_indices = @transform_1, window_bounds = array<i64: 128, 128>}, {transform_indices = @transform_2, window_bounds = array<i64: 256, 128>}, {transform_indices = @transform_3, window_bounds = array<i64: 1, 128>}, {transform_indices = @transform_4, window_bounds = array<i64: 1, 128>}]} {
    %c0_i32 = arith.constant 0 : i32
    %0 = arith.cmpi eq, %arg1, %c0_i32 : i32
    %c0_i32_0 = arith.constant 0 : i32
    %1 = arith.cmpi eq, %arg2, %c0_i32_0 : i32
    %2 = arith.andi %0, %1 : i1
    %3 = arith.extui %2 : i1 to i32
    %c0_i32_1 = arith.constant 0 : i32
    %4 = arith.cmpi ne, %3, %c0_i32_1 : i32
    scf.if %4 {
      %cst_13 = arith.constant 0.000000e+00 : f32
      %17 = vector.broadcast %cst_13 : f32 to vector<1x128xf32>
      %c0_14 = arith.constant 0 : index
      %c0_15 = arith.constant 0 : index
      %18 = vector.load %arg6[%c0_14, %c0_15] : memref<1x128xf32, #tpu.memory_space<vmem>>, vector<1x128xf32>
      tpu.vector_store %arg6[%c0_14, %c0_15], %17 {strides = array<i32>} : memref<1x128xf32, #tpu.memory_space<vmem>>, vector<1x128xf32>,
      %cst_16 = arith.constant 0.000000e+00 : f32
      %19 = vector.broadcast %cst_16 : f32 to vector<1x128xf32>
      %c0_17 = arith.constant 0 : index
      %c0_18 = arith.constant 0 : index
      %20 = vector.load %arg7[%c0_17, %c0_18] : memref<1x128xf32, #tpu.memory_space<vmem>>, vector<1x128xf32>
      tpu.vector_store %arg7[%c0_17, %c0_18], %19 {strides = array<i32>} : memref<1x128xf32, #tpu.memory_space<vmem>>, vector<1x128xf32>,
    } else {
    }
    %c0_i32_2 = arith.constant 0 : i32
    %5 = arith.cmpi eq, %arg2, %c0_i32_2 : i32
    %6 = arith.extui %5 : i1 to i32
    %c0_i32_3 = arith.constant 0 : i32
    %7 = arith.cmpi ne, %6, %c0_i32_3 : i32
    scf.if %7 {
      %cst_13 = arith.constant 0.000000e+00 : f32
      %17 = vector.broadcast %cst_13 : f32 to vector<256x128xf32>
      %c0_14 = arith.constant 0 : index
      %c0_15 = arith.constant 0 : index
      %18 = vector.load %arg8[%c0_14, %c0_15] : memref<256x128xf32, #tpu.memory_space<vmem>>, vector<256x128xf32>
      tpu.vector_store %arg8[%c0_14, %c0_15], %17 {strides = array<i32>} : memref<256x128xf32, #tpu.memory_space<vmem>>, vector<256x128xf32>,
    } else {
    }
    %c0 = arith.constant 0 : index
    %c0_4 = arith.constant 0 : index
    %8 = vector.load %arg8[%c0, %c0_4] : memref<256x128xf32, #tpu.memory_space<vmem>>, vector<256x128xf32>
    %c0_5 = arith.constant 0 : index
    %c0_6 = arith.constant 0 : index
    %9 = vector.load %arg3[%c0_5, %c0_6] : memref<256x128xbf16, #tpu.memory_space<vmem>>, vector<256x128xbf16>
    %c0_7 = arith.constant 0 : index
    %c0_8 = arith.constant 0 : index
    %10 = vector.load %arg4[%c0_7, %c0_8] : memref<128x128xbf16, #tpu.memory_space<vmem>>, vector<128x128xbf16>
    %cst = arith.constant dense<0.000000e+00> : vector<256x128xf32>
    %11 = tpu.matmul %9, %10, %cst {dimension_numbers = #tpu.dot_dimension_numbers<[1], [0], [0], [1], [0, 0, 1, 1], [], []>} : vector<256x128xbf16>, vector<128x128xbf16>, vector<256x128xf32> -> vector<256x128xf32>
    %12 = arith.addf %8, %11 : vector<256x128xf32>
    %c0_9 = arith.constant 0 : index
    %c0_10 = arith.constant 0 : index
    %13 = vector.load %arg8[%c0_9, %c0_10] : memref<256x128xf32, #tpu.memory_space<vmem>>, vector<256x128xf32>
    tpu.vector_store %arg8[%c0_9, %c0_10], %12 {strides = array<i32>} : memref<256x128xf32, #tpu.memory_space<vmem>>, vector<256x128xf32>,
    %c0_i32_11 = arith.constant 0 : i32
    %14 = arith.cmpi eq, %arg2, %c0_i32_11 : i32
    %15 = arith.extui %14 : i1 to i32
    %c0_i32_12 = arith.constant 0 : i32
    %16 = arith.cmpi ne, %15, %c0_i32_12 : i32
    scf.if %16 {
      %c0_13 = arith.constant 0 : index
      %c0_14 = arith.constant 0 : index
      %17 = vector.load %arg8[%c0_13, %c0_14] : memref<256x128xf32, #tpu.memory_space<vmem>>, vector<256x128xf32>
      %c0_15 = arith.constant 0 : index
      %c0_16 = arith.constant 0 : index
      %18 = vector.load %arg5[%c0_15, %c0_16] : memref<256x128xf32, #tpu.memory_space<vmem>>, vector<256x128xf32>
      tpu.vector_store %arg5[%c0_15, %c0_16], %17 {strides = array<i32>} : memref<256x128xf32, #tpu.memory_space<vmem>>, vector<256x128xf32>,
      %c0_17 = arith.constant 0 : index
      %c0_18 = arith.constant 0 : index
      %19 = vector.load %arg6[%c0_17, %c0_18] : memref<1x128xf32, #tpu.memory_space<vmem>>, vector<1x128xf32>
      %cst_19 = arith.constant dense<0.000000e+00> : vector<128xf32>
      %20 = vector.multi_reduction <add>, %17, %cst_19 [0] : vector<256x128xf32> to vector<128xf32>
      %21 = vector.shape_cast %20 : vector<128xf32> to vector<1x128xf32>
      %22 = arith.addf %19, %21 : vector<1x128xf32>
      %c0_20 = arith.constant 0 : index
      %c0_21 = arith.constant 0 : index
      %23 = vector.load %arg6[%c0_20, %c0_21] : memref<1x128xf32, #tpu.memory_space<vmem>>, vector<1x128xf32>
      tpu.vector_store %arg6[%c0_20, %c0_21], %22 {strides = array<i32>} : memref<1x128xf32, #tpu.memory_space<vmem>>, vector<1x128xf32>,
      %c0_22 = arith.constant 0 : index
      %c0_23 = arith.constant 0 : index
      %24 = vector.load %arg7[%c0_22, %c0_23] : memref<1x128xf32, #tpu.memory_space<vmem>>, vector<1x128xf32>
      %25 = arith.mulf %17, %17 : vector<256x128xf32>
      %cst_24 = arith.constant dense<0.000000e+00> : vector<128xf32>
      %26 = vector.multi_reduction <add>, %25, %cst_24 [0] : vector<256x128xf32> to vector<128xf32>
      %27 = vector.shape_cast %26 : vector<128xf32> to vector<1x128xf32>
      %28 = arith.addf %24, %27 : vector<1x128xf32>
      %c0_25 = arith.constant 0 : index
      %c0_26 = arith.constant 0 : index
      %29 = vector.load %arg7[%c0_25, %c0_26] : memref<1x128xf32, #tpu.memory_space<vmem>>, vector<1x128xf32>
      tpu.vector_store %arg7[%c0_25, %c0_26], %28 {strides = array<i32>} : memref<1x128xf32, #tpu.memory_space<vmem>>, vector<1x128xf32>,
    } else {
    }
    return
  }
  func.func @transform_0(%arg0: i32, %arg1: i32, %arg2: i32) -> (i32, i32) {
    %c0_i32 = arith.constant 0 : i32
    return %arg1, %arg2 : i32, i32
  }
  func.func @transform_1(%arg0: i32, %arg1: i32, %arg2: i32) -> (i32, i32) {
    %c0_i32 = arith.constant 0 : i32
    return %arg2, %arg0 : i32, i32
  }
  func.func @transform_2(%arg0: i32, %arg1: i32, %arg2: i32) -> (i32, i32) {
    %c0_i32 = arith.constant 0 : i32
    return %arg1, %arg0 : i32, i32
  }
  func.func @transform_3(%arg0: i32, %arg1: i32, %arg2: i32) -> (i32, i32) {
    %c0_i32 = arith.constant 0 : i32
    %c0_i32_0 = arith.constant 0 : i32
    return %c0_i32, %arg0 : i32, i32
  }
  func.func @transform_4(%arg0: i32, %arg1: i32, %arg2: i32) -> (i32, i32) {
    %c0_i32 = arith.constant 0 : i32
    %c0_i32_0 = arith.constant 0 : i32
    return %c0_i32, %arg0 : i32, i32
  }
}

module attributes {stable_mosaic.version = 11 : i64} {
  func.func @_affine_act_kernel(%arg0: i32, %arg1: i32, %arg2: memref<256x128xf32, #tpu.memory_space<vmem>>, %arg3: memref<1x128xf32, #tpu.memory_space<vmem>>, %arg4: memref<1x128xf32, #tpu.memory_space<vmem>>, %arg5: memref<256x128xf32, #tpu.memory_space<vmem>>) attributes {dimension_semantics = [#tpu.dimension_semantics<parallel>, #tpu.dimension_semantics<parallel>], iteration_bounds = array<i64: 2, 1>, scalar_prefetch = 0 : i64, scratch_operands = 0 : i64, tpu.core_type = #tpu.core_type<tc>, window_params = [{transform_indices = @transform_0, window_bounds = array<i64: 256, 128>}, {transform_indices = @transform_1, window_bounds = array<i64: 1, 128>}, {transform_indices = @transform_2, window_bounds = array<i64: 1, 128>}, {transform_indices = @transform_3, window_bounds = array<i64: 256, 128>}]} {
    %c0 = arith.constant 0 : index
    %c0_0 = arith.constant 0 : index
    %0 = vector.load %arg2[%c0, %c0_0] : memref<256x128xf32, #tpu.memory_space<vmem>>, vector<256x128xf32>
    %c0_1 = arith.constant 0 : index
    %c0_2 = arith.constant 0 : index
    %1 = vector.load %arg3[%c0_1, %c0_2] : memref<1x128xf32, #tpu.memory_space<vmem>>, vector<1x128xf32>
    %2 = vector.broadcast %1 : vector<1x128xf32> to vector<256x128xf32>
    %3 = arith.mulf %0, %2 : vector<256x128xf32>
    %c0_3 = arith.constant 0 : index
    %c0_4 = arith.constant 0 : index
    %4 = vector.load %arg4[%c0_3, %c0_4] : memref<1x128xf32, #tpu.memory_space<vmem>>, vector<1x128xf32>
    %5 = vector.broadcast %4 : vector<1x128xf32> to vector<256x128xf32>
    %6 = arith.addf %3, %5 : vector<256x128xf32>
    %c0_5 = arith.constant 0 : index
    %c0_6 = arith.constant 0 : index
    %7 = vector.load %arg5[%c0_5, %c0_6] : memref<256x128xf32, #tpu.memory_space<vmem>>, vector<256x128xf32>
    tpu.vector_store %arg5[%c0_5, %c0_6], %6 {strides = array<i32>} : memref<256x128xf32, #tpu.memory_space<vmem>>, vector<256x128xf32>,
    return
  }
  func.func @transform_0(%arg0: i32, %arg1: i32) -> (i32, i32) {
    %c0_i32 = arith.constant 0 : i32
    return %arg0, %arg1 : i32, i32
  }
  func.func @transform_1(%arg0: i32, %arg1: i32) -> (i32, i32) {
    %c0_i32 = arith.constant 0 : i32
    %c0_i32_0 = arith.constant 0 : i32
    return %c0_i32, %arg1 : i32, i32
  }
  func.func @transform_2(%arg0: i32, %arg1: i32) -> (i32, i32) {
    %c0_i32 = arith.constant 0 : i32
    %c0_i32_0 = arith.constant 0 : i32
    return %c0_i32, %arg1 : i32, i32
  }
  func.func @transform_3(%arg0: i32, %arg1: i32) -> (i32, i32) {
    %c0_i32 = arith.constant 0 : i32
    return %arg0, %arg1 : i32, i32
  }
}

module attributes {stable_mosaic.version = 11 : i64} {
  func.func @_affine_act_add_kernel(%arg0: i32, %arg1: i32, %arg2: memref<256x128xf32, #tpu.memory_space<vmem>>, %arg3: memref<1x128xf32, #tpu.memory_space<vmem>>, %arg4: memref<1x128xf32, #tpu.memory_space<vmem>>, %arg5: memref<256x128xf32, #tpu.memory_space<vmem>>, %arg6: memref<256x128xf32, #tpu.memory_space<vmem>>) attributes {dimension_semantics = [#tpu.dimension_semantics<parallel>, #tpu.dimension_semantics<parallel>], iteration_bounds = array<i64: 2, 1>, scalar_prefetch = 0 : i64, scratch_operands = 0 : i64, tpu.core_type = #tpu.core_type<tc>, window_params = [{transform_indices = @transform_0, window_bounds = array<i64: 256, 128>}, {transform_indices = @transform_1, window_bounds = array<i64: 1, 128>}, {transform_indices = @transform_2, window_bounds = array<i64: 1, 128>}, {transform_indices = @transform_3, window_bounds = array<i64: 256, 128>}, {transform_indices = @transform_4, window_bounds = array<i64: 256, 128>}]} {
    %c0 = arith.constant 0 : index
    %c0_0 = arith.constant 0 : index
    %0 = vector.load %arg2[%c0, %c0_0] : memref<256x128xf32, #tpu.memory_space<vmem>>, vector<256x128xf32>
    %c0_1 = arith.constant 0 : index
    %c0_2 = arith.constant 0 : index
    %1 = vector.load %arg3[%c0_1, %c0_2] : memref<1x128xf32, #tpu.memory_space<vmem>>, vector<1x128xf32>
    %2 = vector.broadcast %1 : vector<1x128xf32> to vector<256x128xf32>
    %3 = arith.mulf %0, %2 : vector<256x128xf32>
    %c0_3 = arith.constant 0 : index
    %c0_4 = arith.constant 0 : index
    %4 = vector.load %arg4[%c0_3, %c0_4] : memref<1x128xf32, #tpu.memory_space<vmem>>, vector<1x128xf32>
    %5 = vector.broadcast %4 : vector<1x128xf32> to vector<256x128xf32>
    %6 = arith.addf %3, %5 : vector<256x128xf32>
    %cst = arith.constant 0.000000e+00 : f32
    %7 = vector.broadcast %cst : f32 to vector<256x128xf32>
    %8 = arith.maximumf %6, %7 : vector<256x128xf32>
    %c0_5 = arith.constant 0 : index
    %c0_6 = arith.constant 0 : index
    %9 = vector.load %arg5[%c0_5, %c0_6] : memref<256x128xf32, #tpu.memory_space<vmem>>, vector<256x128xf32>
    %10 = arith.addf %8, %9 : vector<256x128xf32>
    %c0_7 = arith.constant 0 : index
    %c0_8 = arith.constant 0 : index
    %11 = vector.load %arg6[%c0_7, %c0_8] : memref<256x128xf32, #tpu.memory_space<vmem>>, vector<256x128xf32>
    tpu.vector_store %arg6[%c0_7, %c0_8], %10 {strides = array<i32>} : memref<256x128xf32, #tpu.memory_space<vmem>>, vector<256x128xf32>,
    return
  }
  func.func @transform_0(%arg0: i32, %arg1: i32) -> (i32, i32) {
    %c0_i32 = arith.constant 0 : i32
    return %arg0, %arg1 : i32, i32
  }
  func.func @transform_1(%arg0: i32, %arg1: i32) -> (i32, i32) {
    %c0_i32 = arith.constant 0 : i32
    %c0_i32_0 = arith.constant 0 : i32
    return %c0_i32, %arg1 : i32, i32
  }
  func.func @transform_2(%arg0: i32, %arg1: i32) -> (i32, i32) {
    %c0_i32 = arith.constant 0 : i32
    %c0_i32_0 = arith.constant 0 : i32
    return %c0_i32, %arg1 : i32, i32
  }
  func.func @transform_3(%arg0: i32, %arg1: i32) -> (i32, i32) {
    %c0_i32 = arith.constant 0 : i32
    return %arg0, %arg1 : i32, i32
  }
  func.func @transform_4(%arg0: i32, %arg1: i32) -> (i32, i32) {
    %c0_i32 = arith.constant 0 : i32
    return %arg0, %arg1 : i32, i32
  }
}

</mosaic_0001>

<llo_original>
// kernel: inception_forward.15
$region0: #{inception_forward.15}
  #allocation0 [shape = 'u32[]', space=smem, size = 0x4, offset = 0x4, fixed_abs, tag = 'smem constant byte address 0x4 - core index']
  #allocation1 [shape = 'u32[144,128]{1,0:T(1,128)}', space=vmem, size = 0x12000, scoped, tag = 'internal scratch']
  %s0 = inlined_call_operand.vmem [shape: f32[512,128], index: 0, kind: input, shape index: {}]
  %s1 = inlined_call_operand.vmem [shape: f32[1,128], index: 1, kind: input, shape index: {}]
  %s2 = inlined_call_operand.vmem [shape: f32[1,128], index: 2, kind: input, shape index: {}]
  %s3 = inlined_call_operand.vmem [shape: f32[512,128], index: 3, kind: output, shape index: {}]
  %s4 = sld [smem:[#allocation0]]
  $region45: #{inception_forward.15} parent=0
    _
  %s6 = ssub.s32 1, %s4
  %s7 = scalar_select 0, %s6, %s4
  loop: start=0, step=1, limit=4
  $region2: #{inception_forward.15} parent=0 // loop_pre_header
    _
  $region3: #{inception_forward.15} parent=0 // loop_header
    %s9 = sphi 0, %s13
    %p10 = scmp.ge.s32.totalorder %s9, 4
    %s16 = sphi 0, %s28
    %s17 = sphi 0, %s24
    %s18 = sphi 0, %s16
    %s19 = sphi 0, %s17
    %s20 = sphi 0, %s18
    %s21 = sphi 0, %s19
    %s33 = sphi 0, %s35
    %s36 = sphi 0, %s33
    %s37 = sphi 0, %s36
    %s53 = sphi 0, %s37
    %s59 = sphi 0, %s61
    %s62 = sphi 0, %s59
    %s63 = sphi 0, %s62
    %s79 = sphi 0, %s63
    %s85 = sphi 0, %s87
    %s88 = sphi 0, %s85
    %s89 = sphi 0, %s88
    %s105 = sphi 0, %s89
    %s113 = sphi 0, %s115
    %s116 = sphi 0, %s113
    %s117 = sphi 0, %s116
    %s133 = sphi 0, %s117
  $region4: #{inception_forward.15} parent=0 // loop_header_branch
    %12 = sbr.rel (%p10) target = $region8
  $region5: #{inception_forward.15} parent=0 // loop_body
    %s14 = ssub.s32 %s9, 1
    %s15 = ssub.s32 %s9, 2
    %s22 = sadd.s32 1, %s17
    %p23 = scmp.ge.s32.totalorder %s22, 1
    %s24 = scalar_select %p23, 0, %s22
    %s25 = sadd.s32 1, %s16
    %s26 = scalar_select %p23, %s25, %s16
    %p27 = scmp.ge.s32.totalorder %s26, 2
    %s28 = scalar_select %p27, 0, %s26
    %s29 = ssub.s32 %s16, %s28
    %s30 = ssub.s32 %s17, %s24
    %s31 = sor.u32 %s29, %s30
    %p32 = scmp.eq.s32.totalorder %s31, 0
    %s34 = sadd.s32 %s33, 1
    %s35 = scalar_select %p32, %s33, %s34
    %p38 = pneg %p32
    %p39 = scmp.eq.s32.totalorder %s9, 1
    %p40 = por %p38, %p39
    %p41 = scmp.ne.s32.totalorder %s33, %s36
    %p42 = scmp.eq.s32.totalorder %s9, 0
    %p43 = por %p41, %p42
    %p44 = scmp.ne.s32.totalorder %s33, %s36
    %p45 = scmp.eq.s32.totalorder %s14, 1
    %p46 = por %p44, %p45
    %p47 = scmp.ne.s32.totalorder %s36, %s37
    %p48 = scmp.eq.s32.totalorder %s14, 0
    %p49 = por %p47, %p48
    %p50 = scmp.ne.s32.totalorder %s36, %s37
    %p51 = scmp.eq.s32.totalorder %s15, 1
    %p52 = por %p50, %p51
    %p54 = scmp.ne.s32.totalorder %s37, %s53
    %p55 = scmp.eq.s32.totalorder %s15, 0
    %p56 = por %p54, %p55
    %s57 = ssub.s32 %s17, %s24
    %p58 = scmp.eq.s32.totalorder %s57, 0
    %s60 = sadd.s32 %s59, 1
    %s61 = scalar_select %p58, %s59, %s60
    %p64 = pneg %p58
    %p65 = scmp.eq.s32.totalorder %s9, 1
    %p66 = por %p64, %p65
    %p67 = scmp.ne.s32.totalorder %s59, %s62
    %p68 = scmp.eq.s32.totalorder %s9, 0
    %p69 = por %p67, %p68
    %p70 = scmp.ne.s32.totalorder %s59, %s62
    %p71 = scmp.eq.s32.totalorder %s14, 1
    %p72 = por %p70, %p71
    %p73 = scmp.ne.s32.totalorder %s62, %s63
    %p74 = scmp.eq.s32.totalorder %s14, 0
    %p75 = por %p73, %p74
    %p76 = scmp.ne.s32.totalorder %s62, %s63
    %p77 = scmp.eq.s32.totalorder %s15, 1
    %p78 = por %p76, %p77
    %p80 = scmp.ne.s32.totalorder %s63, %s79
    %p81 = scmp.eq.s32.totalorder %s15, 0
    %p82 = por %p80, %p81
    %s83 = ssub.s32 %s17, %s24
    %p84 = scmp.eq.s32.totalorder %s83, 0
    %s86 = sadd.s32 %s85, 1
    %s87 = scalar_select %p84, %s85, %s86
    %p90 = pneg %p84
    %p91 = scmp.eq.s32.totalorder %s9, 1
    %p92 = por %p90, %p91
    %p93 = scmp.ne.s32.totalorder %s85, %s88
    %p94 = scmp.eq.s32.totalorder %s9, 0
    %p95 = por %p93, %p94
    %p96 = scmp.ne.s32.totalorder %s85, %s88
    %p97 = scmp.eq.s32.totalorder %s14, 1
    %p98 = por %p96, %p97
    %p99 = scmp.ne.s32.totalorder %s88, %s89
    %p100 = scmp.eq.s32.totalorder %s14, 0
    %p101 = por %p99, %p100
    %p102 = scmp.ne.s32.totalorder %s88, %s89
    %p103 = scmp.eq.s32.totalorder %s15, 1
    %p104 = por %p102, %p103
    %p106 = scmp.ne.s32.totalorder %s89, %s105
    %p107 = scmp.eq.s32.totalorder %s15, 0
    %p108 = por %p106, %p107
    %s109 = ssub.s32 %s16, %s28
    %s110 = ssub.s32 %s17, %s24
    %s111 = sor.u32 %s109, %s110
    %p112 = scmp.eq.s32.totalorder %s111, 0
    %s114 = sadd.s32 %s113, 1
    %s115 = scalar_select %p112, %s113, %s114
    %p118 = pneg %p112
    %p119 = scmp.eq.s32.totalorder %s9, 1
    %p120 = por %p118, %p119
    %p121 = scmp.ne.s32.totalorder %s113, %s116
    %p122 = scmp.eq.s32.totalorder %s9, 0
    %p123 = por %p121, %p122
    %p124 = scmp.ne.s32.totalorder %s113, %s116
    %p125 = scmp.eq.s32.totalorder %s14, 1
    %p126 = por %p124, %p125
    %p127 = scmp.ne.s32.totalorder %s116, %s117
    %p128 = scmp.eq.s32.totalorder %s14, 0
    %p129 = por %p127, %p128
    %p130 = scmp.ne.s32.totalorder %s116, %s117
    %p131 = scmp.eq.s32.totalorder %s15, 1
    %p132 = por %p130, %p131
    %p134 = scmp.ne.s32.totalorder %s117, %s133
    %p135 = scmp.eq.s32.totalorder %s15, 0
    %p136 = por %p134, %p135
    %p137 = scmp.le.s32.totalorder 1, %s9
    %p138 = scmp.lt.s32.totalorder %s9, 3
    %p139 = pnand %p137, %p138
    %p140 = pneg %p139
    // Predicated region
    $region9: #{inception_forward.15} parent=5 // pred_check
      _
    $region10: #{inception_forward.15} parent=5 // pred_check_branch
      %142 = sbr.rel (%p139) target = $region12
    $region11: #{inception_forward.15} parent=5 // pred_region
      %s143 = ssub.s32 %s9, 1
      // Predicated region
      $region13: #{inception_forward.15} parent=11 // pred_check
        %p144 = pneg %p75
      $region14: #{inception_forward.15} parent=11 // pred_check_branch
        %146 = sbr.rel (%p144) target = $region16
      $region15: #{inception_forward.15} parent=11 // pred_region
        %p147 = scmp.lt.s32.totalorder %s19, 0
        %s148 = scalar_select %p147, %s19, 0
        %s149 = scalar_lea.vmem %s1, %s148
      $region16: #{inception_forward.15} parent=11 // pred_fallthru
        _
      // Predicated region
      $region17: #{inception_forward.15} parent=11 // pred_check
        %p150 = pneg %p101
      $region18: #{inception_forward.15} parent=11 // pred_check_branch
        %152 = sbr.rel (%p150) target = $region20
      $region19: #{inception_forward.15} parent=11 // pred_region
        %p153 = scmp.lt.s32.totalorder %s19, 0
        %s154 = scalar_select %p153, %s19, 0
        %s155 = scalar_lea.vmem %s2, %s154
      $region20: #{inception_forward.15} parent=11 // pred_fallthru
        _
    $region12: #{inception_forward.15} parent=5 // pred_fallthru
      _
    %p156 = scmp.lt.s32.totalorder %s9, 2
    // Predicated region
    $region21: #{inception_forward.15} parent=5 // pred_check
      %p157 = pneg %p156
    $region22: #{inception_forward.15} parent=5 // pred_check_branch
      %159 = sbr.rel (%p157) target = $region24
    $region23: #{inception_forward.15} parent=5 // pred_region
      // Predicated region
      $region25: #{inception_forward.15} parent=23 // pred_check
        %p160 = pneg %p43
      $region26: #{inception_forward.15} parent=23 // pred_check_branch
        %162 = sbr.rel (%p160) target = $region28
      $region27: #{inception_forward.15} parent=23 // pred_region
        %s163 = smul.u32 32, %s16
        %p164 = scmp.lt.s32.totalorder %s163, 63
        %s165 = scalar_select %p164, %s163, 63
        %p166 = scmp.lt.s32.totalorder %s17, 0
        %s167 = scalar_select %p166, %s17, 0
        %s168 = sadd.s32 %s167, %s165
        %s169 = smul.addr %s168, 8
        %s170 = scalar_lea.vmem %s0, %s169
        %s171 = smul.u32 32, %s16
      $region28: #{inception_forward.15} parent=23 // pred_fallthru
        _
    $region24: #{inception_forward.15} parent=5 // pred_fallthru
      _
    %p172 = scmp.le.s32.totalorder 1, %s9
    %p173 = scmp.lt.s32.totalorder %s9, 3
    %p174 = pnand %p172, %p173
    %p175 = pneg %p174
    // Predicated region
    $region29: #{inception_forward.15} parent=5 // pred_check
      _
    $region30: #{inception_forward.15} parent=5 // pred_check_branch
      %177 = sbr.rel (%p174) target = $region32
    $region31: #{inception_forward.15} parent=5 // pred_region
      %s178 = ssub.s32 %s9, 1
      %s179 = smul.u32 32, %s18
      %p180 = scmp.lt.s32.totalorder %s179, 63
      %s181 = scalar_select %p180, %s179, 63
      %p182 = scmp.lt.s32.totalorder %s19, 0
      %s183 = scalar_select %p182, %s19, 0
      %s184 = sadd.s32 %s183, %s181
      %s185 = smul.addr %s184, 8
      %s186 = scalar_lea.vmem %s0, %s185
      %p187 = pneg %p49
      %p188 = pneg %p46
      %p189 = scmp.lt.s32.totalorder %s19, 0
      %s190 = scalar_select %p189, %s19, 0
      %s191 = scalar_lea.vmem %s1, %s190
      %p192 = pneg %p75
      %p193 = pneg %p72
      %p194 = scmp.lt.s32.totalorder %s19, 0
      %s195 = scalar_select %p194, %s19, 0
      %s196 = scalar_lea.vmem %s2, %s195
      %p197 = pneg %p101
      %p198 = pneg %p98
      %p199 = pneg %p129
      %p200 = pneg %p126
      %s201 = smul.u32 32, %s18
      %p202 = scmp.lt.s32.totalorder %s201, 63
      %s203 = scalar_select %p202, %s201, 63
      %p204 = scmp.lt.s32.totalorder %s19, 0
      %s205 = scalar_select %p204, %s19, 0
      %s206 = sadd.s32 %s205, %s203
      %s207 = smul.addr %s206, 8
      %s208 = scalar_lea.vmem %s3, %s207
      %s209 = smul.u32 32, %s18
      %p210 = scmp.lt.s32.totalorder %s209, 63
      %s211 = scalar_select %p210, %s209, 63
      %p212 = scmp.lt.s32.totalorder %s19, 0
      %s213 = scalar_select %p212, %s19, 0
      %s214 = sadd.s32 %s213, %s211
      %s215 = smul.addr %s214, 8
      %s216 = scalar_lea.vmem %s0, %s215
      %s217 = smul.u32 32, %s18
      %p218 = scmp.lt.s32.totalorder %s19, 0
      %s219 = scalar_select %p218, %s19, 0
      %s220 = scalar_lea.vmem %s1, %s219
      %p221 = scmp.lt.s32.totalorder %s19, 0
      %s222 = scalar_select %p221, %s19, 0
      %s223 = scalar_lea.vmem %s2, %s222
      %s224 = smul.u32 32, %s18
      %p225 = scmp.lt.s32.totalorder %s224, 63
      %s226 = scalar_select %p225, %s224, 63
      %p227 = scmp.lt.s32.totalorder %s19, 0
      %s228 = scalar_select %p227, %s19, 0
      %s229 = sadd.s32 %s228, %s226
      %s230 = smul.addr %s229, 8
      %s231 = scalar_lea.vmem %s3, %s230
      %s232 = smul.u32 32, %s18
      %v233 = vld [vmem:[%s216] sm:$0xff]
      %v234 = vld [vmem:[%s216 + $0x8] sm:$0xff]
      %v235 = vld [vmem:[%s216 + $0x10] sm:$0xff]
      %v236 = vld [vmem:[%s216 + $0x18] sm:$0xff]
      %v237 = vld [vmem:[%s216 + $0x20] sm:$0xff]
      %v238 = vld [vmem:[%s216 + $0x28] sm:$0xff]
      %v239 = vld [vmem:[%s216 + $0x30] sm:$0xff]
      %v240 = vld [vmem:[%s216 + $0x38] sm:$0xff]
      %v241 = vld [vmem:[%s216 + $0x40] sm:$0xff]
      %v242 = vld [vmem:[%s216 + $0x48] sm:$0xff]
      %v243 = vld [vmem:[%s216 + $0x50] sm:$0xff]
      %v244 = vld [vmem:[%s216 + $0x58] sm:$0xff]
      %v245 = vld [vmem:[%s216 + $0x60] sm:$0xff]
      %v246 = vld [vmem:[%s216 + $0x68] sm:$0xff]
      %v247 = vld [vmem:[%s216 + $0x70] sm:$0xff]
      %v248 = vld [vmem:[%s216 + $0x78] sm:$0xff]
      %v249 = vld [vmem:[%s216 + $0x80] sm:$0xff]
      %v250 = vld [vmem:[%s216 + $0x88] sm:$0xff]
      %v251 = vld [vmem:[%s216 + $0x90] sm:$0xff]
      %v252 = vld [vmem:[%s216 + $0x98] sm:$0xff]
      %v253 = vld [vmem:[%s216 + $0xa0] sm:$0xff]
      %v254 = vld [vmem:[%s216 + $0xa8] sm:$0xff]
      %v255 = vld [vmem:[%s216 + $0xb0] sm:$0xff]
      %v256 = vld [vmem:[%s216 + $0xb8] sm:$0xff]
      %v257 = vld [vmem:[%s216 + $0xc0] sm:$0xff]
      %v258 = vld [vmem:[%s216 + $0xc8] sm:$0xff]
      %v259 = vld [vmem:[%s216 + $0xd0] sm:$0xff]
      %v260 = vld [vmem:[%s216 + $0xd8] sm:$0xff]
      %v261 = vld [vmem:[%s216 + $0xe0] sm:$0xff]
      %v262 = vld [vmem:[%s216 + $0xe8] sm:$0xff]
      %v263 = vld [vmem:[%s216 + $0xf0] sm:$0xff]
      %v264 = vld [vmem:[%s216 + $0xf8] sm:$0xff]
      %v265 = vld [vmem:[%s220] sm:$0x1]
      %v267 = vlaneseq
      %v268 = vshrl.u32 %v267, 7
      %v269 = vsub.s32 0, %v268
      %v270 = vrot.slane %v265, %v269
      %v272 = vmul.f32 %v233, %v270
      %v273 = vmul.f32 %v234, %v270
      %v274 = vmul.f32 %v235, %v270
      %v275 = vmul.f32 %v236, %v270
      %v276 = vmul.f32 %v237, %v270
      %v277 = vmul.f32 %v238, %v270
      %v278 = vmul.f32 %v239, %v270
      %v279 = vmul.f32 %v240, %v270
      %v280 = vmul.f32 %v241, %v270
      %v281 = vmul.f32 %v242, %v270
      %v282 = vmul.f32 %v243, %v270
      %v283 = vmul.f32 %v244, %v270
      %v284 = vmul.f32 %v245, %v270
      %v285 = vmul.f32 %v246, %v270
      %v286 = vmul.f32 %v247, %v270
      %v287 = vmul.f32 %v248, %v270
      %v288 = vmul.f32 %v249, %v270
      %v289 = vmul.f32 %v250, %v270
      %v290 = vmul.f32 %v251, %v270
      %v291 = vmul.f32 %v252, %v270
      %v292 = vmul.f32 %v253, %v270
      %v293 = vmul.f32 %v254, %v270
      %v294 = vmul.f32 %v255, %v270
      %v295 = vmul.f32 %v256, %v270
      %v296 = vmul.f32 %v257, %v270
      %v297 = vmul.f32 %v258, %v270
      %v298 = vmul.f32 %v259, %v270
      %v299 = vmul.f32 %v260, %v270
      %v300 = vmul.f32 %v261, %v270
      %v301 = vmul.f32 %v262, %v270
      %v302 = vmul.f32 %v263, %v270
      %v303 = vmul.f32 %v264, %v270
      %v304 = vld [vmem:[%s223] sm:$0x1]
      %v306 = vlaneseq
      %v307 = vshrl.u32 %v306, 7
      %v308 = vsub.s32 0, %v307
      %v309 = vrot.slane %v304, %v308
      %v311 = vadd.f32 %v272, %v309
      %v312 = vadd.f32 %v273, %v309
      %v313 = vadd.f32 %v274, %v309
      %v314 = vadd.f32 %v275, %v309
      %v315 = vadd.f32 %v276, %v309
      %v316 = vadd.f32 %v277, %v309
      %v317 = vadd.f32 %v278, %v309
      %v318 = vadd.f32 %v279, %v309
      %v319 = vadd.f32 %v280, %v309
      %v320 = vadd.f32 %v281, %v309
      %v321 = vadd.f32 %v282, %v309
      %v322 = vadd.f32 %v283, %v309
      %v323 = vadd.f32 %v284, %v309
      %v324 = vadd.f32 %v285, %v309
      %v325 = vadd.f32 %v286, %v309
      %v326 = vadd.f32 %v287, %v309
      %v327 = vadd.f32 %v288, %v309
      %v328 = vadd.f32 %v289, %v309
      %v329 = vadd.f32 %v290, %v309
      %v330 = vadd.f32 %v291, %v309
      %v331 = vadd.f32 %v292, %v309
      %v332 = vadd.f32 %v293, %v309
      %v333 = vadd.f32 %v294, %v309
      %v334 = vadd.f32 %v295, %v309
      %v335 = vadd.f32 %v296, %v309
      %v336 = vadd.f32 %v297, %v309
      %v337 = vadd.f32 %v298, %v309
      %v338 = vadd.f32 %v299, %v309
      %v339 = vadd.f32 %v300, %v309
      %v340 = vadd.f32 %v301, %v309
      %v341 = vadd.f32 %v302, %v309
      %v342 = vadd.f32 %v303, %v309
      %v343 = vmax.f32 %v311, 0.0
      %v344 = vmax.f32 %v312, 0.0
      %v345 = vmax.f32 %v313, 0.0
      %v346 = vmax.f32 %v314, 0.0
      %v347 = vmax.f32 %v315, 0.0
      %v348 = vmax.f32 %v316, 0.0
      %v349 = vmax.f32 %v317, 0.0
      %v350 = vmax.f32 %v318, 0.0
      %v351 = vmax.f32 %v319, 0.0
      %v352 = vmax.f32 %v320, 0.0
      %v353 = vmax.f32 %v321, 0.0
      %v354 = vmax.f32 %v322, 0.0
      %v355 = vmax.f32 %v323, 0.0
      %v356 = vmax.f32 %v324, 0.0
      %v357 = vmax.f32 %v325, 0.0
      %v358 = vmax.f32 %v326, 0.0
      %v359 = vmax.f32 %v327, 0.0
      %v360 = vmax.f32 %v328, 0.0
      %v361 = vmax.f32 %v329, 0.0
      %v362 = vmax.f32 %v330, 0.0
      %v363 = vmax.f32 %v331, 0.0
      %v364 = vmax.f32 %v332, 0.0
      %v365 = vmax.f32 %v333, 0.0
      %v366 = vmax.f32 %v334, 0.0
      %v367 = vmax.f32 %v335, 0.0
      %v368 = vmax.f32 %v336, 0.0
      %v369 = vmax.f32 %v337, 0.0
      %v370 = vmax.f32 %v338, 0.0
      %v371 = vmax.f32 %v339, 0.0
      %v372 = vmax.f32 %v340, 0.0
      %v373 = vmax.f32 %v341, 0.0
      %v374 = vmax.f32 %v342, 0.0
      %375 = vst [vmem:[%s231] sm:$0xff] %v343
      %376 = vst [vmem:[%s231 + $0x8] sm:$0xff] %v344
      %377 = vst [vmem:[%s231 + $0x10] sm:$0xff] %v345
      %378 = vst [vmem:[%s231 + $0x18] sm:$0xff] %v346
      %379 = vst [vmem:[%s231 + $0x20] sm:$0xff] %v347
      %380 = vst [vmem:[%s231 + $0x28] sm:$0xff] %v348
      %381 = vst [vmem:[%s231 + $0x30] sm:$0xff] %v349
      %382 = vst [vmem:[%s231 + $0x38] sm:$0xff] %v350
      %383 = vst [vmem:[%s231 + $0x40] sm:$0xff] %v351
      %384 = vst [vmem:[%s231 + $0x48] sm:$0xff] %v352
      %385 = vst [vmem:[%s231 + $0x50] sm:$0xff] %v353
      %386 = vst [vmem:[%s231 + $0x58] sm:$0xff] %v354
      %387 = vst [vmem:[%s231 + $0x60] sm:$0xff] %v355
      %388 = vst [vmem:[%s231 + $0x68] sm:$0xff] %v356
      %389 = vst [vmem:[%s231 + $0x70] sm:$0xff] %v357
      %390 = vst [vmem:[%s231 + $0x78] sm:$0xff] %v358
      %391 = vst [vmem:[%s231 + $0x80] sm:$0xff] %v359
      %392 = vst [vmem:[%s231 + $0x88] sm:$0xff] %v360
      %393 = vst [vmem:[%s231 + $0x90] sm:$0xff] %v361
      %394 = vst [vmem:[%s231 + $0x98] sm:$0xff] %v362
      %395 = vst [vmem:[%s231 + $0xa0] sm:$0xff] %v363
      %396 = vst [vmem:[%s231 + $0xa8] sm:$0xff] %v364
      %397 = vst [vmem:[%s231 + $0xb0] sm:$0xff] %v365
      %398 = vst [vmem:[%s231 + $0xb8] sm:$0xff] %v366
      %399 = vst [vmem:[%s231 + $0xc0] sm:$0xff] %v367
      %400 = vst [vmem:[%s231 + $0xc8] sm:$0xff] %v368
      %401 = vst [vmem:[%s231 + $0xd0] sm:$0xff] %v369
      %402 = vst [vmem:[%s231 + $0xd8] sm:$0xff] %v370
      %403 = vst [vmem:[%s231 + $0xe0] sm:$0xff] %v371
      %404 = vst [vmem:[%s231 + $0xe8] sm:$0xff] %v372
      %405 = vst [vmem:[%s231 + $0xf0] sm:$0xff] %v373
      %406 = vst [vmem:[%s231 + $0xf8] sm:$0xff] %v374
      %s407 = smul.u32 32, %s18
      %p408 = scmp.lt.s32.totalorder %s407, 63
      %s409 = scalar_select %p408, %s407, 63
      %p410 = scmp.lt.s32.totalorder %s19, 0
      %s411 = scalar_select %p410, %s19, 0
      %s412 = sadd.s32 %s411, %s409
      %s413 = smul.addr %s412, 8
      %s414 = scalar_lea.vmem %s3, %s413
      // Predicated region
      $region33: #{inception_forward.15} parent=31 // pred_check
        %p415 = pneg %p126
      $region34: #{inception_forward.15} parent=31 // pred_check_branch
        %417 = sbr.rel (%p415) target = $region36
      $region35: #{inception_forward.15} parent=31 // pred_region
        %s418 = smul.u32 32, %s18
      $region36: #{inception_forward.15} parent=31 // pred_fallthru
        _
    $region32: #{inception_forward.15} parent=5 // pred_fallthru
      _
    %p419 = scmp.le.s32.totalorder 2, %s9
    // Predicated region
    $region37: #{inception_forward.15} parent=5 // pred_check
      %p420 = pneg %p419
    $region38: #{inception_forward.15} parent=5 // pred_check_branch
      %422 = sbr.rel (%p420) target = $region40
    $region39: #{inception_forward.15} parent=5 // pred_region
      %s423 = ssub.s32 %s9, 2
      // Predicated region
      $region41: #{inception_forward.15} parent=39 // pred_check
        %p424 = pneg %p132
      $region42: #{inception_forward.15} parent=39 // pred_check_branch
        %426 = sbr.rel (%p424) target = $region44
      $region43: #{inception_forward.15} parent=39 // pred_region
        %s427 = smul.u32 32, %s20
        %p428 = scmp.lt.s32.totalorder %s427, 63
        %s429 = scalar_select %p428, %s427, 63
        %p430 = scmp.lt.s32.totalorder %s21, 0
        %s431 = scalar_select %p430, %s21, 0
        %s432 = sadd.s32 %s431, %s429
        %s433 = smul.addr %s432, 8
        %s434 = scalar_lea.vmem %s3, %s433
      $region44: #{inception_forward.15} parent=39 // pred_fallthru
        _
    $region40: #{inception_forward.15} parent=5 // pred_fallthru
      _
  $region6: #{inception_forward.15} parent=0 // loop_footer
    %s13 = sadd.s32 1, %s9
  $region7: #{inception_forward.15} parent=0 // loop_footer_branch
    %8 = sbr.rel target = $region3
  $region8: #{inception_forward.15} parent=0 // loop_exit
    _

// kernel: inception_forward.14
$region0: #{inception_forward.14}
  #allocation0 [shape = 'u32[]', space=smem, size = 0x4, offset = 0x4, fixed_abs, tag = 'smem constant byte address 0x4 - core index']
  #allocation1 [shape = 'u32[144,128]{1,0:T(1,128)}', space=vmem, size = 0x12000, scoped, tag = 'internal scratch']
  #allocation2 [shape = 'f32[256,128]{1,0:T(8,128)}', space=vmem, size = 0x20000, scoped, tag = 'scratch operand']
  %s0 = inlined_call_operand.vmem [shape: bf16[512,128], index: 0, kind: input, shape index: {}]
  %s1 = inlined_call_operand.vmem [shape: bf16[128,128], index: 1, kind: input, shape index: {}]
  %s2 = inlined_call_operand.vmem [shape: f32[512,128], index: 2, kind: output, shape index: {0}]
  %s3 = inlined_call_operand.vmem [shape: f32[1,128], index: 3, kind: output, shape index: {1}]
  %s4 = inlined_call_operand.vmem [shape: f32[1,128], index: 4, kind: output, shape index: {2}]
  %5 = xla_tuple %s2, %s3, %s4
  %s6 = sld [smem:[#allocation0]]
  $region69: #{inception_forward.14} parent=0
    _
  %s8 = ssub.s32 1, %s6
  %s9 = scalar_select 0, %s8, %s6
  loop: start=0, step=1, limit=4
  $region2: #{inception_forward.14} parent=0 // loop_pre_header
    _
  $region3: #{inception_forward.14} parent=0 // loop_header
    %s11 = sphi 0, %s15
    %p12 = scmp.ge.s32.totalorder %s11, 4
    %s18 = sphi 0, %s37
    %s19 = sphi 0, %s33
    %s20 = sphi 0, %s29
    %s21 = sphi 0, %s18
    %s22 = sphi 0, %s19
    %s23 = sphi 0, %s20
    %s24 = sphi 0, %s21
    %s25 = sphi 0, %s22
    %s26 = sphi 0, %s23
    %s42 = sphi 0, %s44
    %s45 = sphi 0, %s42
    %s46 = sphi 0, %s45
    %s62 = sphi 0, %s46
    %s70 = sphi 0, %s72
    %s73 = sphi 0, %s70
    %s74 = sphi 0, %s73
    %s90 = sphi 0, %s74
    %s98 = sphi 0, %s100
    %s101 = sphi 0, %s98
    %s102 = sphi 0, %s101
    %s118 = sphi 0, %s102
    %s124 = sphi 0, %s126
    %s127 = sphi 0, %s124
    %s128 = sphi 0, %s127
    %s144 = sphi 0, %s128
    %s150 = sphi 0, %s152
    %s153 = sphi 0, %s150
    %s154 = sphi 0, %s153
    %s170 = sphi 0, %s154
  $region4: #{inception_forward.14} parent=0 // loop_header_branch
    %14 = sbr.rel (%p12) target = $region8
  $region5: #{inception_forward.14} parent=0 // loop_body
    %s16 = ssub.s32 %s11, 1
    %s17 = ssub.s32 %s11, 2
    %s27 = sadd.s32 1, %s20
    %p28 = scmp.ge.s32.totalorder %s27, 1
    %s29 = scalar_select %p28, 0, %s27
    %s30 = sadd.s32 1, %s19
    %s31 = scalar_select %p28, %s30, %s19
    %p32 = scmp.ge.s32.totalorder %s31, 2
    %s33 = scalar_select %p32, 0, %s31
    %s34 = sadd.s32 1, %s18
    %s35 = scalar_select %p32, %s34, %s18
    %p36 = scmp.ge.s32.totalorder %s35, 1
    %s37 = scalar_select %p36, 0, %s35
    %s38 = ssub.s32 %s19, %s33
    %s39 = ssub.s32 %s20, %s29
    %s40 = sor.u32 %s38, %s39
    %p41 = scmp.eq.s32.totalorder %s40, 0
    %s43 = sadd.s32 %s42, 1
    %s44 = scalar_select %p41, %s42, %s43
    %p47 = pneg %p41
    %p48 = scmp.eq.s32.totalorder %s11, 1
    %p49 = por %p47, %p48
    %p50 = scmp.ne.s32.totalorder %s42, %s45
    %p51 = scmp.eq.s32.totalorder %s11, 0
    %p52 = por %p50, %p51
    %p53 = scmp.ne.s32.totalorder %s42, %s45
    %p54 = scmp.eq.s32.totalorder %s16, 1
    %p55 = por %p53, %p54
    %p56 = scmp.ne.s32.totalorder %s45, %s46
    %p57 = scmp.eq.s32.totalorder %s16, 0
    %p58 = por %p56, %p57
    %p59 = scmp.ne.s32.totalorder %s45, %s46
    %p60 = scmp.eq.s32.totalorder %s17, 1
    %p61 = por %p59, %p60
    %p63 = scmp.ne.s32.totalorder %s46, %s62
    %p64 = scmp.eq.s32.totalorder %s17, 0
    %p65 = por %p63, %p64
    %s66 = ssub.s32 %s20, %s29
    %s67 = ssub.s32 %s18, %s37
    %s68 = sor.u32 %s66, %s67
    %p69 = scmp.eq.s32.totalorder %s68, 0
    %s71 = sadd.s32 %s70, 1
    %s72 = scalar_select %p69, %s70, %s71
    %p75 = pneg %p69
    %p76 = scmp.eq.s32.totalorder %s11, 1
    %p77 = por %p75, %p76
    %p78 = scmp.ne.s32.totalorder %s70, %s73
    %p79 = scmp.eq.s32.totalorder %s11, 0
    %p80 = por %p78, %p79
    %p81 = scmp.ne.s32.totalorder %s70, %s73
    %p82 = scmp.eq.s32.totalorder %s16, 1
    %p83 = por %p81, %p82
    %p84 = scmp.ne.s32.totalorder %s73, %s74
    %p85 = scmp.eq.s32.totalorder %s16, 0
    %p86 = por %p84, %p85
    %p87 = scmp.ne.s32.totalorder %s73, %s74
    %p88 = scmp.eq.s32.totalorder %s17, 1
    %p89 = por %p87, %p88
    %p91 = scmp.ne.s32.totalorder %s74, %s90
    %p92 = scmp.eq.s32.totalorder %s17, 0
    %p93 = por %p91, %p92
    %s94 = ssub.s32 %s19, %s33
    %s95 = ssub.s32 %s18, %s37
    %s96 = sor.u32 %s94, %s95
    %p97 = scmp.eq.s32.totalorder %s96, 0
    %s99 = sadd.s32 %s98, 1
    %s100 = scalar_select %p97, %s98, %s99
    %p103 = pneg %p97
    %p104 = scmp.eq.s32.totalorder %s11, 1
    %p105 = por %p103, %p104
    %p106 = scmp.ne.s32.totalorder %s98, %s101
    %p107 = scmp.eq.s32.totalorder %s11, 0
    %p108 = por %p106, %p107
    %p109 = scmp.ne.s32.totalorder %s98, %s101
    %p110 = scmp.eq.s32.totalorder %s16, 1
    %p111 = por %p109, %p110
    %p112 = scmp.ne.s32.totalorder %s101, %s102
    %p113 = scmp.eq.s32.totalorder %s16, 0
    %p114 = por %p112, %p113
    %p115 = scmp.ne.s32.totalorder %s101, %s102
    %p116 = scmp.eq.s32.totalorder %s17, 1
    %p117 = por %p115, %p116
    %p119 = scmp.ne.s32.totalorder %s102, %s118
    %p120 = scmp.eq.s32.totalorder %s17, 0
    %p121 = por %p119, %p120
    %s122 = ssub.s32 %s18, %s37
    %p123 = scmp.eq.s32.totalorder %s122, 0
    %s125 = sadd.s32 %s124, 1
    %s126 = scalar_select %p123, %s124, %s125
    %p129 = pneg %p123
    %p130 = scmp.eq.s32.totalorder %s11, 1
    %p131 = por %p129, %p130
    %p132 = scmp.ne.s32.totalorder %s124, %s127
    %p133 = scmp.eq.s32.totalorder %s11, 0
    %p134 = por %p132, %p133
    %p135 = scmp.ne.s32.totalorder %s124, %s127
    %p136 = scmp.eq.s32.totalorder %s16, 1
    %p137 = por %p135, %p136
    %p138 = scmp.ne.s32.totalorder %s127, %s128
    %p139 = scmp.eq.s32.totalorder %s16, 0
    %p140 = por %p138, %p139
    %p141 = scmp.ne.s32.totalorder %s127, %s128
    %p142 = scmp.eq.s32.totalorder %s17, 1
    %p143 = por %p141, %p142
    %p145 = scmp.ne.s32.totalorder %s128, %s144
    %p146 = scmp.eq.s32.totalorder %s17, 0
    %p147 = por %p145, %p146
    %s148 = ssub.s32 %s18, %s37
    %p149 = scmp.eq.s32.totalorder %s148, 0
    %s151 = sadd.s32 %s150, 1
    %s152 = scalar_select %p149, %s150, %s151
    %p155 = pneg %p149
    %p156 = scmp.eq.s32.totalorder %s11, 1
    %p157 = por %p155, %p156
    %p158 = scmp.ne.s32.totalorder %s150, %s153
    %p159 = scmp.eq.s32.totalorder %s11, 0
    %p160 = por %p158, %p159
    %p161 = scmp.ne.s32.totalorder %s150, %s153
    %p162 = scmp.eq.s32.totalorder %s16, 1
    %p163 = por %p161, %p162
    %p164 = scmp.ne.s32.totalorder %s153, %s154
    %p165 = scmp.eq.s32.totalorder %s16, 0
    %p166 = por %p164, %p165
    %p167 = scmp.ne.s32.totalorder %s153, %s154
    %p168 = scmp.eq.s32.totalorder %s17, 1
    %p169 = por %p167, %p168
    %p171 = scmp.ne.s32.totalorder %s154, %s170
    %p172 = scmp.eq.s32.totalorder %s17, 0
    %p173 = por %p171, %p172
    %p174 = scmp.le.s32.totalorder 1, %s11
    %p175 = scmp.lt.s32.totalorder %s11, 3
    %p176 = pnand %p174, %p175
    %p177 = pneg %p176
    // Predicated region
    $region9: #{inception_forward.14} parent=5 // pred_check
      _
    $region10: #{inception_forward.14} parent=5 // pred_check_branch
      %179 = sbr.rel (%p176) target = $region12
    $region11: #{inception_forward.14} parent=5 // pred_region
      %s180 = ssub.s32 %s11, 1
      // Predicated region
      $region13: #{inception_forward.14} parent=11 // pred_check
        %p181 = pneg %p86
      $region14: #{inception_forward.14} parent=11 // pred_check_branch
        %183 = sbr.rel (%p181) target = $region16
      $region15: #{inception_forward.14} parent=11 // pred_region
        %s184 = smul.u32 16, %s23
        %p185 = scmp.lt.s32.totalorder %s184, 15
        %s186 = scalar_select %p185, %s184, 15
        %p187 = scmp.lt.s32.totalorder %s21, 0
        %s188 = scalar_select %p187, %s21, 0
        %s189 = sadd.s32 %s188, %s186
        %s190 = smul.addr %s189, 4
        %s191 = scalar_lea.vmem %s1, %s190
        %s192 = smul.u32 16, %s23
      $region16: #{inception_forward.14} parent=11 // pred_fallthru
        _
    $region12: #{inception_forward.14} parent=5 // pred_fallthru
      _
    %p193 = scmp.lt.s32.totalorder %s11, 2
    // Predicated region
    $region17: #{inception_forward.14} parent=5 // pred_check
      %p194 = pneg %p193
    $region18: #{inception_forward.14} parent=5 // pred_check_branch
      %196 = sbr.rel (%p194) target = $region20
    $region19: #{inception_forward.14} parent=5 // pred_region
      // Predicated region
      $region21: #{inception_forward.14} parent=19 // pred_check
        %p197 = pneg %p52
      $region22: #{inception_forward.14} parent=19 // pred_check_branch
        %199 = sbr.rel (%p197) target = $region24
      $region23: #{inception_forward.14} parent=19 // pred_region
        %s200 = smul.u32 32, %s19
        %p201 = scmp.lt.s32.totalorder %s200, 63
        %s202 = scalar_select %p201, %s200, 63
        %p203 = scmp.lt.s32.totalorder %s20, 0
        %s204 = scalar_select %p203, %s20, 0
        %s205 = sadd.s32 %s204, %s202
        %s206 = smul.addr %s205, 4
        %s207 = scalar_lea.vmem %s0, %s206
        %s208 = smul.u32 32, %s19
      $region24: #{inception_forward.14} parent=19 // pred_fallthru
        _
    $region20: #{inception_forward.14} parent=5 // pred_fallthru
      _
    %p209 = scmp.le.s32.totalorder 1, %s11
    %p210 = scmp.lt.s32.totalorder %s11, 3
    %p211 = pnand %p209, %p210
    %p212 = pneg %p211
    // Predicated region
    $region25: #{inception_forward.14} parent=5 // pred_check
      _
    $region26: #{inception_forward.14} parent=5 // pred_check_branch
      %214 = sbr.rel (%p211) target = $region28
    $region27: #{inception_forward.14} parent=5 // pred_region
      %s215 = ssub.s32 %s11, 1
      %s216 = smul.u32 32, %s22
      %p217 = scmp.lt.s32.totalorder %s216, 63
      %s218 = scalar_select %p217, %s216, 63
      %p219 = scmp.lt.s32.totalorder %s23, 0
      %s220 = scalar_select %p219, %s23, 0
      %s221 = sadd.s32 %s220, %s218
      %s222 = smul.addr %s221, 4
      %s223 = scalar_lea.vmem %s0, %s222
      %p224 = pneg %p58
      %p225 = pneg %p55
      %s226 = smul.u32 16, %s23
      %p227 = scmp.lt.s32.totalorder %s226, 15
      %s228 = scalar_select %p227, %s226, 15
      %p229 = scmp.lt.s32.totalorder %s21, 0
      %s230 = scalar_select %p229, %s21, 0
      %s231 = sadd.s32 %s230, %s228
      %s232 = smul.addr %s231, 4
      %s233 = scalar_lea.vmem %s1, %s232
      %p234 = pneg %p86
      %p235 = pneg %p83
      %p236 = pneg %p114
      %p237 = pneg %p111
      %s238 = smul.u32 32, %s22
      %p239 = scmp.lt.s32.totalorder %s238, 63
      %s240 = scalar_select %p239, %s238, 63
      %p241 = scmp.lt.s32.totalorder %s21, 0
      %s242 = scalar_select %p241, %s21, 0
      %s243 = sadd.s32 %s242, %s240
      %s244 = smul.addr %s243, 8
      %s245 = scalar_lea.vmem %s2, %s244
      %p246 = pneg %p140
      %p247 = pneg %p137
      %p248 = scmp.lt.s32.totalorder %s21, 0
      %s249 = scalar_select %p248, %s21, 0
      %s250 = scalar_lea.vmem %s3, %s249
      %p251 = pneg %p166
      %p252 = pneg %p163
      %p253 = scmp.lt.s32.totalorder %s21, 0
      %s254 = scalar_select %p253, %s21, 0
      %s255 = scalar_lea.vmem %s4, %s254
      %s256 = smul.u32 32, %s22
      %p257 = scmp.lt.s32.totalorder %s256, 63
      %s258 = scalar_select %p257, %s256, 63
      %p259 = scmp.lt.s32.totalorder %s23, 0
      %s260 = scalar_select %p259, %s23, 0
      %s261 = sadd.s32 %s260, %s258
      %s262 = smul.addr %s261, 4
      %s263 = scalar_lea.vmem %s0, %s262
      %s264 = smul.u32 32, %s22
      %s265 = smul.u32 16, %s23
      %p266 = scmp.lt.s32.totalorder %s265, 15
      %s267 = scalar_select %p266, %s265, 15
      %p268 = scmp.lt.s32.totalorder %s21, 0
      %s269 = scalar_select %p268, %s21, 0
      %s270 = sadd.s32 %s269, %s267
      %s271 = smul.addr %s270, 4
      %s272 = scalar_lea.vmem %s1, %s271
      %s273 = smul.u32 16, %s23
      %s274 = smul.u32 32, %s22
      %p275 = scmp.lt.s32.totalorder %s274, 63
      %s276 = scalar_select %p275, %s274, 63
      %p277 = scmp.lt.s32.totalorder %s21, 0
      %s278 = scalar_select %p277, %s21, 0
      %s279 = sadd.s32 %s278, %s276
      %s280 = smul.addr %s279, 8
      %s281 = scalar_lea.vmem %s2, %s280
      %s282 = smul.u32 32, %s22
      %p283 = scmp.lt.s32.totalorder %s21, 0
      %s284 = scalar_select %p283, %s21, 0
      %s285 = scalar_lea.vmem %s3, %s284
      %p286 = scmp.lt.s32.totalorder %s21, 0
      %s287 = scalar_select %p286, %s21, 0
      %s288 = scalar_lea.vmem %s4, %s287
      %p290 = scmp.eq.s32.totalorder %s22, 0
      %p291 = scmp.eq.s32.totalorder %s23, 0
      %p292 = pnand %p290, %p291
      %p293 = pneg %p292
      // Predicated region
      $region29: #{inception_forward.14} parent=27 // pred_check
        _
      $region30: #{inception_forward.14} parent=27 // pred_check_branch
        %295 = sbr.rel (%p292) target = $region32
      $region31: #{inception_forward.14} parent=27 // pred_region
        %296 = vst [vmem:[%s285] sm:$0x1] 0.0
        %297 = vst [vmem:[%s288] sm:$0x1] 0.0
      $region32: #{inception_forward.14} parent=27 // pred_fallthru
        _
      // Predicated region
      $region33: #{inception_forward.14} parent=27 // pred_check
        %p298 = pneg %p291
      $region34: #{inception_forward.14} parent=27 // pred_check_branch
        %300 = sbr.rel (%p298) target = $region36
      $region35: #{inception_forward.14} parent=27 // pred_region
        %301 = vst [vmem:[#allocation2] sm:$0xff] 0.0
        %302 = vst [vmem:[#allocation2 + $0x8] sm:$0xff] 0.0
        %303 = vst [vmem:[#allocation2 + $0x10] sm:$0xff] 0.0
        %304 = vst [vmem:[#allocation2 + $0x18] sm:$0xff] 0.0
        %305 = vst [vmem:[#allocation2 + $0x20] sm:$0xff] 0.0
        %306 = vst [vmem:[#allocation2 + $0x28] sm:$0xff] 0.0
        %307 = vst [vmem:[#allocation2 + $0x30] sm:$0xff] 0.0
        %308 = vst [vmem:[#allocation2 + $0x38] sm:$0xff] 0.0
        %309 = vst [vmem:[#allocation2 + $0x40] sm:$0xff] 0.0
        %310 = vst [vmem:[#allocation2 + $0x48] sm:$0xff] 0.0
        %311 = vst [vmem:[#allocation2 + $0x50] sm:$0xff] 0.0
        %312 = vst [vmem:[#allocation2 + $0x58] sm:$0xff] 0.0
        %313 = vst [vmem:[#allocation2 + $0x60] sm:$0xff] 0.0
        %314 = vst [vmem:[#allocation2 + $0x68] sm:$0xff] 0.0
        %315 = vst [vmem:[#allocation2 + $0x70] sm:$0xff] 0.0
        %316 = vst [vmem:[#allocation2 + $0x78] sm:$0xff] 0.0
        %317 = vst [vmem:[#allocation2 + $0x80] sm:$0xff] 0.0
        %318 = vst [vmem:[#allocation2 + $0x88] sm:$0xff] 0.0
        %319 = vst [vmem:[#allocation2 + $0x90] sm:$0xff] 0.0
        %320 = vst [vmem:[#allocation2 + $0x98] sm:$0xff] 0.0
        %321 = vst [vmem:[#allocation2 + $0xa0] sm:$0xff] 0.0
        %322 = vst [vmem:[#allocation2 + $0xa8] sm:$0xff] 0.0
        %323 = vst [vmem:[#allocation2 + $0xb0] sm:$0xff] 0.0
        %324 = vst [vmem:[#allocation2 + $0xb8] sm:$0xff] 0.0
        %325 = vst [vmem:[#allocation2 + $0xc0] sm:$0xff] 0.0
        %326 = vst [vmem:[#allocation2 + $0xc8] sm:$0xff] 0.0
        %327 = vst [vmem:[#allocation2 + $0xd0] sm:$0xff] 0.0
        %328 = vst [vmem:[#allocation2 + $0xd8] sm:$0xff] 0.0
        %329 = vst [vmem:[#allocation2 + $0xe0] sm:$0xff] 0.0
        %330 = vst [vmem:[#allocation2 + $0xe8] sm:$0xff] 0.0
        %331 = vst [vmem:[#allocation2 + $0xf0] sm:$0xff] 0.0
        %332 = vst [vmem:[#allocation2 + $0xf8] sm:$0xff] 0.0
      $region36: #{inception_forward.14} parent=27 // pred_fallthru
        _
      %v333 = vld [vmem:[#allocation2] sm:$0xff]
      %v334 = vld [vmem:[#allocation2 + $0x8] sm:$0xff]
      %v335 = vld [vmem:[#allocation2 + $0x10] sm:$0xff]
      %v336 = vld [vmem:[#allocation2 + $0x18] sm:$0xff]
      %v337 = vld [vmem:[#allocation2 + $0x20] sm:$0xff]
      %v338 = vld [vmem:[#allocation2 + $0x28] sm:$0xff]
      %v339 = vld [vmem:[#allocation2 + $0x30] sm:$0xff]
      %v340 = vld [vmem:[#allocation2 + $0x38] sm:$0xff]
      %v341 = vld [vmem:[#allocation2 + $0x40] sm:$0xff]
      %v342 = vld [vmem:[#allocation2 + $0x48] sm:$0xff]
      %v343 = vld [vmem:[#allocation2 + $0x50] sm:$0xff]
      %v344 = vld [vmem:[#allocation2 + $0x58] sm:$0xff]
      %v345 = vld [vmem:[#allocation2 + $0x60] sm:$0xff]
      %v346 = vld [vmem:[#allocation2 + $0x68] sm:$0xff]
      %v347 = vld [vmem:[#allocation2 + $0x70] sm:$0xff]
      %v348 = vld [vmem:[#allocation2 + $0x78] sm:$0xff]
      %v349 = vld [vmem:[#allocation2 + $0x80] sm:$0xff]
      %v350 = vld [vmem:[#allocation2 + $0x88] sm:$0xff]
      %v351 = vld [vmem:[#allocation2 + $0x90] sm:$0xff]
      %v352 = vld [vmem:[#allocation2 + $0x98] sm:$0xff]
      %v353 = vld [vmem:[#allocation2 + $0xa0] sm:$0xff]
      %v354 = vld [vmem:[#allocation2 + $0xa8] sm:$0xff]
      %v355 = vld [vmem:[#allocation2 + $0xb0] sm:$0xff]
      %v356 = vld [vmem:[#allocation2 + $0xb8] sm:$0xff]
      %v357 = vld [vmem:[#allocation2 + $0xc0] sm:$0xff]
      %v358 = vld [vmem:[#allocation2 + $0xc8] sm:$0xff]
      %v359 = vld [vmem:[#allocation2 + $0xd0] sm:$0xff]
      %v360 = vld [vmem:[#allocation2 + $0xd8] sm:$0xff]
      %v361 = vld [vmem:[#allocation2 + $0xe0] sm:$0xff]
      %v362 = vld [vmem:[#allocation2 + $0xe8] sm:$0xff]
      %v363 = vld [vmem:[#allocation2 + $0xf0] sm:$0xff]
      %v364 = vld [vmem:[#allocation2 + $0xf8] sm:$0xff]
      %v365 = vld [vmem:[%s263] sm:$0xf]
      %v366 = vld [vmem:[%s263 + $0x4] sm:$0xf]
      %v367 = vld [vmem:[%s263 + $0x8] sm:$0xf]
      %v368 = vld [vmem:[%s263 + $0xc] sm:$0xf]
      %v369 = vld [vmem:[%s263 + $0x10] sm:$0xf]
      %v370 = vld [vmem:[%s263 + $0x14] sm:$0xf]
      %v371 = vld [vmem:[%s263 + $0x18] sm:$0xf]
      %v372 = vld [vmem:[%s263 + $0x1c] sm:$0xf]
      %v373 = vld [vmem:[%s263 + $0x20] sm:$0xf]
      %v374 = vld [vmem:[%s263 + $0x24] sm:$0xf]
      %v375 = vld [vmem:[%s263 + $0x28] sm:$0xf]
      %v376 = vld [vmem:[%s263 + $0x2c] sm:$0xf]
      %v377 = vld [vmem:[%s263 + $0x30] sm:$0xf]
      %v378 = vld [vmem:[%s263 + $0x34] sm:$0xf]
      %v379 = vld [vmem:[%s263 + $0x38] sm:$0xf]
      %v380 = vld [vmem:[%s263 + $0x3c] sm:$0xf]
      %v381 = vld [vmem:[%s263 + $0x40] sm:$0xf]
      %v382 = vld [vmem:[%s263 + $0x44] sm:$0xf]
      %v383 = vld [vmem:[%s263 + $0x48] sm:$0xf]
      %v384 = vld [vmem:[%s263 + $0x4c] sm:$0xf]
      %v385 = vld [vmem:[%s263 + $0x50] sm:$0xf]
      %v386 = vld [vmem:[%s263 + $0x54] sm:$0xf]
      %v387 = vld [vmem:[%s263 + $0x58] sm:$0xf]
      %v388 = vld [vmem:[%s263 + $0x5c] sm:$0xf]
      %v389 = vld [vmem:[%s263 + $0x60] sm:$0xf]
      %v390 = vld [vmem:[%s263 + $0x64] sm:$0xf]
      %v391 = vld [vmem:[%s263 + $0x68] sm:$0xf]
      %v392 = vld [vmem:[%s263 + $0x6c] sm:$0xf]
      %v393 = vld [vmem:[%s263 + $0x70] sm:$0xf]
      %v394 = vld [vmem:[%s263 + $0x74] sm:$0xf]
      %v395 = vld [vmem:[%s263 + $0x78] sm:$0xf]
      %v396 = vld [vmem:[%s263 + $0x7c] sm:$0xf]
      %v397 = vld [vmem:[%s272] sm:$0xf]
      %v398 = vld [vmem:[%s272 + $0x4] sm:$0xf]
      %v399 = vld [vmem:[%s272 + $0x8] sm:$0xf]
      %v400 = vld [vmem:[%s272 + $0xc] sm:$0xf]
      %v401 = vld [vmem:[%s272 + $0x10] sm:$0xf]
      %v402 = vld [vmem:[%s272 + $0x14] sm:$0xf]
      %v403 = vld [vmem:[%s272 + $0x18] sm:$0xf]
      %v404 = vld [vmem:[%s272 + $0x1c] sm:$0xf]
      %v405 = vld [vmem:[%s272 + $0x20] sm:$0xf]
      %v406 = vld [vmem:[%s272 + $0x24] sm:$0xf]
      %v407 = vld [vmem:[%s272 + $0x28] sm:$0xf]
      %v408 = vld [vmem:[%s272 + $0x2c] sm:$0xf]
      %v409 = vld [vmem:[%s272 + $0x30] sm:$0xf]
      %v410 = vld [vmem:[%s272 + $0x34] sm:$0xf]
      %v411 = vld [vmem:[%s272 + $0x38] sm:$0xf]
      %v412 = vld [vmem:[%s272 + $0x3c] sm:$0xf]
      %v445 = vunpack.c.l.b16 %v365
      %v446 = vunpack.c.l.b16 %v366
      %v447 = vunpack.c.l.b16 %v367
      %v448 = vunpack.c.l.b16 %v368
      %v449 = vunpack.c.l.b16 %v369
      %v450 = vunpack.c.l.b16 %v370
      %v451 = vunpack.c.l.b16 %v371
      %v452 = vunpack.c.l.b16 %v372
      %v453 = vunpack.c.l.b16 %v373
      %v454 = vunpack.c.l.b16 %v374
      %v455 = vunpack.c.l.b16 %v375
      %v456 = vunpack.c.l.b16 %v376
      %v457 = vunpack.c.l.b16 %v377
      %v458 = vunpack.c.l.b16 %v378
      %v459 = vunpack.c.l.b16 %v379
      %v460 = vunpack.c.l.b16 %v380
      %v461 = vunpack.c.l.b16 %v381
      %v462 = vunpack.c.l.b16 %v382
      %v463 = vunpack.c.l.b16 %v383
      %v464 = vunpack.c.l.b16 %v384
      %v465 = vunpack.c.l.b16 %v385
      %v466 = vunpack.c.l.b16 %v386
      %v467 = vunpack.c.l.b16 %v387
      %v468 = vunpack.c.l.b16 %v388
      %v469 = vunpack.c.l.b16 %v389
      %v470 = vunpack.c.l.b16 %v390
      %v471 = vunpack.c.l.b16 %v391
      %v472 = vunpack.c.l.b16 %v392
      %v473 = vunpack.c.l.b16 %v393
      %v474 = vunpack.c.l.b16 %v394
      %v475 = vunpack.c.l.b16 %v395
      %v476 = vunpack.c.l.b16 %v396
      %v477 = vpack.c.b16 %v446, %v445
      %v478 = vpack.c.b16 %v448, %v447
      %v479 = vpack.c.b16 %v450, %v449
      %v480 = vpack.c.b16 %v452, %v451
      %v481 = vpack.c.b16 %v454, %v453
      %v482 = vpack.c.b16 %v456, %v455
      %v483 = vpack.c.b16 %v458, %v457
      %v484 = vpack.c.b16 %v460, %v459
      %v485 = vpack.c.b16 %v462, %v461
      %v486 = vpack.c.b16 %v464, %v463
      %v487 = vpack.c.b16 %v466, %v465
      %v488 = vpack.c.b16 %v468, %v467
      %v489 = vpack.c.b16 %v470, %v469
      %v490 = vpack.c.b16 %v472, %v471
      %v491 = vpack.c.b16 %v474, %v473
      %v492 = vpack.c.b16 %v476, %v475
      %v525 = vunpack.c.l.b16 %v397
      %v526 = vunpack.c.l.b16 %v398
      %v527 = vunpack.c.l.b16 %v399
      %v528 = vunpack.c.l.b16 %v400
      %v529 = vunpack.c.l.b16 %v401
      %v530 = vunpack.c.l.b16 %v402
      %v531 = vunpack.c.l.b16 %v403
      %v532 = vunpack.c.l.b16 %v404
      %v533 = vunpack.c.l.b16 %v405
      %v534 = vunpack.c.l.b16 %v406
      %v535 = vunpack.c.l.b16 %v407
      %v536 = vunpack.c.l.b16 %v408
      %v537 = vunpack.c.l.b16 %v409
      %v538 = vunpack.c.l.b16 %v410
      %v539 = vunpack.c.l.b16 %v411
      %v540 = vunpack.c.l.b16 %v412
      %v541 = vpack.c.b16 %v526, %v525
      %v542 = vpack.c.b16 %v528, %v527
      %v543 = vpack.c.b16 %v530, %v529
      %v544 = vpack.c.b16 %v532, %v531
      %v545 = vpack.c.b16 %v534, %v533
      %v546 = vpack.c.b16 %v536, %v535
      %v547 = vpack.c.b16 %v538, %v537
      %v548 = vpack.c.b16 %v540, %v539
      %557 = vmatprep.subr.bf16.mxu0 0
      %558 = vmatpush1.bf16.msra.mxu0 %v541
      %559 = vmatprep.subr.bf16.mxu0 0
      %560 = vmatpush1.bf16.msra.mxu0 %v542
      %561 = vmatprep.subr.bf16.mxu0 0
      %562 = vmatpush1.bf16.msra.mxu0 %v543
      %563 = vmatprep.subr.bf16.mxu0 0
      %564 = vmatpush1.bf16.msra.mxu0 %v544
      %565 = vmatprep.subr.bf16.mxu0 0
      %566 = vmatpush1.bf16.msra.mxu0 %v545
      %567 = vmatprep.subr.bf16.mxu0 0
      %568 = vmatpush1.bf16.msra.mxu0 %v546
      %569 = vmatprep.subr.bf16.mxu0 0
      %570 = vmatpush1.bf16.msra.mxu0 %v547
      %571 = vmatprep.subr.bf16.mxu0 0
      %572 = vmatpush1.bf16.msra.mxu0 %v548
      %573 = vmatprep.subr.bf16.mxu0 0
      %574 = vmatpush1.bf16.msra.mxu0 0
      %575 = vmatprep.subr.bf16.mxu0 0
      %576 = vmatpush1.bf16.msra.mxu0 0
      %577 = vmatprep.subr.bf16.mxu0 0
      %578 = vmatpush1.bf16.msra.mxu0 0
      %579 = vmatprep.subr.bf16.mxu0 0
      %580 = vmatpush1.bf16.msra.mxu0 0
      %581 = vmatprep.subr.bf16.mxu0 0
      %582 = vmatpush1.bf16.msra.mxu0 0
      %583 = vmatprep.subr.bf16.mxu0 0
      %584 = vmatpush1.bf16.msra.mxu0 0
      %585 = vmatprep.subr.bf16.mxu0 0
      %586 = vmatpush1.bf16.msra.mxu0 0
      %587 = vmatprep.subr.bf16.mxu0 0
      %588 = vmatpush1.bf16.msra.mxu0 0
      %589 = vmatprep.mubr.bf16.mxu0 0
      %590 = vmatmul.mubr.bf16.gmra.mrb[0].mxu0 %v477
      %v591 = vpop.f32.mrb[0].mxu0
      %v592 = vadd.f32 0.0, %v591
      %v593 = vpop.f32.mrb[0].mxu0
      %v594 = vpop.f32.mrb[0].mxu0
      %v595 = vadd.f32 0.0, %v594
      %v596 = vpop.f32.mrb[0].mxu0
      %597 = vmatprep.mubr.bf16.mxu0 0
      %598 = vmatmul.mubr.bf16.gmra.mrb[0].mxu0 %v478
      %v599 = vpop.f32.mrb[0].mxu0
      %v600 = vadd.f32 0.0, %v599
      %v601 = vpop.f32.mrb[0].mxu0
      %v602 = vpop.f32.mrb[0].mxu0
      %v603 = vadd.f32 0.0, %v602
      %v604 = vpop.f32.mrb[0].mxu0
      %605 = vmatprep.mubr.bf16.mxu0 0
      %606 = vmatmul.mubr.bf16.gmra.mrb[0].mxu0 %v479
      %v607 = vpop.f32.mrb[0].mxu0
      %v608 = vadd.f32 0.0, %v607
      %v609 = vpop.f32.mrb[0].mxu0
      %v610 = vpop.f32.mrb[0].mxu0
      %v611 = vadd.f32 0.0, %v610
      %v612 = vpop.f32.mrb[0].mxu0
      %613 = vmatprep.mubr.bf16.mxu0 0
      %614 = vmatmul.mubr.bf16.gmra.mrb[0].mxu0 %v480
      %v615 = vpop.f32.mrb[0].mxu0
      %v616 = vadd.f32 0.0, %v615
      %v617 = vpop.f32.mrb[0].mxu0
      %v618 = vpop.f32.mrb[0].mxu0
      %v619 = vadd.f32 0.0, %v618
      %v620 = vpop.f32.mrb[0].mxu0
      %621 = vmatprep.mubr.bf16.mxu0 0
      %622 = vmatmul.mubr.bf16.gmra.mrb[0].mxu0 %v481
      %v623 = vpop.f32.mrb[0].mxu0
      %v624 = vadd.f32 0.0, %v623
      %v625 = vpop.f32.mrb[0].mxu0
      %v626 = vpop.f32.mrb[0].mxu0
      %v627 = vadd.f32 0.0, %v626
      %v628 = vpop.f32.mrb[0].mxu0
      %629 = vmatprep.mubr.bf16.mxu0 0
      %630 = vmatmul.mubr.bf16.gmra.mrb[0].mxu0 %v482
      %v631 = vpop.f32.mrb[0].mxu0
      %v632 = vadd.f32 0.0, %v631
      %v633 = vpop.f32.mrb[0].mxu0
      %v634 = vpop.f32.mrb[0].mxu0
      %v635 = vadd.f32 0.0, %v634
      %v636 = vpop.f32.mrb[0].mxu0
      %637 = vmatprep.mubr.bf16.mxu0 0
      %638 = vmatmul.mubr.bf16.gmra.mrb[0].mxu0 %v483
      %v639 = vpop.f32.mrb[0].mxu0
      %v640 = vadd.f32 0.0, %v639
      %v641 = vpop.f32.mrb[0].mxu0
      %v642 = vpop.f32.mrb[0].mxu0
      %v643 = vadd.f32 0.0, %v642
      %v644 = vpop.f32.mrb[0].mxu0
      %645 = vmatprep.mubr.bf16.mxu0 0
      %646 = vmatmul.mubr.bf16.gmra.mrb[0].mxu0 %v484
      %v647 = vpop.f32.mrb[0].mxu0
      %v648 = vadd.f32 0.0, %v647
      %v649 = vpop.f32.mrb[0].mxu0
      %v650 = vpop.f32.mrb[0].mxu0
      %v651 = vadd.f32 0.0, %v650
      %v652 = vpop.f32.mrb[0].mxu0
      %653 = vmatprep.mubr.bf16.mxu0 0
      %654 = vmatmul.mubr.bf16.gmra.mrb[0].mxu0 %v485
      %v655 = vpop.f32.mrb[0].mxu0
      %v656 = vadd.f32 0.0, %v655
      %v657 = vpop.f32.mrb[0].mxu0
      %v658 = vpop.f32.mrb[0].mxu0
      %v659 = vadd.f32 0.0, %v658
      %v660 = vpop.f32.mrb[0].mxu0
      %661 = vmatprep.mubr.bf16.mxu0 0
      %662 = vmatmul.mubr.bf16.gmra.mrb[0].mxu0 %v486
      %v663 = vpop.f32.mrb[0].mxu0
      %v664 = vadd.f32 0.0, %v663
      %v665 = vpop.f32.mrb[0].mxu0
      %v666 = vpop.f32.mrb[0].mxu0
      %v667 = vadd.f32 0.0, %v666
      %v668 = vpop.f32.mrb[0].mxu0
      %669 = vmatprep.mubr.bf16.mxu0 0
      %670 = vmatmul.mubr.bf16.gmra.mrb[0].mxu0 %v487
      %v671 = vpop.f32.mrb[0].mxu0
      %v672 = vadd.f32 0.0, %v671
      %v673 = vpop.f32.mrb[0].mxu0
      %v674 = vpop.f32.mrb[0].mxu0
      %v675 = vadd.f32 0.0, %v674
      %v676 = vpop.f32.mrb[0].mxu0
      %677 = vmatprep.mubr.bf16.mxu0 0
      %678 = vmatmul.mubr.bf16.gmra.mrb[0].mxu0 %v488
      %v679 = vpop.f32.mrb[0].mxu0
      %v680 = vadd.f32 0.0, %v679
      %v681 = vpop.f32.mrb[0].mxu0
      %v682 = vpop.f32.mrb[0].mxu0
      %v683 = vadd.f32 0.0, %v682
      %v684 = vpop.f32.mrb[0].mxu0
      %685 = vmatprep.mubr.bf16.mxu0 0
      %686 = vmatmul.mubr.bf16.gmra.mrb[0].mxu0 %v489
      %v687 = vpop.f32.mrb[0].mxu0
      %v688 = vadd.f32 0.0, %v687
      %v689 = vpop.f32.mrb[0].mxu0
      %v690 = vpop.f32.mrb[0].mxu0
      %v691 = vadd.f32 0.0, %v690
      %v692 = vpop.f32.mrb[0].mxu0
      %693 = vmatprep.mubr.bf16.mxu0 0
      %694 = vmatmul.mubr.bf16.gmra.mrb[0].mxu0 %v490
      %v695 = vpop.f32.mrb[0].mxu0
      %v696 = vadd.f32 0.0, %v695
      %v697 = vpop.f32.mrb[0].mxu0
      %v698 = vpop.f32.mrb[0].mxu0
      %v699 = vadd.f32 0.0, %v698
      %v700 = vpop.f32.mrb[0].mxu0
      %701 = vmatprep.mubr.bf16.mxu0 0
      %702 = vmatmul.mubr.bf16.gmra.mrb[0].mxu0 %v491
      %v703 = vpop.f32.mrb[0].mxu0
      %v704 = vadd.f32 0.0, %v703
      %v705 = vpop.f32.mrb[0].mxu0
      %v706 = vpop.f32.mrb[0].mxu0
      %v707 = vadd.f32 0.0, %v706
      %v708 = vpop.f32.mrb[0].mxu0
      %709 = vmatprep.mubr.bf16.mxu0 0
      %710 = vmatmul.mubr.bf16.gmra.mrb[0].mxu0 %v492
      %v711 = vpop.f32.mrb[0].mxu0
      %v712 = vadd.f32 0.0, %v711
      %v713 = vpop.f32.mrb[0].mxu0
      %v714 = vpop.f32.mrb[0].mxu0
      %v715 = vadd.f32 0.0, %v714
      %v716 = vpop.f32.mrb[0].mxu0
      %717 = vdwg.mxu0
      %v718 = vadd.f32 %v333, %v592
      %v719 = vadd.f32 %v334, %v595
      %v720 = vadd.f32 %v335, %v600
      %v721 = vadd.f32 %v336, %v603
      %v722 = vadd.f32 %v337, %v608
      %v723 = vadd.f32 %v338, %v611
      %v724 = vadd.f32 %v339, %v616
      %v725 = vadd.f32 %v340, %v619
      %v726 = vadd.f32 %v341, %v624
      %v727 = vadd.f32 %v342, %v627
      %v728 = vadd.f32 %v343, %v632
      %v729 = vadd.f32 %v344, %v635
      %v730 = vadd.f32 %v345, %v640
      %v731 = vadd.f32 %v346, %v643
      %v732 = vadd.f32 %v347, %v648
      %v733 = vadd.f32 %v348, %v651
      %v734 = vadd.f32 %v349, %v656
      %v735 = vadd.f32 %v350, %v659
      %v736 = vadd.f32 %v351, %v664
      %v737 = vadd.f32 %v352, %v667
      %v738 = vadd.f32 %v353, %v672
      %v739 = vadd.f32 %v354, %v675
      %v740 = vadd.f32 %v355, %v680
      %v741 = vadd.f32 %v356, %v683
      %v742 = vadd.f32 %v357, %v688
      %v743 = vadd.f32 %v358, %v691
      %v744 = vadd.f32 %v359, %v696
      %v745 = vadd.f32 %v360, %v699
      %v746 = vadd.f32 %v361, %v704
      %v747 = vadd.f32 %v362, %v707
      %v748 = vadd.f32 %v363, %v712
      %v749 = vadd.f32 %v364, %v715
      %750 = vst [vmem:[#allocation2] sm:$0xff] %v718
      %751 = vst [vmem:[#allocation2 + $0x8] sm:$0xff] %v719
      %752 = vst [vmem:[#allocation2 + $0x10] sm:$0xff] %v720
      %753 = vst [vmem:[#allocation2 + $0x18] sm:$0xff] %v721
      %754 = vst [vmem:[#allocation2 + $0x20] sm:$0xff] %v722
      %755 = vst [vmem:[#allocation2 + $0x28] sm:$0xff] %v723
      %756 = vst [vmem:[#allocation2 + $0x30] sm:$0xff] %v724
      %757 = vst [vmem:[#allocation2 + $0x38] sm:$0xff] %v725
      %758 = vst [vmem:[#allocation2 + $0x40] sm:$0xff] %v726
      %759 = vst [vmem:[#allocation2 + $0x48] sm:$0xff] %v727
      %760 = vst [vmem:[#allocation2 + $0x50] sm:$0xff] %v728
      %761 = vst [vmem:[#allocation2 + $0x58] sm:$0xff] %v729
      %762 = vst [vmem:[#allocation2 + $0x60] sm:$0xff] %v730
      %763 = vst [vmem:[#allocation2 + $0x68] sm:$0xff] %v731
      %764 = vst [vmem:[#allocation2 + $0x70] sm:$0xff] %v732
      %765 = vst [vmem:[#allocation2 + $0x78] sm:$0xff] %v733
      %766 = vst [vmem:[#allocation2 + $0x80] sm:$0xff] %v734
      %767 = vst [vmem:[#allocation2 + $0x88] sm:$0xff] %v735
      %768 = vst [vmem:[#allocation2 + $0x90] sm:$0xff] %v736
      %769 = vst [vmem:[#allocation2 + $0x98] sm:$0xff] %v737
      %770 = vst [vmem:[#allocation2 + $0xa0] sm:$0xff] %v738
      %771 = vst [vmem:[#allocation2 + $0xa8] sm:$0xff] %v739
      %772 = vst [vmem:[#allocation2 + $0xb0] sm:$0xff] %v740
      %773 = vst [vmem:[#allocation2 + $0xb8] sm:$0xff] %v741
      %774 = vst [vmem:[#allocation2 + $0xc0] sm:$0xff] %v742
      %775 = vst [vmem:[#allocation2 + $0xc8] sm:$0xff] %v743
      %776 = vst [vmem:[#allocation2 + $0xd0] sm:$0xff] %v744
      %777 = vst [vmem:[#allocation2 + $0xd8] sm:$0xff] %v745
      %778 = vst [vmem:[#allocation2 + $0xe0] sm:$0xff] %v746
      %779 = vst [vmem:[#allocation2 + $0xe8] sm:$0xff] %v747
      %780 = vst [vmem:[#allocation2 + $0xf0] sm:$0xff] %v748
      %781 = vst [vmem:[#allocation2 + $0xf8] sm:$0xff] %v749
      // Predicated region
      $region37: #{inception_forward.14} parent=27 // pred_check
        %p782 = pneg %p291
      $region38: #{inception_forward.14} parent=27 // pred_check_branch
        %784 = sbr.rel (%p782) target = $region40
      $region39: #{inception_forward.14} parent=27 // pred_region
        %v785 = vld [vmem:[#allocation2] sm:$0xff]
        %v786 = vld [vmem:[#allocation2 + $0x8] sm:$0xff]
        %v787 = vld [vmem:[#allocation2 + $0x10] sm:$0xff]
        %v788 = vld [vmem:[#allocation2 + $0x18] sm:$0xff]
        %v789 = vld [vmem:[#allocation2 + $0x20] sm:$0xff]
        %v790 = vld [vmem:[#allocation2 + $0x28] sm:$0xff]
        %v791 = vld [vmem:[#allocation2 + $0x30] sm:$0xff]
        %v792 = vld [vmem:[#allocation2 + $0x38] sm:$0xff]
        %v793 = vld [vmem:[#allocation2 + $0x40] sm:$0xff]
        %v794 = vld [vmem:[#allocation2 + $0x48] sm:$0xff]
        %v795 = vld [vmem:[#allocation2 + $0x50] sm:$0xff]
        %v796 = vld [vmem:[#allocation2 + $0x58] sm:$0xff]
        %v797 = vld [vmem:[#allocation2 + $0x60] sm:$0xff]
        %v798 = vld [vmem:[#allocation2 + $0x68] sm:$0xff]
        %v799 = vld [vmem:[#allocation2 + $0x70] sm:$0xff]
        %v800 = vld [vmem:[#allocation2 + $0x78] sm:$0xff]
        %v801 = vld [vmem:[#allocation2 + $0x80] sm:$0xff]
        %v802 = vld [vmem:[#allocation2 + $0x88] sm:$0xff]
        %v803 = vld [vmem:[#allocation2 + $0x90] sm:$0xff]
        %v804 = vld [vmem:[#allocation2 + $0x98] sm:$0xff]
        %v805 = vld [vmem:[#allocation2 + $0xa0] sm:$0xff]
        %v806 = vld [vmem:[#allocation2 + $0xa8] sm:$0xff]
        %v807 = vld [vmem:[#allocation2 + $0xb0] sm:$0xff]
        %v808 = vld [vmem:[#allocation2 + $0xb8] sm:$0xff]
        %v809 = vld [vmem:[#allocation2 + $0xc0] sm:$0xff]
        %v810 = vld [vmem:[#allocation2 + $0xc8] sm:$0xff]
        %v811 = vld [vmem:[#allocation2 + $0xd0] sm:$0xff]
        %v812 = vld [vmem:[#allocation2 + $0xd8] sm:$0xff]
        %v813 = vld [vmem:[#allocation2 + $0xe0] sm:$0xff]
        %v814 = vld [vmem:[#allocation2 + $0xe8] sm:$0xff]
        %v815 = vld [vmem:[#allocation2 + $0xf0] sm:$0xff]
        %v816 = vld [vmem:[#allocation2 + $0xf8] sm:$0xff]
        %817 = vst [vmem:[%s281] sm:$0xff] %v785
        %818 = vst [vmem:[%s281 + $0x8] sm:$0xff] %v786
        %819 = vst [vmem:[%s281 + $0x10] sm:$0xff] %v787
        %820 = vst [vmem:[%s281 + $0x18] sm:$0xff] %v788
        %821 = vst [vmem:[%s281 + $0x20] sm:$0xff] %v789
        %822 = vst [vmem:[%s281 + $0x28] sm:$0xff] %v790
        %823 = vst [vmem:[%s281 + $0x30] sm:$0xff] %v791
        %824 = vst [vmem:[%s281 + $0x38] sm:$0xff] %v792
        %825 = vst [vmem:[%s281 + $0x40] sm:$0xff] %v793
        %826 = vst [vmem:[%s281 + $0x48] sm:$0xff] %v794
        %827 = vst [vmem:[%s281 + $0x50] sm:$0xff] %v795
        %828 = vst [vmem:[%s281 + $0x58] sm:$0xff] %v796
        %829 = vst [vmem:[%s281 + $0x60] sm:$0xff] %v797
        %830 = vst [vmem:[%s281 + $0x68] sm:$0xff] %v798
        %831 = vst [vmem:[%s281 + $0x70] sm:$0xff] %v799
        %832 = vst [vmem:[%s281 + $0x78] sm:$0xff] %v800
        %833 = vst [vmem:[%s281 + $0x80] sm:$0xff] %v801
        %834 = vst [vmem:[%s281 + $0x88] sm:$0xff] %v802
        %835 = vst [vmem:[%s281 + $0x90] sm:$0xff] %v803
        %836 = vst [vmem:[%s281 + $0x98] sm:$0xff] %v804
        %837 = vst [vmem:[%s281 + $0xa0] sm:$0xff] %v805
        %838 = vst [vmem:[%s281 + $0xa8] sm:$0xff] %v806
        %839 = vst [vmem:[%s281 + $0xb0] sm:$0xff] %v807
        %840 = vst [vmem:[%s281 + $0xb8] sm:$0xff] %v808
        %841 = vst [vmem:[%s281 + $0xc0] sm:$0xff] %v809
        %842 = vst [vmem:[%s281 + $0xc8] sm:$0xff] %v810
        %843 = vst [vmem:[%s281 + $0xd0] sm:$0xff] %v811
        %844 = vst [vmem:[%s281 + $0xd8] sm:$0xff] %v812
        %845 = vst [vmem:[%s281 + $0xe0] sm:$0xff] %v813
        %846 = vst [vmem:[%s281 + $0xe8] sm:$0xff] %v814
        %847 = vst [vmem:[%s281 + $0xf0] sm:$0xff] %v815
        %848 = vst [vmem:[%s281 + $0xf8] sm:$0xff] %v816
        %v849 = vld [vmem:[%s285] sm:$0x1]
        %v850 = vadd.f32 %v785, %v786
        %v851 = vadd.f32 %v850, %v787
        %v852 = vadd.f32 %v851, %v788
        %v853 = vadd.f32 %v852, %v789
        %v854 = vadd.f32 %v853, %v790
        %v855 = vadd.f32 %v854, %v791
        %v856 = vadd.f32 %v855, %v792
        %v857 = vadd.f32 %v856, %v793
        %v858 = vadd.f32 %v857, %v794
        %v859 = vadd.f32 %v858, %v795
        %v860 = vadd.f32 %v859, %v796
        %v861 = vadd.f32 %v860, %v797
        %v862 = vadd.f32 %v861, %v798
        %v863 = vadd.f32 %v862, %v799
        %v864 = vadd.f32 %v863, %v800
        %v865 = vadd.f32 %v864, %v801
        %v866 = vadd.f32 %v865, %v802
        %v867 = vadd.f32 %v866, %v803
        %v868 = vadd.f32 %v867, %v804
        %v869 = vadd.f32 %v868, %v805
        %v870 = vadd.f32 %v869, %v806
        %v871 = vadd.f32 %v870, %v807
        %v872 = vadd.f32 %v871, %v808
        %v873 = vadd.f32 %v872, %v809
        %v874 = vadd.f32 %v873, %v810
        %v875 = vadd.f32 %v874, %v811
        %v876 = vadd.f32 %v875, %v812
        %v877 = vadd.f32 %v876, %v813
        %v878 = vadd.f32 %v877, %v814
        %v879 = vadd.f32 %v878, %v815
        %v880 = vadd.f32 %v879, %v816
        %v881 = vrot.slane %v880, 4
        %v882 = vadd.f32 %v880, %v881
        %v883 = vrot.slane %v882, 2
        %v884 = vadd.f32 %v882, %v883
        %v885 = vrot.slane %v884, 1
        %v886 = vadd.f32 %v884, %v885
        %v887 = vadd.f32 %v849, %v886
        %888 = vst [vmem:[%s285] sm:$0x1] %v887
        %v889 = vld [vmem:[%s288] sm:$0x1]
        %v890 = vmul.f32 %v785, %v785
        %v891 = vmul.f32 %v786, %v786
        %v892 = vmul.f32 %v787, %v787
        %v893 = vmul.f32 %v788, %v788
        %v894 = vmul.f32 %v789, %v789
        %v895 = vmul.f32 %v790, %v790
        %v896 = vmul.f32 %v791, %v791
        %v897 = vmul.f32 %v792, %v792
        %v898 = vmul.f32 %v793, %v793
        %v899 = vmul.f32 %v794, %v794
        %v900 = vmul.f32 %v795, %v795
        %v901 = vmul.f32 %v796, %v796
        %v902 = vmul.f32 %v797, %v797
        %v903 = vmul.f32 %v798, %v798
        %v904 = vmul.f32 %v799, %v799
        %v905 = vmul.f32 %v800, %v800
        %v906 = vmul.f32 %v801, %v801
        %v907 = vmul.f32 %v802, %v802
        %v908 = vmul.f32 %v803, %v803
        %v909 = vmul.f32 %v804, %v804
        %v910 = vmul.f32 %v805, %v805
        %v911 = vmul.f32 %v806, %v806
        %v912 = vmul.f32 %v807, %v807
        %v913 = vmul.f32 %v808, %v808
        %v914 = vmul.f32 %v809, %v809
        %v915 = vmul.f32 %v810, %v810
        %v916 = vmul.f32 %v811, %v811
        %v917 = vmul.f32 %v812, %v812
        %v918 = vmul.f32 %v813, %v813
        %v919 = vmul.f32 %v814, %v814
        %v920 = vmul.f32 %v815, %v815
        %v921 = vmul.f32 %v816, %v816
        %v922 = vadd.f32 %v890, %v891
        %v923 = vadd.f32 %v922, %v892
        %v924 = vadd.f32 %v923, %v893
        %v925 = vadd.f32 %v924, %v894
        %v926 = vadd.f32 %v925, %v895
        %v927 = vadd.f32 %v926, %v896
        %v928 = vadd.f32 %v927, %v897
        %v929 = vadd.f32 %v928, %v898
        %v930 = vadd.f32 %v929, %v899
        %v931 = vadd.f32 %v930, %v900
        %v932 = vadd.f32 %v931, %v901
        %v933 = vadd.f32 %v932, %v902
        %v934 = vadd.f32 %v933, %v903
        %v935 = vadd.f32 %v934, %v904
        %v936 = vadd.f32 %v935, %v905
        %v937 = vadd.f32 %v936, %v906
        %v938 = vadd.f32 %v937, %v907
        %v939 = vadd.f32 %v938, %v908
        %v940 = vadd.f32 %v939, %v909
        %v941 = vadd.f32 %v940, %v910
        %v942 = vadd.f32 %v941, %v911
        %v943 = vadd.f32 %v942, %v912
        %v944 = vadd.f32 %v943, %v913
        %v945 = vadd.f32 %v944, %v914
        %v946 = vadd.f32 %v945, %v915
        %v947 = vadd.f32 %v946, %v916
        %v948 = vadd.f32 %v947, %v917
        %v949 = vadd.f32 %v948, %v918
        %v950 = vadd.f32 %v949, %v919
        %v951 = vadd.f32 %v950, %v920
        %v952 = vadd.f32 %v951, %v921
        %v953 = vrot.slane %v952, 4
        %v954 = vadd.f32 %v952, %v953
        %v955 = vrot.slane %v954, 2
        %v956 = vadd.f32 %v954, %v955
        %v957 = vrot.slane %v956, 1
        %v958 = vadd.f32 %v956, %v957
        %v959 = vadd.f32 %v889, %v958
        %960 = vst [vmem:[%s288] sm:$0x1] %v959
      $region40: #{inception_forward.14} parent=27 // pred_fallthru
        _
      %s961 = smul.u32 32, %s22
      %p962 = scmp.lt.s32.totalorder %s961, 63
      %s963 = scalar_select %p962, %s961, 63
      %p964 = scmp.lt.s32.totalorder %s21, 0
      %s965 = scalar_select %p964, %s21, 0
      %s966 = sadd.s32 %s965, %s963
      %s967 = smul.addr %s966, 8
      %s968 = scalar_lea.vmem %s2, %s967
      %p969 = scmp.lt.s32.totalorder %s21, 0
      %s970 = scalar_select %p969, %s21, 0
      %s971 = scalar_lea.vmem %s3, %s970
      %p972 = scmp.lt.s32.totalorder %s21, 0
      %s973 = scalar_select %p972, %s21, 0
      %s974 = scalar_lea.vmem %s4, %s973
      // Predicated region
      $region41: #{inception_forward.14} parent=27 // pred_check
        %p975 = pneg %p111
      $region42: #{inception_forward.14} parent=27 // pred_check_branch
        %977 = sbr.rel (%p975) target = $region44
      $region43: #{inception_forward.14} parent=27 // pred_region
        %s978 = smul.u32 32, %s22
      $region44: #{inception_forward.14} parent=27 // pred_fallthru
        _
      // Predicated region
      $region45: #{inception_forward.14} parent=27 // pred_check
        %p979 = pneg %p137
      $region46: #{inception_forward.14} parent=27 // pred_check_branch
        %981 = sbr.rel (%p979) target = $region48
      $region47: #{inception_forward.14} parent=27 // pred_region
        _
      $region48: #{inception_forward.14} parent=27 // pred_fallthru
        _
      // Predicated region
      $region49: #{inception_forward.14} parent=27 // pred_check
        %p982 = pneg %p163
      $region50: #{inception_forward.14} parent=27 // pred_check_branch
        %984 = sbr.rel (%p982) target = $region52
      $region51: #{inception_forward.14} parent=27 // pred_region
        _
      $region52: #{inception_forward.14} parent=27 // pred_fallthru
        _
      // Predicated region
      $region53: #{inception_forward.14} parent=27 // pred_check
        %p985 = pneg %p137
      $region54: #{inception_forward.14} parent=27 // pred_check_branch
        %987 = sbr.rel (%p985) target = $region56
      $region55: #{inception_forward.14} parent=27 // pred_region
        %p988 = scmp.lt.s32.totalorder %s21, 0
        %s989 = scalar_select %p988, %s21, 0
        %s990 = scalar_lea.vmem %s3, %s989
      $region56: #{inception_forward.14} parent=27 // pred_fallthru
        _
      // Predicated region
      $region57: #{inception_forward.14} parent=27 // pred_check
        %p991 = pneg %p163
      $region58: #{inception_forward.14} parent=27 // pred_check_branch
        %993 = sbr.rel (%p991) target = $region60
      $region59: #{inception_forward.14} parent=27 // pred_region
        %p994 = scmp.lt.s32.totalorder %s21, 0
        %s995 = scalar_select %p994, %s21, 0
        %s996 = scalar_lea.vmem %s4, %s995
      $region60: #{inception_forward.14} parent=27 // pred_fallthru
        _
    $region28: #{inception_forward.14} parent=5 // pred_fallthru
      _
    %p997 = scmp.le.s32.totalorder 2, %s11
    // Predicated region
    $region61: #{inception_forward.14} parent=5 // pred_check
      %p998 = pneg %p997
    $region62: #{inception_forward.14} parent=5 // pred_check_branch
      %1000 = sbr.rel (%p998) target = $region64
    $region63: #{inception_forward.14} parent=5 // pred_region
      %s1001 = ssub.s32 %s11, 2
      // Predicated region
      $region65: #{inception_forward.14} parent=63 // pred_check
        %p1002 = pneg %p117
      $region66: #{inception_forward.14} parent=63 // pred_check_branch
        %1004 = sbr.rel (%p1002) target = $region68
      $region67: #{inception_forward.14} parent=63 // pred_region
        %s1005 = smul.u32 32, %s25
        %p1006 = scmp.lt.s32.totalorder %s1005, 63
        %s1007 = scalar_select %p1006, %s1005, 63
        %p1008 = scmp.lt.s32.totalorder %s24, 0
        %s1009 = scalar_select %p1008, %s24, 0
        %s1010 = sadd.s32 %s1009, %s1007
        %s1011 = smul.addr %s1010, 8
        %s1012 = scalar_lea.vmem %s2, %s1011
      $region68: #{inception_forward.14} parent=63 // pred_fallthru
        _
    $region64: #{inception_forward.14} parent=5 // pred_fallthru
      _
  $region6: #{inception_forward.14} parent=0 // loop_footer
    %s15 = sadd.s32 1, %s11
  $region7: #{inception_forward.14} parent=0 // loop_footer_branch
    %10 = sbr.rel target = $region3
  $region8: #{inception_forward.14} parent=0 // loop_exit
    _

// kernel: inception_forward.20
$region0: #{inception_forward.20}
  #allocation0 [shape = 'u32[]', space=smem, size = 0x4, offset = 0x4, fixed_abs, tag = 'smem constant byte address 0x4 - core index']
  #allocation1 [shape = 'u32[144,128]{1,0:T(1,128)}', space=vmem, size = 0x12000, scoped, tag = 'internal scratch']
  #allocation2 [shape = 'f32[256,128]{1,0:T(8,128)}', space=vmem, size = 0x20000, scoped, tag = 'scratch operand']
  %s0 = inlined_call_operand.vmem [shape: bf16[512,128], index: 0, kind: input, shape index: {}]
  %s1 = inlined_call_operand.vmem [shape: bf16[128,128], index: 1, kind: input, shape index: {}]
  %s2 = inlined_call_operand.vmem [shape: f32[512,128], index: 2, kind: output, shape index: {0}]
  %s3 = inlined_call_operand.hbm [shape: f32[1,128], index: 3, kind: output, shape index: {1}]
  %s4 = inlined_call_operand.hbm [shape: f32[1,128], index: 4, kind: output, shape index: {2}]
  %5 = xla_tuple %s2, %s3, %s4
  %s6 = sld [smem:[#allocation0]]
  $region69: #{inception_forward.20} parent=0
    _
  %s8 = ssub.s32 1, %s6
  %s9 = scalar_select 0, %s8, %s6
  $region1: #{inception_forward.20} parent=0
    #allocation3 [shape = 'u8[512]{0}', space=vmem, size = 0x400, scoped, tag = 'output window, operand 1, single buffered']
    #allocation4 [shape = 's32[2]{0}', space=sflag, size = 0x8, scoped, tag = 'scoped memory for inception_forward.20']
    #allocation5 [shape = 'u8[512]{0}', space=vmem, size = 0x400, scoped, tag = 'output window, operand 2, single buffered']
    #allocation6 [shape = 's32[1]{0}', space=sflag, size = 0x4, scoped, tag = 'scoped memory for inception_forward.20']
    %10 = vsyncpa [#allocation4], 0
    %11 = vsyncpa [#allocation6], 0
    loop: start=0, step=1, limit=4
    $region2: #{inception_forward.20} parent=1 // loop_pre_header
      _
    $region3: #{inception_forward.20} parent=1 // loop_header
      %s13 = sphi 0, %s17
      %p14 = scmp.ge.s32.totalorder %s13, 4
      %s20 = sphi 0, %s39
      %s21 = sphi 0, %s35
      %s22 = sphi 0, %s31
      %s23 = sphi 0, %s20
      %s24 = sphi 0, %s21
      %s25 = sphi 0, %s22
      %s26 = sphi 0, %s23
      %s27 = sphi 0, %s24
      %s28 = sphi 0, %s25
      %s44 = sphi 0, %s46
      %s47 = sphi 0, %s44
      %s48 = sphi 0, %s47
      %s64 = sphi 0, %s48
      %s72 = sphi 0, %s74
      %s75 = sphi 0, %s72
      %s76 = sphi 0, %s75
      %s92 = sphi 0, %s76
      %s100 = sphi 0, %s102
      %s103 = sphi 0, %s100
      %s104 = sphi 0, %s103
      %s120 = sphi 0, %s104
      %s126 = sphi 0, %s128
      %s129 = sphi 0, %s126
      %s130 = sphi 0, %s129
      %s146 = sphi 0, %s130
      %s152 = sphi 0, %s154
      %s155 = sphi 0, %s152
      %s156 = sphi 0, %s155
      %s172 = sphi 0, %s156
    $region4: #{inception_forward.20} parent=1 // loop_header_branch
      %16 = sbr.rel (%p14) target = $region8
    $region5: #{inception_forward.20} parent=1 // loop_body
      %s18 = ssub.s32 %s13, 1
      %s19 = ssub.s32 %s13, 2
      %s29 = sadd.s32 1, %s22
      %p30 = scmp.ge.s32.totalorder %s29, 1
      %s31 = scalar_select %p30, 0, %s29
      %s32 = sadd.s32 1, %s21
      %s33 = scalar_select %p30, %s32, %s21
      %p34 = scmp.ge.s32.totalorder %s33, 2
      %s35 = scalar_select %p34, 0, %s33
      %s36 = sadd.s32 1, %s20
      %s37 = scalar_select %p34, %s36, %s20
      %p38 = scmp.ge.s32.totalorder %s37, 1
      %s39 = scalar_select %p38, 0, %s37
      %s40 = ssub.s32 %s21, %s35
      %s41 = ssub.s32 %s22, %s31
      %s42 = sor.u32 %s40, %s41
      %p43 = scmp.eq.s32.totalorder %s42, 0
      %s45 = sadd.s32 %s44, 1
      %s46 = scalar_select %p43, %s44, %s45
      %p49 = pneg %p43
      %p50 = scmp.eq.s32.totalorder %s13, 1
      %p51 = por %p49, %p50
      %p52 = scmp.ne.s32.totalorder %s44, %s47
      %p53 = scmp.eq.s32.totalorder %s13, 0
      %p54 = por %p52, %p53
      %p55 = scmp.ne.s32.totalorder %s44, %s47
      %p56 = scmp.eq.s32.totalorder %s18, 1
      %p57 = por %p55, %p56
      %p58 = scmp.ne.s32.totalorder %s47, %s48
      %p59 = scmp.eq.s32.totalorder %s18, 0
      %p60 = por %p58, %p59
      %p61 = scmp.ne.s32.totalorder %s47, %s48
      %p62 = scmp.eq.s32.totalorder %s19, 1
      %p63 = por %p61, %p62
      %p65 = scmp.ne.s32.totalorder %s48, %s64
      %p66 = scmp.eq.s32.totalorder %s19, 0
      %p67 = por %p65, %p66
      %s68 = ssub.s32 %s22, %s31
      %s69 = ssub.s32 %s20, %s39
      %s70 = sor.u32 %s68, %s69
      %p71 = scmp.eq.s32.totalorder %s70, 0
      %s73 = sadd.s32 %s72, 1
      %s74 = scalar_select %p71, %s72, %s73
      %p77 = pneg %p71
      %p78 = scmp.eq.s32.totalorder %s13, 1
      %p79 = por %p77, %p78
      %p80 = scmp.ne.s32.totalorder %s72, %s75
      %p81 = scmp.eq.s32.totalorder %s13, 0
      %p82 = por %p80, %p81
      %p83 = scmp.ne.s32.totalorder %s72, %s75
      %p84 = scmp.eq.s32.totalorder %s18, 1
      %p85 = por %p83, %p84
      %p86 = scmp.ne.s32.totalorder %s75, %s76
      %p87 = scmp.eq.s32.totalorder %s18, 0
      %p88 = por %p86, %p87
      %p89 = scmp.ne.s32.totalorder %s75, %s76
      %p90 = scmp.eq.s32.totalorder %s19, 1
      %p91 = por %p89, %p90
      %p93 = scmp.ne.s32.totalorder %s76, %s92
      %p94 = scmp.eq.s32.totalorder %s19, 0
      %p95 = por %p93, %p94
      %s96 = ssub.s32 %s21, %s35
      %s97 = ssub.s32 %s20, %s39
      %s98 = sor.u32 %s96, %s97
      %p99 = scmp.eq.s32.totalorder %s98, 0
      %s101 = sadd.s32 %s100, 1
      %s102 = scalar_select %p99, %s100, %s101
      %p105 = pneg %p99
      %p106 = scmp.eq.s32.totalorder %s13, 1
      %p107 = por %p105, %p106
      %p108 = scmp.ne.s32.totalorder %s100, %s103
      %p109 = scmp.eq.s32.totalorder %s13, 0
      %p110 = por %p108, %p109
      %p111 = scmp.ne.s32.totalorder %s100, %s103
      %p112 = scmp.eq.s32.totalorder %s18, 1
      %p113 = por %p111, %p112
      %p114 = scmp.ne.s32.totalorder %s103, %s104
      %p115 = scmp.eq.s32.totalorder %s18, 0
      %p116 = por %p114, %p115
      %p117 = scmp.ne.s32.totalorder %s103, %s104
      %p118 = scmp.eq.s32.totalorder %s19, 1
      %p119 = por %p117, %p118
      %p121 = scmp.ne.s32.totalorder %s104, %s120
      %p122 = scmp.eq.s32.totalorder %s19, 0
      %p123 = por %p121, %p122
      %s124 = ssub.s32 %s20, %s39
      %p125 = scmp.eq.s32.totalorder %s124, 0
      %s127 = sadd.s32 %s126, 1
      %s128 = scalar_select %p125, %s126, %s127
      %p131 = pneg %p125
      %p132 = scmp.eq.s32.totalorder %s13, 1
      %p133 = por %p131, %p132
      %p134 = scmp.ne.s32.totalorder %s126, %s129
      %p135 = scmp.eq.s32.totalorder %s13, 0
      %p136 = por %p134, %p135
      %p137 = scmp.ne.s32.totalorder %s126, %s129
      %p138 = scmp.eq.s32.totalorder %s18, 1
      %p139 = por %p137, %p138
      %p140 = scmp.ne.s32.totalorder %s129, %s130
      %p141 = scmp.eq.s32.totalorder %s18, 0
      %p142 = por %p140, %p141
      %p143 = scmp.ne.s32.totalorder %s129, %s130
      %p144 = scmp.eq.s32.totalorder %s19, 1
      %p145 = por %p143, %p144
      %p147 = scmp.ne.s32.totalorder %s130, %s146
      %p148 = scmp.eq.s32.totalorder %s19, 0
      %p149 = por %p147, %p148
      %s150 = ssub.s32 %s20, %s39
      %p151 = scmp.eq.s32.totalorder %s150, 0
      %s153 = sadd.s32 %s152, 1
      %s154 = scalar_select %p151, %s152, %s153
      %p157 = pneg %p151
      %p158 = scmp.eq.s32.totalorder %s13, 1
      %p159 = por %p157, %p158
      %p160 = scmp.ne.s32.totalorder %s152, %s155
      %p161 = scmp.eq.s32.totalorder %s13, 0
      %p162 = por %p160, %p161
      %p163 = scmp.ne.s32.totalorder %s152, %s155
      %p164 = scmp.eq.s32.totalorder %s18, 1
      %p165 = por %p163, %p164
      %p166 = scmp.ne.s32.totalorder %s155, %s156
      %p167 = scmp.eq.s32.totalorder %s18, 0
      %p168 = por %p166, %p167
      %p169 = scmp.ne.s32.totalorder %s155, %s156
      %p170 = scmp.eq.s32.totalorder %s19, 1
      %p171 = por %p169, %p170
      %p173 = scmp.ne.s32.totalorder %s156, %s172
      %p174 = scmp.eq.s32.totalorder %s19, 0
      %p175 = por %p173, %p174
      %p176 = scmp.le.s32.totalorder 1, %s13
      %p177 = scmp.lt.s32.totalorder %s13, 3
      %p178 = pnand %p176, %p177
      %p179 = pneg %p178
      // Predicated region
      $region9: #{inception_forward.20} parent=5 // pred_check
        _
      $region10: #{inception_forward.20} parent=5 // pred_check_branch
        %181 = sbr.rel (%p178) target = $region12
      $region11: #{inception_forward.20} parent=5 // pred_region
        %s182 = ssub.s32 %s13, 1
        // Predicated region
        $region13: #{inception_forward.20} parent=11 // pred_check
          %p183 = pneg %p88
        $region14: #{inception_forward.20} parent=11 // pred_check_branch
          %185 = sbr.rel (%p183) target = $region16
        $region15: #{inception_forward.20} parent=11 // pred_region
          %s186 = smul.u32 16, %s25
          %p187 = scmp.lt.s32.totalorder %s186, 15
          %s188 = scalar_select %p187, %s186, 15
          %p189 = scmp.lt.s32.totalorder %s23, 0
          %s190 = scalar_select %p189, %s23, 0
          %s191 = sadd.s32 %s190, %s188
          %s192 = smul.addr %s191, 4
          %s193 = scalar_lea.vmem %s1, %s192
          %s194 = smul.u32 16, %s25
        $region16: #{inception_forward.20} parent=11 // pred_fallthru
          _
      $region12: #{inception_forward.20} parent=5 // pred_fallthru
        _
      %p195 = scmp.lt.s32.totalorder %s13, 2
      // Predicated region
      $region17: #{inception_forward.20} parent=5 // pred_check
        %p196 = pneg %p195
      $region18: #{inception_forward.20} parent=5 // pred_check_branch
        %198 = sbr.rel (%p196) target = $region20
      $region19: #{inception_forward.20} parent=5 // pred_region
        // Predicated region
        $region21: #{inception_forward.20} parent=19 // pred_check
          %p199 = pneg %p54
        $region22: #{inception_forward.20} parent=19 // pred_check_branch
          %201 = sbr.rel (%p199) target = $region24
        $region23: #{inception_forward.20} parent=19 // pred_region
          %s202 = smul.u32 32, %s21
          %p203 = scmp.lt.s32.totalorder %s202, 63
          %s204 = scalar_select %p203, %s202, 63
          %p205 = scmp.lt.s32.totalorder %s22, 0
          %s206 = scalar_select %p205, %s22, 0
          %s207 = sadd.s32 %s206, %s204
          %s208 = smul.addr %s207, 4
          %s209 = scalar_lea.vmem %s0, %s208
          %s210 = smul.u32 32, %s21
        $region24: #{inception_forward.20} parent=19 // pred_fallthru
          _
      $region20: #{inception_forward.20} parent=5 // pred_fallthru
        _
      %p211 = scmp.le.s32.totalorder 1, %s13
      %p212 = scmp.lt.s32.totalorder %s13, 3
      %p213 = pnand %p211, %p212
      %p214 = pneg %p213
      // Predicated region
      $region25: #{inception_forward.20} parent=5 // pred_check
        _
      $region26: #{inception_forward.20} parent=5 // pred_check_branch
        %216 = sbr.rel (%p213) target = $region28
      $region27: #{inception_forward.20} parent=5 // pred_region
        %s217 = ssub.s32 %s13, 1
        %s218 = smul.u32 32, %s24
        %p219 = scmp.lt.s32.totalorder %s218, 63
        %s220 = scalar_select %p219, %s218, 63
        %p221 = scmp.lt.s32.totalorder %s25, 0
        %s222 = scalar_select %p221, %s25, 0
        %s223 = sadd.s32 %s222, %s220
        %s224 = smul.addr %s223, 4
        %s225 = scalar_lea.vmem %s0, %s224
        %p226 = pneg %p60
        %p227 = pneg %p57
        %s228 = smul.u32 16, %s25
        %p229 = scmp.lt.s32.totalorder %s228, 15
        %s230 = scalar_select %p229, %s228, 15
        %p231 = scmp.lt.s32.totalorder %s23, 0
        %s232 = scalar_select %p231, %s23, 0
        %s233 = sadd.s32 %s232, %s230
        %s234 = smul.addr %s233, 4
        %s235 = scalar_lea.vmem %s1, %s234
        %p236 = pneg %p88
        %p237 = pneg %p85
        %p238 = pneg %p116
        %p239 = pneg %p113
        %s240 = smul.u32 32, %s24
        %p241 = scmp.lt.s32.totalorder %s240, 63
        %s242 = scalar_select %p241, %s240, 63
        %p243 = scmp.lt.s32.totalorder %s23, 0
        %s244 = scalar_select %p243, %s23, 0
        %s245 = sadd.s32 %s244, %s242
        %s246 = smul.addr %s245, 8
        %s247 = scalar_lea.vmem %s2, %s246
        %p248 = pneg %p142
        %p249 = pneg %p139
        %p250 = pneg %p168
        %p251 = pneg %p165
        %s252 = smul.u32 32, %s24
        %p253 = scmp.lt.s32.totalorder %s252, 63
        %s254 = scalar_select %p253, %s252, 63
        %p255 = scmp.lt.s32.totalorder %s25, 0
        %s256 = scalar_select %p255, %s25, 0
        %s257 = sadd.s32 %s256, %s254
        %s258 = smul.addr %s257, 4
        %s259 = scalar_lea.vmem %s0, %s258
        %s260 = smul.u32 32, %s24
        %s261 = smul.u32 16, %s25
        %p262 = scmp.lt.s32.totalorder %s261, 15
        %s263 = scalar_select %p262, %s261, 15
        %p264 = scmp.lt.s32.totalorder %s23, 0
        %s265 = scalar_select %p264, %s23, 0
        %s266 = sadd.s32 %s265, %s263
        %s267 = smul.addr %s266, 4
        %s268 = scalar_lea.vmem %s1, %s267
        %s269 = smul.u32 16, %s25
        %s270 = smul.u32 32, %s24
        %p271 = scmp.lt.s32.totalorder %s270, 63
        %s272 = scalar_select %p271, %s270, 63
        %p273 = scmp.lt.s32.totalorder %s23, 0
        %s274 = scalar_select %p273, %s23, 0
        %s275 = sadd.s32 %s274, %s272
        %s276 = smul.addr %s275, 8
        %s277 = scalar_lea.vmem %s2, %s276
        %s278 = smul.u32 32, %s24
        %p280 = scmp.eq.s32.totalorder %s24, 0
        %p281 = scmp.eq.s32.totalorder %s25, 0
        %p282 = pnand %p280, %p281
        %p283 = pneg %p282
        // Predicated region
        $region29: #{inception_forward.20} parent=27 // pred_check
          _
        $region30: #{inception_forward.20} parent=27 // pred_check_branch
          %285 = sbr.rel (%p282) target = $region32
        $region31: #{inception_forward.20} parent=27 // pred_region
          %286 = vst [vmem:[#allocation3] sm:$0x1] 0.0
          %287 = vst [vmem:[#allocation5] sm:$0x1] 0.0
        $region32: #{inception_forward.20} parent=27 // pred_fallthru
          _
        // Predicated region
        $region33: #{inception_forward.20} parent=27 // pred_check
          %p288 = pneg %p281
        $region34: #{inception_forward.20} parent=27 // pred_check_branch
          %290 = sbr.rel (%p288) target = $region36
        $region35: #{inception_forward.20} parent=27 // pred_region
          %291 = vst [vmem:[#allocation2] sm:$0xff] 0.0
          %292 = vst [vmem:[#allocation2 + $0x8] sm:$0xff] 0.0
          %293 = vst [vmem:[#allocation2 + $0x10] sm:$0xff] 0.0
          %294 = vst [vmem:[#allocation2 + $0x18] sm:$0xff] 0.0
          %295 = vst [vmem:[#allocation2 + $0x20] sm:$0xff] 0.0
          %296 = vst [vmem:[#allocation2 + $0x28] sm:$0xff] 0.0
          %297 = vst [vmem:[#allocation2 + $0x30] sm:$0xff] 0.0
          %298 = vst [vmem:[#allocation2 + $0x38] sm:$0xff] 0.0
          %299 = vst [vmem:[#allocation2 + $0x40] sm:$0xff] 0.0
          %300 = vst [vmem:[#allocation2 + $0x48] sm:$0xff] 0.0
          %301 = vst [vmem:[#allocation2 + $0x50] sm:$0xff] 0.0
          %302 = vst [vmem:[#allocation2 + $0x58] sm:$0xff] 0.0
          %303 = vst [vmem:[#allocation2 + $0x60] sm:$0xff] 0.0
          %304 = vst [vmem:[#allocation2 + $0x68] sm:$0xff] 0.0
          %305 = vst [vmem:[#allocation2 + $0x70] sm:$0xff] 0.0
          %306 = vst [vmem:[#allocation2 + $0x78] sm:$0xff] 0.0
          %307 = vst [vmem:[#allocation2 + $0x80] sm:$0xff] 0.0
          %308 = vst [vmem:[#allocation2 + $0x88] sm:$0xff] 0.0
          %309 = vst [vmem:[#allocation2 + $0x90] sm:$0xff] 0.0
          %310 = vst [vmem:[#allocation2 + $0x98] sm:$0xff] 0.0
          %311 = vst [vmem:[#allocation2 + $0xa0] sm:$0xff] 0.0
          %312 = vst [vmem:[#allocation2 + $0xa8] sm:$0xff] 0.0
          %313 = vst [vmem:[#allocation2 + $0xb0] sm:$0xff] 0.0
          %314 = vst [vmem:[#allocation2 + $0xb8] sm:$0xff] 0.0
          %315 = vst [vmem:[#allocation2 + $0xc0] sm:$0xff] 0.0
          %316 = vst [vmem:[#allocation2 + $0xc8] sm:$0xff] 0.0
          %317 = vst [vmem:[#allocation2 + $0xd0] sm:$0xff] 0.0
          %318 = vst [vmem:[#allocation2 + $0xd8] sm:$0xff] 0.0
          %319 = vst [vmem:[#allocation2 + $0xe0] sm:$0xff] 0.0
          %320 = vst [vmem:[#allocation2 + $0xe8] sm:$0xff] 0.0
          %321 = vst [vmem:[#allocation2 + $0xf0] sm:$0xff] 0.0
          %322 = vst [vmem:[#allocation2 + $0xf8] sm:$0xff] 0.0
        $region36: #{inception_forward.20} parent=27 // pred_fallthru
          _
        %v323 = vld [vmem:[#allocation2] sm:$0xff]
        %v324 = vld [vmem:[#allocation2 + $0x8] sm:$0xff]
        %v325 = vld [vmem:[#allocation2 + $0x10] sm:$0xff]
        %v326 = vld [vmem:[#allocation2 + $0x18] sm:$0xff]
        %v327 = vld [vmem:[#allocation2 + $0x20] sm:$0xff]
        %v328 = vld [vmem:[#allocation2 + $0x28] sm:$0xff]
        %v329 = vld [vmem:[#allocation2 + $0x30] sm:$0xff]
        %v330 = vld [vmem:[#allocation2 + $0x38] sm:$0xff]
        %v331 = vld [vmem:[#allocation2 + $0x40] sm:$0xff]
        %v332 = vld [vmem:[#allocation2 + $0x48] sm:$0xff]
        %v333 = vld [vmem:[#allocation2 + $0x50] sm:$0xff]
        %v334 = vld [vmem:[#allocation2 + $0x58] sm:$0xff]
        %v335 = vld [vmem:[#allocation2 + $0x60] sm:$0xff]
        %v336 = vld [vmem:[#allocation2 + $0x68] sm:$0xff]
        %v337 = vld [vmem:[#allocation2 + $0x70] sm:$0xff]
        %v338 = vld [vmem:[#allocation2 + $0x78] sm:$0xff]
        %v339 = vld [vmem:[#allocation2 + $0x80] sm:$0xff]
        %v340 = vld [vmem:[#allocation2 + $0x88] sm:$0xff]
        %v341 = vld [vmem:[#allocation2 + $0x90] sm:$0xff]
        %v342 = vld [vmem:[#allocation2 + $0x98] sm:$0xff]
        %v343 = vld [vmem:[#allocation2 + $0xa0] sm:$0xff]
        %v344 = vld [vmem:[#allocation2 + $0xa8] sm:$0xff]
        %v345 = vld [vmem:[#allocation2 + $0xb0] sm:$0xff]
        %v346 = vld [vmem:[#allocation2 + $0xb8] sm:$0xff]
        %v347 = vld [vmem:[#allocation2 + $0xc0] sm:$0xff]
        %v348 = vld [vmem:[#allocation2 + $0xc8] sm:$0xff]
        %v349 = vld [vmem:[#allocation2 + $0xd0] sm:$0xff]
        %v350 = vld [vmem:[#allocation2 + $0xd8] sm:$0xff]
        %v351 = vld [vmem:[#allocation2 + $0xe0] sm:$0xff]
        %v352 = vld [vmem:[#allocation2 + $0xe8] sm:$0xff]
        %v353 = vld [vmem:[#allocation2 + $0xf0] sm:$0xff]
        %v354 = vld [vmem:[#allocation2 + $0xf8] sm:$0xff]
        %v355 = vld [vmem:[%s259] sm:$0xf]
        %v356 = vld [vmem:[%s259 + $0x4] sm:$0xf]
        %v357 = vld [vmem:[%s259 + $0x8] sm:$0xf]
        %v358 = vld [vmem:[%s259 + $0xc] sm:$0xf]
        %v359 = vld [vmem:[%s259 + $0x10] sm:$0xf]
        %v360 = vld [vmem:[%s259 + $0x14] sm:$0xf]
        %v361 = vld [vmem:[%s259 + $0x18] sm:$0xf]
        %v362 = vld [vmem:[%s259 + $0x1c] sm:$0xf]
        %v363 = vld [vmem:[%s259 + $0x20] sm:$0xf]
        %v364 = vld [vmem:[%s259 + $0x24] sm:$0xf]
        %v365 = vld [vmem:[%s259 + $0x28] sm:$0xf]
        %v366 = vld [vmem:[%s259 + $0x2c] sm:$0xf]
        %v367 = vld [vmem:[%s259 + $0x30] sm:$0xf]
        %v368 = vld [vmem:[%s259 + $0x34] sm:$0xf]
        %v369 = vld [vmem:[%s259 + $0x38] sm:$0xf]
        %v370 = vld [vmem:[%s259 + $0x3c] sm:$0xf]
        %v371 = vld [vmem:[%s259 + $0x40] sm:$0xf]
        %v372 = vld [vmem:[%s259 + $0x44] sm:$0xf]
        %v373 = vld [vmem:[%s259 + $0x48] sm:$0xf]
        %v374 = vld [vmem:[%s259 + $0x4c] sm:$0xf]
        %v375 = vld [vmem:[%s259 + $0x50] sm:$0xf]
        %v376 = vld [vmem:[%s259 + $0x54] sm:$0xf]
        %v377 = vld [vmem:[%s259 + $0x58] sm:$0xf]
        %v378 = vld [vmem:[%s259 + $0x5c] sm:$0xf]
        %v379 = vld [vmem:[%s259 + $0x60] sm:$0xf]
        %v380 = vld [vmem:[%s259 + $0x64] sm:$0xf]
        %v381 = vld [vmem:[%s259 + $0x68] sm:$0xf]
        %v382 = vld [vmem:[%s259 + $0x6c] sm:$0xf]
        %v383 = vld [vmem:[%s259 + $0x70] sm:$0xf]
        %v384 = vld [vmem:[%s259 + $0x74] sm:$0xf]
        %v385 = vld [vmem:[%s259 + $0x78] sm:$0xf]
        %v386 = vld [vmem:[%s259 + $0x7c] sm:$0xf]
        %v387 = vld [vmem:[%s268] sm:$0xf]
        %v388 = vld [vmem:[%s268 + $0x4] sm:$0xf]
        %v389 = vld [vmem:[%s268 + $0x8] sm:$0xf]
        %v390 = vld [vmem:[%s268 + $0xc] sm:$0xf]
        %v391 = vld [vmem:[%s268 + $0x10] sm:$0xf]
        %v392 = vld [vmem:[%s268 + $0x14] sm:$0xf]
        %v393 = vld [vmem:[%s268 + $0x18] sm:$0xf]
        %v394 = vld [vmem:[%s268 + $0x1c] sm:$0xf]
        %v395 = vld [vmem:[%s268 + $0x20] sm:$0xf]
        %v396 = vld [vmem:[%s268 + $0x24] sm:$0xf]
        %v397 = vld [vmem:[%s268 + $0x28] sm:$0xf]
        %v398 = vld [vmem:[%s268 + $0x2c] sm:$0xf]
        %v399 = vld [vmem:[%s268 + $0x30] sm:$0xf]
        %v400 = vld [vmem:[%s268 + $0x34] sm:$0xf]
        %v401 = vld [vmem:[%s268 + $0x38] sm:$0xf]
        %v402 = vld [vmem:[%s268 + $0x3c] sm:$0xf]
        %v435 = vunpack.c.l.b16 %v355
        %v436 = vunpack.c.l.b16 %v356
        %v437 = vunpack.c.l.b16 %v357
        %v438 = vunpack.c.l.b16 %v358
        %v439 = vunpack.c.l.b16 %v359
        %v440 = vunpack.c.l.b16 %v360
        %v441 = vunpack.c.l.b16 %v361
        %v442 = vunpack.c.l.b16 %v362
        %v443 = vunpack.c.l.b16 %v363
        %v444 = vunpack.c.l.b16 %v364
        %v445 = vunpack.c.l.b16 %v365
        %v446 = vunpack.c.l.b16 %v366
        %v447 = vunpack.c.l.b16 %v367
        %v448 = vunpack.c.l.b16 %v368
        %v449 = vunpack.c.l.b16 %v369
        %v450 = vunpack.c.l.b16 %v370
        %v451 = vunpack.c.l.b16 %v371
        %v452 = vunpack.c.l.b16 %v372
        %v453 = vunpack.c.l.b16 %v373
        %v454 = vunpack.c.l.b16 %v374
        %v455 = vunpack.c.l.b16 %v375
        %v456 = vunpack.c.l.b16 %v376
        %v457 = vunpack.c.l.b16 %v377
        %v458 = vunpack.c.l.b16 %v378
        %v459 = vunpack.c.l.b16 %v379
        %v460 = vunpack.c.l.b16 %v380
        %v461 = vunpack.c.l.b16 %v381
        %v462 = vunpack.c.l.b16 %v382
        %v463 = vunpack.c.l.b16 %v383
        %v464 = vunpack.c.l.b16 %v384
        %v465 = vunpack.c.l.b16 %v385
        %v466 = vunpack.c.l.b16 %v386
        %v467 = vpack.c.b16 %v436, %v435
        %v468 = vpack.c.b16 %v438, %v437
        %v469 = vpack.c.b16 %v440, %v439
        %v470 = vpack.c.b16 %v442, %v441
        %v471 = vpack.c.b16 %v444, %v443
        %v472 = vpack.c.b16 %v446, %v445
        %v473 = vpack.c.b16 %v448, %v447
        %v474 = vpack.c.b16 %v450, %v449
        %v475 = vpack.c.b16 %v452, %v451
        %v476 = vpack.c.b16 %v454, %v453
        %v477 = vpack.c.b16 %v456, %v455
        %v478 = vpack.c.b16 %v458, %v457
        %v479 = vpack.c.b16 %v460, %v459
        %v480 = vpack.c.b16 %v462, %v461
        %v481 = vpack.c.b16 %v464, %v463
        %v482 = vpack.c.b16 %v466, %v465
        %v515 = vunpack.c.l.b16 %v387
        %v516 = vunpack.c.l.b16 %v388
        %v517 = vunpack.c.l.b16 %v389
        %v518 = vunpack.c.l.b16 %v390
        %v519 = vunpack.c.l.b16 %v391
        %v520 = vunpack.c.l.b16 %v392
        %v521 = vunpack.c.l.b16 %v393
        %v522 = vunpack.c.l.b16 %v394
        %v523 = vunpack.c.l.b16 %v395
        %v524 = vunpack.c.l.b16 %v396
        %v525 = vunpack.c.l.b16 %v397
        %v526 = vunpack.c.l.b16 %v398
        %v527 = vunpack.c.l.b16 %v399
        %v528 = vunpack.c.l.b16 %v400
        %v529 = vunpack.c.l.b16 %v401
        %v530 = vunpack.c.l.b16 %v402
        %v531 = vpack.c.b16 %v516, %v515
        %v532 = vpack.c.b16 %v518, %v517
        %v533 = vpack.c.b16 %v520, %v519
        %v534 = vpack.c.b16 %v522, %v521
        %v535 = vpack.c.b16 %v524, %v523
        %v536 = vpack.c.b16 %v526, %v525
        %v537 = vpack.c.b16 %v528, %v527
        %v538 = vpack.c.b16 %v530, %v529
        %547 = vmatprep.subr.bf16.mxu0 0
        %548 = vmatpush1.bf16.msra.mxu0 %v531
        %549 = vmatprep.subr.bf16.mxu0 0
        %550 = vmatpush1.bf16.msra.mxu0 %v532
        %551 = vmatprep.subr.bf16.mxu0 0
        %552 = vmatpush1.bf16.msra.mxu0 %v533
        %553 = vmatprep.subr.bf16.mxu0 0
        %554 = vmatpush1.bf16.msra.mxu0 %v534
        %555 = vmatprep.subr.bf16.mxu0 0
        %556 = vmatpush1.bf16.msra.mxu0 %v535
        %557 = vmatprep.subr.bf16.mxu0 0
        %558 = vmatpush1.bf16.msra.mxu0 %v536
        %559 = vmatprep.subr.bf16.mxu0 0
        %560 = vmatpush1.bf16.msra.mxu0 %v537
        %561 = vmatprep.subr.bf16.mxu0 0
        %562 = vmatpush1.bf16.msra.mxu0 %v538
        %563 = vmatprep.subr.bf16.mxu0 0
        %564 = vmatpush1.bf16.msra.mxu0 0
        %565 = vmatprep.subr.bf16.mxu0 0
        %566 = vmatpush1.bf16.msra.mxu0 0
        %567 = vmatprep.subr.bf16.mxu0 0
        %568 = vmatpush1.bf16.msra.mxu0 0
        %569 = vmatprep.subr.bf16.mxu0 0
        %570 = vmatpush1.bf16.msra.mxu0 0
        %571 = vmatprep.subr.bf16.mxu0 0
        %572 = vmatpush1.bf16.msra.mxu0 0
        %573 = vmatprep.subr.bf16.mxu0 0
        %574 = vmatpush1.bf16.msra.mxu0 0
        %575 = vmatprep.subr.bf16.mxu0 0
        %576 = vmatpush1.bf16.msra.mxu0 0
        %577 = vmatprep.subr.bf16.mxu0 0
        %578 = vmatpush1.bf16.msra.mxu0 0
        %579 = vmatprep.mubr.bf16.mxu0 0
        %580 = vmatmul.mubr.bf16.gmra.mrb[0].mxu0 %v467
        %v581 = vpop.f32.mrb[0].mxu0
        %v582 = vadd.f32 0.0, %v581
        %v583 = vpop.f32.mrb[0].mxu0
        %v584 = vpop.f32.mrb[0].mxu0
        %v585 = vadd.f32 0.0, %v584
        %v586 = vpop.f32.mrb[0].mxu0
        %587 = vmatprep.mubr.bf16.mxu0 0
        %588 = vmatmul.mubr.bf16.gmra.mrb[0].mxu0 %v468
        %v589 = vpop.f32.mrb[0].mxu0
        %v590 = vadd.f32 0.0, %v589
        %v591 = vpop.f32.mrb[0].mxu0
        %v592 = vpop.f32.mrb[0].mxu0
        %v593 = vadd.f32 0.0, %v592
        %v594 = vpop.f32.mrb[0].mxu0
        %595 = vmatprep.mubr.bf16.mxu0 0
        %596 = vmatmul.mubr.bf16.gmra.mrb[0].mxu0 %v469
        %v597 = vpop.f32.mrb[0].mxu0
        %v598 = vadd.f32 0.0, %v597
        %v599 = vpop.f32.mrb[0].mxu0
        %v600 = vpop.f32.mrb[0].mxu0
        %v601 = vadd.f32 0.0, %v600
        %v602 = vpop.f32.mrb[0].mxu0
        %603 = vmatprep.mubr.bf16.mxu0 0
        %604 = vmatmul.mubr.bf16.gmra.mrb[0].mxu0 %v470
        %v605 = vpop.f32.mrb[0].mxu0
        %v606 = vadd.f32 0.0, %v605
        %v607 = vpop.f32.mrb[0].mxu0
        %v608 = vpop.f32.mrb[0].mxu0
        %v609 = vadd.f32 0.0, %v608
        %v610 = vpop.f32.mrb[0].mxu0
        %611 = vmatprep.mubr.bf16.mxu0 0
        %612 = vmatmul.mubr.bf16.gmra.mrb[0].mxu0 %v471
        %v613 = vpop.f32.mrb[0].mxu0
        %v614 = vadd.f32 0.0, %v613
        %v615 = vpop.f32.mrb[0].mxu0
        %v616 = vpop.f32.mrb[0].mxu0
        %v617 = vadd.f32 0.0, %v616
        %v618 = vpop.f32.mrb[0].mxu0
        %619 = vmatprep.mubr.bf16.mxu0 0
        %620 = vmatmul.mubr.bf16.gmra.mrb[0].mxu0 %v472
        %v621 = vpop.f32.mrb[0].mxu0
        %v622 = vadd.f32 0.0, %v621
        %v623 = vpop.f32.mrb[0].mxu0
        %v624 = vpop.f32.mrb[0].mxu0
        %v625 = vadd.f32 0.0, %v624
        %v626 = vpop.f32.mrb[0].mxu0
        %627 = vmatprep.mubr.bf16.mxu0 0
        %628 = vmatmul.mubr.bf16.gmra.mrb[0].mxu0 %v473
        %v629 = vpop.f32.mrb[0].mxu0
        %v630 = vadd.f32 0.0, %v629
        %v631 = vpop.f32.mrb[0].mxu0
        %v632 = vpop.f32.mrb[0].mxu0
        %v633 = vadd.f32 0.0, %v632
        %v634 = vpop.f32.mrb[0].mxu0
        %635 = vmatprep.mubr.bf16.mxu0 0
        %636 = vmatmul.mubr.bf16.gmra.mrb[0].mxu0 %v474
        %v637 = vpop.f32.mrb[0].mxu0
        %v638 = vadd.f32 0.0, %v637
        %v639 = vpop.f32.mrb[0].mxu0
        %v640 = vpop.f32.mrb[0].mxu0
        %v641 = vadd.f32 0.0, %v640
        %v642 = vpop.f32.mrb[0].mxu0
        %643 = vmatprep.mubr.bf16.mxu0 0
        %644 = vmatmul.mubr.bf16.gmra.mrb[0].mxu0 %v475
        %v645 = vpop.f32.mrb[0].mxu0
        %v646 = vadd.f32 0.0, %v645
        %v647 = vpop.f32.mrb[0].mxu0
        %v648 = vpop.f32.mrb[0].mxu0
        %v649 = vadd.f32 0.0, %v648
        %v650 = vpop.f32.mrb[0].mxu0
        %651 = vmatprep.mubr.bf16.mxu0 0
        %652 = vmatmul.mubr.bf16.gmra.mrb[0].mxu0 %v476
        %v653 = vpop.f32.mrb[0].mxu0
        %v654 = vadd.f32 0.0, %v653
        %v655 = vpop.f32.mrb[0].mxu0
        %v656 = vpop.f32.mrb[0].mxu0
        %v657 = vadd.f32 0.0, %v656
        %v658 = vpop.f32.mrb[0].mxu0
        %659 = vmatprep.mubr.bf16.mxu0 0
        %660 = vmatmul.mubr.bf16.gmra.mrb[0].mxu0 %v477
        %v661 = vpop.f32.mrb[0].mxu0
        %v662 = vadd.f32 0.0, %v661
        %v663 = vpop.f32.mrb[0].mxu0
        %v664 = vpop.f32.mrb[0].mxu0
        %v665 = vadd.f32 0.0, %v664
        %v666 = vpop.f32.mrb[0].mxu0
        %667 = vmatprep.mubr.bf16.mxu0 0
        %668 = vmatmul.mubr.bf16.gmra.mrb[0].mxu0 %v478
        %v669 = vpop.f32.mrb[0].mxu0
        %v670 = vadd.f32 0.0, %v669
        %v671 = vpop.f32.mrb[0].mxu0
        %v672 = vpop.f32.mrb[0].mxu0
        %v673 = vadd.f32 0.0, %v672
        %v674 = vpop.f32.mrb[0].mxu0
        %675 = vmatprep.mubr.bf16.mxu0 0
        %676 = vmatmul.mubr.bf16.gmra.mrb[0].mxu0 %v479
        %v677 = vpop.f32.mrb[0].mxu0
        %v678 = vadd.f32 0.0, %v677
        %v679 = vpop.f32.mrb[0].mxu0
        %v680 = vpop.f32.mrb[0].mxu0
        %v681 = vadd.f32 0.0, %v680
        %v682 = vpop.f32.mrb[0].mxu0
        %683 = vmatprep.mubr.bf16.mxu0 0
        %684 = vmatmul.mubr.bf16.gmra.mrb[0].mxu0 %v480
        %v685 = vpop.f32.mrb[0].mxu0
        %v686 = vadd.f32 0.0, %v685
        %v687 = vpop.f32.mrb[0].mxu0
        %v688 = vpop.f32.mrb[0].mxu0
        %v689 = vadd.f32 0.0, %v688
        %v690 = vpop.f32.mrb[0].mxu0
        %691 = vmatprep.mubr.bf16.mxu0 0
        %692 = vmatmul.mubr.bf16.gmra.mrb[0].mxu0 %v481
        %v693 = vpop.f32.mrb[0].mxu0
        %v694 = vadd.f32 0.0, %v693
        %v695 = vpop.f32.mrb[0].mxu0
        %v696 = vpop.f32.mrb[0].mxu0
        %v697 = vadd.f32 0.0, %v696
        %v698 = vpop.f32.mrb[0].mxu0
        %699 = vmatprep.mubr.bf16.mxu0 0
        %700 = vmatmul.mubr.bf16.gmra.mrb[0].mxu0 %v482
        %v701 = vpop.f32.mrb[0].mxu0
        %v702 = vadd.f32 0.0, %v701
        %v703 = vpop.f32.mrb[0].mxu0
        %v704 = vpop.f32.mrb[0].mxu0
        %v705 = vadd.f32 0.0, %v704
        %v706 = vpop.f32.mrb[0].mxu0
        %707 = vdwg.mxu0
        %v708 = vadd.f32 %v323, %v582
        %v709 = vadd.f32 %v324, %v585
        %v710 = vadd.f32 %v325, %v590
        %v711 = vadd.f32 %v326, %v593
        %v712 = vadd.f32 %v327, %v598
        %v713 = vadd.f32 %v328, %v601
        %v714 = vadd.f32 %v329, %v606
        %v715 = vadd.f32 %v330, %v609
        %v716 = vadd.f32 %v331, %v614
        %v717 = vadd.f32 %v332, %v617
        %v718 = vadd.f32 %v333, %v622
        %v719 = vadd.f32 %v334, %v625
        %v720 = vadd.f32 %v335, %v630
        %v721 = vadd.f32 %v336, %v633
        %v722 = vadd.f32 %v337, %v638
        %v723 = vadd.f32 %v338, %v641
        %v724 = vadd.f32 %v339, %v646
        %v725 = vadd.f32 %v340, %v649
        %v726 = vadd.f32 %v341, %v654
        %v727 = vadd.f32 %v342, %v657
        %v728 = vadd.f32 %v343, %v662
        %v729 = vadd.f32 %v344, %v665
        %v730 = vadd.f32 %v345, %v670
        %v731 = vadd.f32 %v346, %v673
        %v732 = vadd.f32 %v347, %v678
        %v733 = vadd.f32 %v348, %v681
        %v734 = vadd.f32 %v349, %v686
        %v735 = vadd.f32 %v350, %v689
        %v736 = vadd.f32 %v351, %v694
        %v737 = vadd.f32 %v352, %v697
        %v738 = vadd.f32 %v353, %v702
        %v739 = vadd.f32 %v354, %v705
        %740 = vst [vmem:[#allocation2] sm:$0xff] %v708
        %741 = vst [vmem:[#allocation2 + $0x8] sm:$0xff] %v709
        %742 = vst [vmem:[#allocation2 + $0x10] sm:$0xff] %v710
        %743 = vst [vmem:[#allocation2 + $0x18] sm:$0xff] %v711
        %744 = vst [vmem:[#allocation2 + $0x20] sm:$0xff] %v712
        %745 = vst [vmem:[#allocation2 + $0x28] sm:$0xff] %v713
        %746 = vst [vmem:[#allocation2 + $0x30] sm:$0xff] %v714
        %747 = vst [vmem:[#allocation2 + $0x38] sm:$0xff] %v715
        %748 = vst [vmem:[#allocation2 + $0x40] sm:$0xff] %v716
        %749 = vst [vmem:[#allocation2 + $0x48] sm:$0xff] %v717
        %750 = vst [vmem:[#allocation2 + $0x50] sm:$0xff] %v718
        %751 = vst [vmem:[#allocation2 + $0x58] sm:$0xff] %v719
        %752 = vst [vmem:[#allocation2 + $0x60] sm:$0xff] %v720
        %753 = vst [vmem:[#allocation2 + $0x68] sm:$0xff] %v721
        %754 = vst [vmem:[#allocation2 + $0x70] sm:$0xff] %v722
        %755 = vst [vmem:[#allocation2 + $0x78] sm:$0xff] %v723
        %756 = vst [vmem:[#allocation2 + $0x80] sm:$0xff] %v724
        %757 = vst [vmem:[#allocation2 + $0x88] sm:$0xff] %v725
        %758 = vst [vmem:[#allocation2 + $0x90] sm:$0xff] %v726
        %759 = vst [vmem:[#allocation2 + $0x98] sm:$0xff] %v727
        %760 = vst [vmem:[#allocation2 + $0xa0] sm:$0xff] %v728
        %761 = vst [vmem:[#allocation2 + $0xa8] sm:$0xff] %v729
        %762 = vst [vmem:[#allocation2 + $0xb0] sm:$0xff] %v730
        %763 = vst [vmem:[#allocation2 + $0xb8] sm:$0xff] %v731
        %764 = vst [vmem:[#allocation2 + $0xc0] sm:$0xff] %v732
        %765 = vst [vmem:[#allocation2 + $0xc8] sm:$0xff] %v733
        %766 = vst [vmem:[#allocation2 + $0xd0] sm:$0xff] %v734
        %767 = vst [vmem:[#allocation2 + $0xd8] sm:$0xff] %v735
        %768 = vst [vmem:[#allocation2 + $0xe0] sm:$0xff] %v736
        %769 = vst [vmem:[#allocation2 + $0xe8] sm:$0xff] %v737
        %770 = vst [vmem:[#allocation2 + $0xf0] sm:$0xff] %v738
        %771 = vst [vmem:[#allocation2 + $0xf8] sm:$0xff] %v739
        // Predicated region
        $region37: #{inception_forward.20} parent=27 // pred_check
          %p772 = pneg %p281
        $region38: #{inception_forward.20} parent=27 // pred_check_branch
          %774 = sbr.rel (%p772) target = $region40
        $region39: #{inception_forward.20} parent=27 // pred_region
          %v775 = vld [vmem:[#allocation2] sm:$0xff]
          %v776 = vld [vmem:[#allocation2 + $0x8] sm:$0xff]
          %v777 = vld [vmem:[#allocation2 + $0x10] sm:$0xff]
          %v778 = vld [vmem:[#allocation2 + $0x18] sm:$0xff]
          %v779 = vld [vmem:[#allocation2 + $0x20] sm:$0xff]
          %v780 = vld [vmem:[#allocation2 + $0x28] sm:$0xff]
          %v781 = vld [vmem:[#allocation2 + $0x30] sm:$0xff]
          %v782 = vld [vmem:[#allocation2 + $0x38] sm:$0xff]
          %v783 = vld [vmem:[#allocation2 + $0x40] sm:$0xff]
          %v784 = vld [vmem:[#allocation2 + $0x48] sm:$0xff]
          %v785 = vld [vmem:[#allocation2 + $0x50] sm:$0xff]
          %v786 = vld [vmem:[#allocation2 + $0x58] sm:$0xff]
          %v787 = vld [vmem:[#allocation2 + $0x60] sm:$0xff]
          %v788 = vld [vmem:[#allocation2 + $0x68] sm:$0xff]
          %v789 = vld [vmem:[#allocation2 + $0x70] sm:$0xff]
          %v790 = vld [vmem:[#allocation2 + $0x78] sm:$0xff]
          %v791 = vld [vmem:[#allocation2 + $0x80] sm:$0xff]
          %v792 = vld [vmem:[#allocation2 + $0x88] sm:$0xff]
          %v793 = vld [vmem:[#allocation2 + $0x90] sm:$0xff]
          %v794 = vld [vmem:[#allocation2 + $0x98] sm:$0xff]
          %v795 = vld [vmem:[#allocation2 + $0xa0] sm:$0xff]
          %v796 = vld [vmem:[#allocation2 + $0xa8] sm:$0xff]
          %v797 = vld [vmem:[#allocation2 + $0xb0] sm:$0xff]
          %v798 = vld [vmem:[#allocation2 + $0xb8] sm:$0xff]
          %v799 = vld [vmem:[#allocation2 + $0xc0] sm:$0xff]
          %v800 = vld [vmem:[#allocation2 + $0xc8] sm:$0xff]
          %v801 = vld [vmem:[#allocation2 + $0xd0] sm:$0xff]
          %v802 = vld [vmem:[#allocation2 + $0xd8] sm:$0xff]
          %v803 = vld [vmem:[#allocation2 + $0xe0] sm:$0xff]
          %v804 = vld [vmem:[#allocation2 + $0xe8] sm:$0xff]
          %v805 = vld [vmem:[#allocation2 + $0xf0] sm:$0xff]
          %v806 = vld [vmem:[#allocation2 + $0xf8] sm:$0xff]
          %807 = vst [vmem:[%s277] sm:$0xff] %v775
          %808 = vst [vmem:[%s277 + $0x8] sm:$0xff] %v776
          %809 = vst [vmem:[%s277 + $0x10] sm:$0xff] %v777
          %810 = vst [vmem:[%s277 + $0x18] sm:$0xff] %v778
          %811 = vst [vmem:[%s277 + $0x20] sm:$0xff] %v779
          %812 = vst [vmem:[%s277 + $0x28] sm:$0xff] %v780
          %813 = vst [vmem:[%s277 + $0x30] sm:$0xff] %v781
          %814 = vst [vmem:[%s277 + $0x38] sm:$0xff] %v782
          %815 = vst [vmem:[%s277 + $0x40] sm:$0xff] %v783
          %816 = vst [vmem:[%s277 + $0x48] sm:$0xff] %v784
          %817 = vst [vmem:[%s277 + $0x50] sm:$0xff] %v785
          %818 = vst [vmem:[%s277 + $0x58] sm:$0xff] %v786
          %819 = vst [vmem:[%s277 + $0x60] sm:$0xff] %v787
          %820 = vst [vmem:[%s277 + $0x68] sm:$0xff] %v788
          %821 = vst [vmem:[%s277 + $0x70] sm:$0xff] %v789
          %822 = vst [vmem:[%s277 + $0x78] sm:$0xff] %v790
          %823 = vst [vmem:[%s277 + $0x80] sm:$0xff] %v791
          %824 = vst [vmem:[%s277 + $0x88] sm:$0xff] %v792
          %825 = vst [vmem:[%s277 + $0x90] sm:$0xff] %v793
          %826 = vst [vmem:[%s277 + $0x98] sm:$0xff] %v794
          %827 = vst [vmem:[%s277 + $0xa0] sm:$0xff] %v795
          %828 = vst [vmem:[%s277 + $0xa8] sm:$0xff] %v796
          %829 = vst [vmem:[%s277 + $0xb0] sm:$0xff] %v797
          %830 = vst [vmem:[%s277 + $0xb8] sm:$0xff] %v798
          %831 = vst [vmem:[%s277 + $0xc0] sm:$0xff] %v799
          %832 = vst [vmem:[%s277 + $0xc8] sm:$0xff] %v800
          %833 = vst [vmem:[%s277 + $0xd0] sm:$0xff] %v801
          %834 = vst [vmem:[%s277 + $0xd8] sm:$0xff] %v802
          %835 = vst [vmem:[%s277 + $0xe0] sm:$0xff] %v803
          %836 = vst [vmem:[%s277 + $0xe8] sm:$0xff] %v804
          %837 = vst [vmem:[%s277 + $0xf0] sm:$0xff] %v805
          %838 = vst [vmem:[%s277 + $0xf8] sm:$0xff] %v806
          %v839 = vld [vmem:[#allocation3] sm:$0x1]
          %v840 = vadd.f32 %v775, %v776
          %v841 = vadd.f32 %v840, %v777
          %v842 = vadd.f32 %v841, %v778
          %v843 = vadd.f32 %v842, %v779
          %v844 = vadd.f32 %v843, %v780
          %v845 = vadd.f32 %v844, %v781
          %v846 = vadd.f32 %v845, %v782
          %v847 = vadd.f32 %v846, %v783
          %v848 = vadd.f32 %v847, %v784
          %v849 = vadd.f32 %v848, %v785
          %v850 = vadd.f32 %v849, %v786
          %v851 = vadd.f32 %v850, %v787
          %v852 = vadd.f32 %v851, %v788
          %v853 = vadd.f32 %v852, %v789
          %v854 = vadd.f32 %v853, %v790
          %v855 = vadd.f32 %v854, %v791
          %v856 = vadd.f32 %v855, %v792
          %v857 = vadd.f32 %v856, %v793
          %v858 = vadd.f32 %v857, %v794
          %v859 = vadd.f32 %v858, %v795
          %v860 = vadd.f32 %v859, %v796
          %v861 = vadd.f32 %v860, %v797
          %v862 = vadd.f32 %v861, %v798
          %v863 = vadd.f32 %v862, %v799
          %v864 = vadd.f32 %v863, %v800
          %v865 = vadd.f32 %v864, %v801
          %v866 = vadd.f32 %v865, %v802
          %v867 = vadd.f32 %v866, %v803
          %v868 = vadd.f32 %v867, %v804
          %v869 = vadd.f32 %v868, %v805
          %v870 = vadd.f32 %v869, %v806
          %v871 = vrot.slane %v870, 4
          %v872 = vadd.f32 %v870, %v871
          %v873 = vrot.slane %v872, 2
          %v874 = vadd.f32 %v872, %v873
          %v875 = vrot.slane %v874, 1
          %v876 = vadd.f32 %v874, %v875
          %v877 = vadd.f32 %v839, %v876
          %878 = vst [vmem:[#allocation3] sm:$0x1] %v877
          %v879 = vld [vmem:[#allocation5] sm:$0x1]
          %v880 = vmul.f32 %v775, %v775
          %v881 = vmul.f32 %v776, %v776
          %v882 = vmul.f32 %v777, %v777
          %v883 = vmul.f32 %v778, %v778
          %v884 = vmul.f32 %v779, %v779
          %v885 = vmul.f32 %v780, %v780
          %v886 = vmul.f32 %v781, %v781
          %v887 = vmul.f32 %v782, %v782
          %v888 = vmul.f32 %v783, %v783
          %v889 = vmul.f32 %v784, %v784
          %v890 = vmul.f32 %v785, %v785
          %v891 = vmul.f32 %v786, %v786
          %v892 = vmul.f32 %v787, %v787
          %v893 = vmul.f32 %v788, %v788
          %v894 = vmul.f32 %v789, %v789
          %v895 = vmul.f32 %v790, %v790
          %v896 = vmul.f32 %v791, %v791
          %v897 = vmul.f32 %v792, %v792
          %v898 = vmul.f32 %v793, %v793
          %v899 = vmul.f32 %v794, %v794
          %v900 = vmul.f32 %v795, %v795
          %v901 = vmul.f32 %v796, %v796
          %v902 = vmul.f32 %v797, %v797
          %v903 = vmul.f32 %v798, %v798
          %v904 = vmul.f32 %v799, %v799
          %v905 = vmul.f32 %v800, %v800
          %v906 = vmul.f32 %v801, %v801
          %v907 = vmul.f32 %v802, %v802
          %v908 = vmul.f32 %v803, %v803
          %v909 = vmul.f32 %v804, %v804
          %v910 = vmul.f32 %v805, %v805
          %v911 = vmul.f32 %v806, %v806
          %v912 = vadd.f32 %v880, %v881
          %v913 = vadd.f32 %v912, %v882
          %v914 = vadd.f32 %v913, %v883
          %v915 = vadd.f32 %v914, %v884
          %v916 = vadd.f32 %v915, %v885
          %v917 = vadd.f32 %v916, %v886
          %v918 = vadd.f32 %v917, %v887
          %v919 = vadd.f32 %v918, %v888
          %v920 = vadd.f32 %v919, %v889
          %v921 = vadd.f32 %v920, %v890
          %v922 = vadd.f32 %v921, %v891
          %v923 = vadd.f32 %v922, %v892
          %v924 = vadd.f32 %v923, %v893
          %v925 = vadd.f32 %v924, %v894
          %v926 = vadd.f32 %v925, %v895
          %v927 = vadd.f32 %v926, %v896
          %v928 = vadd.f32 %v927, %v897
          %v929 = vadd.f32 %v928, %v898
          %v930 = vadd.f32 %v929, %v899
          %v931 = vadd.f32 %v930, %v900
          %v932 = vadd.f32 %v931, %v901
          %v933 = vadd.f32 %v932, %v902
          %v934 = vadd.f32 %v933, %v903
          %v935 = vadd.f32 %v934, %v904
          %v936 = vadd.f32 %v935, %v905
          %v937 = vadd.f32 %v936, %v906
          %v938 = vadd.f32 %v937, %v907
          %v939 = vadd.f32 %v938, %v908
          %v940 = vadd.f32 %v939, %v909
          %v941 = vadd.f32 %v940, %v910
          %v942 = vadd.f32 %v941, %v911
          %v943 = vrot.slane %v942, 4
          %v944 = vadd.f32 %v942, %v943
          %v945 = vrot.slane %v944, 2
          %v946 = vadd.f32 %v944, %v945
          %v947 = vrot.slane %v946, 1
          %v948 = vadd.f32 %v946, %v947
          %v949 = vadd.f32 %v879, %v948
          %950 = vst [vmem:[#allocation5] sm:$0x1] %v949
        $region40: #{inception_forward.20} parent=27 // pred_fallthru
          _
        %s951 = smul.u32 32, %s24
        %p952 = scmp.lt.s32.totalorder %s951, 63
        %s953 = scalar_select %p952, %s951, 63
        %p954 = scmp.lt.s32.totalorder %s23, 0
        %s955 = scalar_select %p954, %s23, 0
        %s956 = sadd.s32 %s955, %s953
        %s957 = smul.addr %s956, 8
        %s958 = scalar_lea.vmem %s2, %s957
        // Predicated region
        $region41: #{inception_forward.20} parent=27 // pred_check
          %p959 = pneg %p113
        $region42: #{inception_forward.20} parent=27 // pred_check_branch
          %961 = sbr.rel (%p959) target = $region44
        $region43: #{inception_forward.20} parent=27 // pred_region
          %s962 = smul.u32 32, %s24
        $region44: #{inception_forward.20} parent=27 // pred_fallthru
          _
        // Predicated region
        $region45: #{inception_forward.20} parent=27 // pred_check
          %p963 = pneg %p139
        $region46: #{inception_forward.20} parent=27 // pred_check_branch
          %965 = sbr.rel (%p963) target = $region48
        $region47: #{inception_forward.20} parent=27 // pred_region
          %s967 = ssub.s32 16, 16
          %968 = vsyncadd [#allocation4], %s967
          %s969 = smul.addr %s23, 16
          %s970 = scalar_lea.hbm %s3, %s969
          %s972 = sshll.u32 [#allocation3], 4
          %s973 = int_to_ptr.vmem [resolvable:$true] %s972
          %975 = dma.vmem_to_hbm [thread:$0]  %s973, 16, %s970, [#allocation4]
        $region48: #{inception_forward.20} parent=27 // pred_fallthru
          _
        // Predicated region
        $region49: #{inception_forward.20} parent=27 // pred_check
          %p976 = pneg %p165
        $region50: #{inception_forward.20} parent=27 // pred_check_branch
          %978 = sbr.rel (%p976) target = $region52
        $region51: #{inception_forward.20} parent=27 // pred_region
          %s980 = ssub.s32 16, 16
          %981 = vsyncadd [#allocation6], %s980
          %s982 = smul.addr %s23, 16
          %s983 = scalar_lea.hbm %s4, %s982
          %s985 = sshll.u32 [#allocation5], 4
          %s986 = int_to_ptr.vmem [resolvable:$true] %s985
          %988 = dma.vmem_to_hbm [thread:$0]  %s986, 16, %s983, [#allocation6]
        $region52: #{inception_forward.20} parent=27 // pred_fallthru
          _
        // Predicated region
        $region53: #{inception_forward.20} parent=27 // pred_check
          %p989 = pneg %p139
        $region54: #{inception_forward.20} parent=27 // pred_check_branch
          %991 = sbr.rel (%p989) target = $region56
        $region55: #{inception_forward.20} parent=27 // pred_region
          %992 = dma.done [#allocation4], 16
        $region56: #{inception_forward.20} parent=27 // pred_fallthru
          _
        // Predicated region
        $region57: #{inception_forward.20} parent=27 // pred_check
          %p993 = pneg %p165
        $region58: #{inception_forward.20} parent=27 // pred_check_branch
          %995 = sbr.rel (%p993) target = $region60
        $region59: #{inception_forward.20} parent=27 // pred_region
          %996 = dma.done [#allocation6], 16
        $region60: #{inception_forward.20} parent=27 // pred_fallthru
          _
      $region28: #{inception_forward.20} parent=5 // pred_fallthru
        _
      %p997 = scmp.le.s32.totalorder 2, %s13
      // Predicated region
      $region61: #{inception_forward.20} parent=5 // pred_check
        %p998 = pneg %p997
      $region62: #{inception_forward.20} parent=5 // pred_check_branch
        %1000 = sbr.rel (%p998) target = $region64
      $region63: #{inception_forward.20} parent=5 // pred_region
        %s1001 = ssub.s32 %s13, 2
        // Predicated region
        $region65: #{inception_forward.20} parent=63 // pred_check
          %p1002 = pneg %p119
        $region66: #{inception_forward.20} parent=63 // pred_check_branch
          %1004 = sbr.rel (%p1002) target = $region68
        $region67: #{inception_forward.20} parent=63 // pred_region
          %s1005 = smul.u32 32, %s27
          %p1006 = scmp.lt.s32.totalorder %s1005, 63
          %s1007 = scalar_select %p1006, %s1005, 63
          %p1008 = scmp.lt.s32.totalorder %s26, 0
          %s1009 = scalar_select %p1008, %s26, 0
          %s1010 = sadd.s32 %s1009, %s1007
          %s1011 = smul.addr %s1010, 8
          %s1012 = scalar_lea.vmem %s2, %s1011
        $region68: #{inception_forward.20} parent=63 // pred_fallthru
          _
      $region64: #{inception_forward.20} parent=5 // pred_fallthru
        _
    $region6: #{inception_forward.20} parent=1 // loop_footer
      %s17 = sadd.s32 1, %s13
    $region7: #{inception_forward.20} parent=1 // loop_footer_branch
      %12 = sbr.rel target = $region3
    $region8: #{inception_forward.20} parent=1 // loop_exit
      _
    %1013 = vsyncpa [#allocation4], 1
    %s1014 = scalar_lea.sflag [#allocation4], 1
    %1015 = vsyncpa %s1014, 1
    %1016 = vsyncpa [#allocation6], 1

// kernel: inception_forward.21
$region0: #{inception_forward.21}
  #allocation0 [shape = 'u32[]', space=smem, size = 0x4, offset = 0x4, fixed_abs, tag = 'smem constant byte address 0x4 - core index']
  #allocation1 [shape = 'u32[144,128]{1,0:T(1,128)}', space=vmem, size = 0x12000, scoped, tag = 'internal scratch']
  %s0 = inlined_call_operand.vmem [shape: f32[512,128], index: 0, kind: input, shape index: {}]
  %s1 = inlined_call_operand.vmem [shape: f32[1,128], index: 1, kind: input, shape index: {}]
  %s2 = inlined_call_operand.vmem [shape: f32[1,128], index: 2, kind: input, shape index: {}]
  %s3 = inlined_call_operand.vmem [shape: f32[512,128], index: 3, kind: output, shape index: {}]
  %s4 = sld [smem:[#allocation0]]
  $region45: #{inception_forward.21} parent=0
    _
  %s6 = ssub.s32 1, %s4
  %s7 = scalar_select 0, %s6, %s4
  loop: start=0, step=1, limit=4
  $region2: #{inception_forward.21} parent=0 // loop_pre_header
    _
  $region3: #{inception_forward.21} parent=0 // loop_header
    %s9 = sphi 0, %s13
    %p10 = scmp.ge.s32.totalorder %s9, 4
    %s16 = sphi 0, %s28
    %s17 = sphi 0, %s24
    %s18 = sphi 0, %s16
    %s19 = sphi 0, %s17
    %s20 = sphi 0, %s18
    %s21 = sphi 0, %s19
    %s33 = sphi 0, %s35
    %s36 = sphi 0, %s33
    %s37 = sphi 0, %s36
    %s53 = sphi 0, %s37
    %s59 = sphi 0, %s61
    %s62 = sphi 0, %s59
    %s63 = sphi 0, %s62
    %s79 = sphi 0, %s63
    %s85 = sphi 0, %s87
    %s88 = sphi 0, %s85
    %s89 = sphi 0, %s88
    %s105 = sphi 0, %s89
    %s113 = sphi 0, %s115
    %s116 = sphi 0, %s113
    %s117 = sphi 0, %s116
    %s133 = sphi 0, %s117
  $region4: #{inception_forward.21} parent=0 // loop_header_branch
    %12 = sbr.rel (%p10) target = $region8
  $region5: #{inception_forward.21} parent=0 // loop_body
    %s14 = ssub.s32 %s9, 1
    %s15 = ssub.s32 %s9, 2
    %s22 = sadd.s32 1, %s17
    %p23 = scmp.ge.s32.totalorder %s22, 1
    %s24 = scalar_select %p23, 0, %s22
    %s25 = sadd.s32 1, %s16
    %s26 = scalar_select %p23, %s25, %s16
    %p27 = scmp.ge.s32.totalorder %s26, 2
    %s28 = scalar_select %p27, 0, %s26
    %s29 = ssub.s32 %s16, %s28
    %s30 = ssub.s32 %s17, %s24
    %s31 = sor.u32 %s29, %s30
    %p32 = scmp.eq.s32.totalorder %s31, 0
    %s34 = sadd.s32 %s33, 1
    %s35 = scalar_select %p32, %s33, %s34
    %p38 = pneg %p32
    %p39 = scmp.eq.s32.totalorder %s9, 1
    %p40 = por %p38, %p39
    %p41 = scmp.ne.s32.totalorder %s33, %s36
    %p42 = scmp.eq.s32.totalorder %s9, 0
    %p43 = por %p41, %p42
    %p44 = scmp.ne.s32.totalorder %s33, %s36
    %p45 = scmp.eq.s32.totalorder %s14, 1
    %p46 = por %p44, %p45
    %p47 = scmp.ne.s32.totalorder %s36, %s37
    %p48 = scmp.eq.s32.totalorder %s14, 0
    %p49 = por %p47, %p48
    %p50 = scmp.ne.s32.totalorder %s36, %s37
    %p51 = scmp.eq.s32.totalorder %s15, 1
    %p52 = por %p50, %p51
    %p54 = scmp.ne.s32.totalorder %s37, %s53
    %p55 = scmp.eq.s32.totalorder %s15, 0
    %p56 = por %p54, %p55
    %s57 = ssub.s32 %s17, %s24
    %p58 = scmp.eq.s32.totalorder %s57, 0
    %s60 = sadd.s32 %s59, 1
    %s61 = scalar_select %p58, %s59, %s60
    %p64 = pneg %p58
    %p65 = scmp.eq.s32.totalorder %s9, 1
    %p66 = por %p64, %p65
    %p67 = scmp.ne.s32.totalorder %s59, %s62
    %p68 = scmp.eq.s32.totalorder %s9, 0
    %p69 = por %p67, %p68
    %p70 = scmp.ne.s32.totalorder %s59, %s62
    %p71 = scmp.eq.s32.totalorder %s14, 1
    %p72 = por %p70, %p71
    %p73 = scmp.ne.s32.totalorder %s62, %s63
    %p74 = scmp.eq.s32.totalorder %s14, 0
    %p75 = por %p73, %p74
    %p76 = scmp.ne.s32.totalorder %s62, %s63
    %p77 = scmp.eq.s32.totalorder %s15, 1
    %p78 = por %p76, %p77
    %p80 = scmp.ne.s32.totalorder %s63, %s79
    %p81 = scmp.eq.s32.totalorder %s15, 0
    %p82 = por %p80, %p81
    %s83 = ssub.s32 %s17, %s24
    %p84 = scmp.eq.s32.totalorder %s83, 0
    %s86 = sadd.s32 %s85, 1
    %s87 = scalar_select %p84, %s85, %s86
    %p90 = pneg %p84
    %p91 = scmp.eq.s32.totalorder %s9, 1
    %p92 = por %p90, %p91
    %p93 = scmp.ne.s32.totalorder %s85, %s88
    %p94 = scmp.eq.s32.totalorder %s9, 0
    %p95 = por %p93, %p94
    %p96 = scmp.ne.s32.totalorder %s85, %s88
    %p97 = scmp.eq.s32.totalorder %s14, 1
    %p98 = por %p96, %p97
    %p99 = scmp.ne.s32.totalorder %s88, %s89
    %p100 = scmp.eq.s32.totalorder %s14, 0
    %p101 = por %p99, %p100
    %p102 = scmp.ne.s32.totalorder %s88, %s89
    %p103 = scmp.eq.s32.totalorder %s15, 1
    %p104 = por %p102, %p103
    %p106 = scmp.ne.s32.totalorder %s89, %s105
    %p107 = scmp.eq.s32.totalorder %s15, 0
    %p108 = por %p106, %p107
    %s109 = ssub.s32 %s16, %s28
    %s110 = ssub.s32 %s17, %s24
    %s111 = sor.u32 %s109, %s110
    %p112 = scmp.eq.s32.totalorder %s111, 0
    %s114 = sadd.s32 %s113, 1
    %s115 = scalar_select %p112, %s113, %s114
    %p118 = pneg %p112
    %p119 = scmp.eq.s32.totalorder %s9, 1
    %p120 = por %p118, %p119
    %p121 = scmp.ne.s32.totalorder %s113, %s116
    %p122 = scmp.eq.s32.totalorder %s9, 0
    %p123 = por %p121, %p122
    %p124 = scmp.ne.s32.totalorder %s113, %s116
    %p125 = scmp.eq.s32.totalorder %s14, 1
    %p126 = por %p124, %p125
    %p127 = scmp.ne.s32.totalorder %s116, %s117
    %p128 = scmp.eq.s32.totalorder %s14, 0
    %p129 = por %p127, %p128
    %p130 = scmp.ne.s32.totalorder %s116, %s117
    %p131 = scmp.eq.s32.totalorder %s15, 1
    %p132 = por %p130, %p131
    %p134 = scmp.ne.s32.totalorder %s117, %s133
    %p135 = scmp.eq.s32.totalorder %s15, 0
    %p136 = por %p134, %p135
    %p137 = scmp.le.s32.totalorder 1, %s9
    %p138 = scmp.lt.s32.totalorder %s9, 3
    %p139 = pnand %p137, %p138
    %p140 = pneg %p139
    // Predicated region
    $region9: #{inception_forward.21} parent=5 // pred_check
      _
    $region10: #{inception_forward.21} parent=5 // pred_check_branch
      %142 = sbr.rel (%p139) target = $region12
    $region11: #{inception_forward.21} parent=5 // pred_region
      %s143 = ssub.s32 %s9, 1
      // Predicated region
      $region13: #{inception_forward.21} parent=11 // pred_check
        %p144 = pneg %p75
      $region14: #{inception_forward.21} parent=11 // pred_check_branch
        %146 = sbr.rel (%p144) target = $region16
      $region15: #{inception_forward.21} parent=11 // pred_region
        %p147 = scmp.lt.s32.totalorder %s19, 0
        %s148 = scalar_select %p147, %s19, 0
        %s149 = scalar_lea.vmem %s1, %s148
      $region16: #{inception_forward.21} parent=11 // pred_fallthru
        _
      // Predicated region
      $region17: #{inception_forward.21} parent=11 // pred_check
        %p150 = pneg %p101
      $region18: #{inception_forward.21} parent=11 // pred_check_branch
        %152 = sbr.rel (%p150) target = $region20
      $region19: #{inception_forward.21} parent=11 // pred_region
        %p153 = scmp.lt.s32.totalorder %s19, 0
        %s154 = scalar_select %p153, %s19, 0
        %s155 = scalar_lea.vmem %s2, %s154
      $region20: #{inception_forward.21} parent=11 // pred_fallthru
        _
    $region12: #{inception_forward.21} parent=5 // pred_fallthru
      _
    %p156 = scmp.lt.s32.totalorder %s9, 2
    // Predicated region
    $region21: #{inception_forward.21} parent=5 // pred_check
      %p157 = pneg %p156
    $region22: #{inception_forward.21} parent=5 // pred_check_branch
      %159 = sbr.rel (%p157) target = $region24
    $region23: #{inception_forward.21} parent=5 // pred_region
      // Predicated region
      $region25: #{inception_forward.21} parent=23 // pred_check
        %p160 = pneg %p43
      $region26: #{inception_forward.21} parent=23 // pred_check_branch
        %162 = sbr.rel (%p160) target = $region28
      $region27: #{inception_forward.21} parent=23 // pred_region
        %s163 = smul.u32 32, %s16
        %p164 = scmp.lt.s32.totalorder %s163, 63
        %s165 = scalar_select %p164, %s163, 63
        %p166 = scmp.lt.s32.totalorder %s17, 0
        %s167 = scalar_select %p166, %s17, 0
        %s168 = sadd.s32 %s167, %s165
        %s169 = smul.addr %s168, 8
        %s170 = scalar_lea.vmem %s0, %s169
        %s171 = smul.u32 32, %s16
      $region28: #{inception_forward.21} parent=23 // pred_fallthru
        _
    $region24: #{inception_forward.21} parent=5 // pred_fallthru
      _
    %p172 = scmp.le.s32.totalorder 1, %s9
    %p173 = scmp.lt.s32.totalorder %s9, 3
    %p174 = pnand %p172, %p173
    %p175 = pneg %p174
    // Predicated region
    $region29: #{inception_forward.21} parent=5 // pred_check
      _
    $region30: #{inception_forward.21} parent=5 // pred_check_branch
      %177 = sbr.rel (%p174) target = $region32
    $region31: #{inception_forward.21} parent=5 // pred_region
      %s178 = ssub.s32 %s9, 1
      %s179 = smul.u32 32, %s18
      %p180 = scmp.lt.s32.totalorder %s179, 63
      %s181 = scalar_select %p180, %s179, 63
      %p182 = scmp.lt.s32.totalorder %s19, 0
      %s183 = scalar_select %p182, %s19, 0
      %s184 = sadd.s32 %s183, %s181
      %s185 = smul.addr %s184, 8
      %s186 = scalar_lea.vmem %s0, %s185
      %p187 = pneg %p49
      %p188 = pneg %p46
      %p189 = scmp.lt.s32.totalorder %s19, 0
      %s190 = scalar_select %p189, %s19, 0
      %s191 = scalar_lea.vmem %s1, %s190
      %p192 = pneg %p75
      %p193 = pneg %p72
      %p194 = scmp.lt.s32.totalorder %s19, 0
      %s195 = scalar_select %p194, %s19, 0
      %s196 = scalar_lea.vmem %s2, %s195
      %p197 = pneg %p101
      %p198 = pneg %p98
      %p199 = pneg %p129
      %p200 = pneg %p126
      %s201 = smul.u32 32, %s18
      %p202 = scmp.lt.s32.totalorder %s201, 63
      %s203 = scalar_select %p202, %s201, 63
      %p204 = scmp.lt.s32.totalorder %s19, 0
      %s205 = scalar_select %p204, %s19, 0
      %s206 = sadd.s32 %s205, %s203
      %s207 = smul.addr %s206, 8
      %s208 = scalar_lea.vmem %s3, %s207
      %s209 = smul.u32 32, %s18
      %p210 = scmp.lt.s32.totalorder %s209, 63
      %s211 = scalar_select %p210, %s209, 63
      %p212 = scmp.lt.s32.totalorder %s19, 0
      %s213 = scalar_select %p212, %s19, 0
      %s214 = sadd.s32 %s213, %s211
      %s215 = smul.addr %s214, 8
      %s216 = scalar_lea.vmem %s0, %s215
      %s217 = smul.u32 32, %s18
      %p218 = scmp.lt.s32.totalorder %s19, 0
      %s219 = scalar_select %p218, %s19, 0
      %s220 = scalar_lea.vmem %s1, %s219
      %p221 = scmp.lt.s32.totalorder %s19, 0
      %s222 = scalar_select %p221, %s19, 0
      %s223 = scalar_lea.vmem %s2, %s222
      %s224 = smul.u32 32, %s18
      %p225 = scmp.lt.s32.totalorder %s224, 63
      %s226 = scalar_select %p225, %s224, 63
      %p227 = scmp.lt.s32.totalorder %s19, 0
      %s228 = scalar_select %p227, %s19, 0
      %s229 = sadd.s32 %s228, %s226
      %s230 = smul.addr %s229, 8
      %s231 = scalar_lea.vmem %s3, %s230
      %s232 = smul.u32 32, %s18
      %v233 = vld [vmem:[%s216] sm:$0xff]
      %v234 = vld [vmem:[%s216 + $0x8] sm:$0xff]
      %v235 = vld [vmem:[%s216 + $0x10] sm:$0xff]
      %v236 = vld [vmem:[%s216 + $0x18] sm:$0xff]
      %v237 = vld [vmem:[%s216 + $0x20] sm:$0xff]
      %v238 = vld [vmem:[%s216 + $0x28] sm:$0xff]
      %v239 = vld [vmem:[%s216 + $0x30] sm:$0xff]
      %v240 = vld [vmem:[%s216 + $0x38] sm:$0xff]
      %v241 = vld [vmem:[%s216 + $0x40] sm:$0xff]
      %v242 = vld [vmem:[%s216 + $0x48] sm:$0xff]
      %v243 = vld [vmem:[%s216 + $0x50] sm:$0xff]
      %v244 = vld [vmem:[%s216 + $0x58] sm:$0xff]
      %v245 = vld [vmem:[%s216 + $0x60] sm:$0xff]
      %v246 = vld [vmem:[%s216 + $0x68] sm:$0xff]
      %v247 = vld [vmem:[%s216 + $0x70] sm:$0xff]
      %v248 = vld [vmem:[%s216 + $0x78] sm:$0xff]
      %v249 = vld [vmem:[%s216 + $0x80] sm:$0xff]
      %v250 = vld [vmem:[%s216 + $0x88] sm:$0xff]
      %v251 = vld [vmem:[%s216 + $0x90] sm:$0xff]
      %v252 = vld [vmem:[%s216 + $0x98] sm:$0xff]
      %v253 = vld [vmem:[%s216 + $0xa0] sm:$0xff]
      %v254 = vld [vmem:[%s216 + $0xa8] sm:$0xff]
      %v255 = vld [vmem:[%s216 + $0xb0] sm:$0xff]
      %v256 = vld [vmem:[%s216 + $0xb8] sm:$0xff]
      %v257 = vld [vmem:[%s216 + $0xc0] sm:$0xff]
      %v258 = vld [vmem:[%s216 + $0xc8] sm:$0xff]
      %v259 = vld [vmem:[%s216 + $0xd0] sm:$0xff]
      %v260 = vld [vmem:[%s216 + $0xd8] sm:$0xff]
      %v261 = vld [vmem:[%s216 + $0xe0] sm:$0xff]
      %v262 = vld [vmem:[%s216 + $0xe8] sm:$0xff]
      %v263 = vld [vmem:[%s216 + $0xf0] sm:$0xff]
      %v264 = vld [vmem:[%s216 + $0xf8] sm:$0xff]
      %v265 = vld [vmem:[%s220] sm:$0x1]
      %v267 = vlaneseq
      %v268 = vshrl.u32 %v267, 7
      %v269 = vsub.s32 0, %v268
      %v270 = vrot.slane %v265, %v269
      %v272 = vmul.f32 %v233, %v270
      %v273 = vmul.f32 %v234, %v270
      %v274 = vmul.f32 %v235, %v270
      %v275 = vmul.f32 %v236, %v270
      %v276 = vmul.f32 %v237, %v270
      %v277 = vmul.f32 %v238, %v270
      %v278 = vmul.f32 %v239, %v270
      %v279 = vmul.f32 %v240, %v270
      %v280 = vmul.f32 %v241, %v270
      %v281 = vmul.f32 %v242, %v270
      %v282 = vmul.f32 %v243, %v270
      %v283 = vmul.f32 %v244, %v270
      %v284 = vmul.f32 %v245, %v270
      %v285 = vmul.f32 %v246, %v270
      %v286 = vmul.f32 %v247, %v270
      %v287 = vmul.f32 %v248, %v270
      %v288 = vmul.f32 %v249, %v270
      %v289 = vmul.f32 %v250, %v270
      %v290 = vmul.f32 %v251, %v270
      %v291 = vmul.f32 %v252, %v270
      %v292 = vmul.f32 %v253, %v270
      %v293 = vmul.f32 %v254, %v270
      %v294 = vmul.f32 %v255, %v270
      %v295 = vmul.f32 %v256, %v270
      %v296 = vmul.f32 %v257, %v270
      %v297 = vmul.f32 %v258, %v270
      %v298 = vmul.f32 %v259, %v270
      %v299 = vmul.f32 %v260, %v270
      %v300 = vmul.f32 %v261, %v270
      %v301 = vmul.f32 %v262, %v270
      %v302 = vmul.f32 %v263, %v270
      %v303 = vmul.f32 %v264, %v270
      %v304 = vld [vmem:[%s223] sm:$0x1]
      %v306 = vlaneseq
      %v307 = vshrl.u32 %v306, 7
      %v308 = vsub.s32 0, %v307
      %v309 = vrot.slane %v304, %v308
      %v311 = vadd.f32 %v272, %v309
      %v312 = vadd.f32 %v273, %v309
      %v313 = vadd.f32 %v274, %v309
      %v314 = vadd.f32 %v275, %v309
      %v315 = vadd.f32 %v276, %v309
      %v316 = vadd.f32 %v277, %v309
      %v317 = vadd.f32 %v278, %v309
      %v318 = vadd.f32 %v279, %v309
      %v319 = vadd.f32 %v280, %v309
      %v320 = vadd.f32 %v281, %v309
      %v321 = vadd.f32 %v282, %v309
      %v322 = vadd.f32 %v283, %v309
      %v323 = vadd.f32 %v284, %v309
      %v324 = vadd.f32 %v285, %v309
      %v325 = vadd.f32 %v286, %v309
      %v326 = vadd.f32 %v287, %v309
      %v327 = vadd.f32 %v288, %v309
      %v328 = vadd.f32 %v289, %v309
      %v329 = vadd.f32 %v290, %v309
      %v330 = vadd.f32 %v291, %v309
      %v331 = vadd.f32 %v292, %v309
      %v332 = vadd.f32 %v293, %v309
      %v333 = vadd.f32 %v294, %v309
      %v334 = vadd.f32 %v295, %v309
      %v335 = vadd.f32 %v296, %v309
      %v336 = vadd.f32 %v297, %v309
      %v337 = vadd.f32 %v298, %v309
      %v338 = vadd.f32 %v299, %v309
      %v339 = vadd.f32 %v300, %v309
      %v340 = vadd.f32 %v301, %v309
      %v341 = vadd.f32 %v302, %v309
      %v342 = vadd.f32 %v303, %v309
      %343 = vst [vmem:[%s231] sm:$0xff] %v311
      %344 = vst [vmem:[%s231 + $0x8] sm:$0xff] %v312
      %345 = vst [vmem:[%s231 + $0x10] sm:$0xff] %v313
      %346 = vst [vmem:[%s231 + $0x18] sm:$0xff] %v314
      %347 = vst [vmem:[%s231 + $0x20] sm:$0xff] %v315
      %348 = vst [vmem:[%s231 + $0x28] sm:$0xff] %v316
      %349 = vst [vmem:[%s231 + $0x30] sm:$0xff] %v317
      %350 = vst [vmem:[%s231 + $0x38] sm:$0xff] %v318
      %351 = vst [vmem:[%s231 + $0x40] sm:$0xff] %v319
      %352 = vst [vmem:[%s231 + $0x48] sm:$0xff] %v320
      %353 = vst [vmem:[%s231 + $0x50] sm:$0xff] %v321
      %354 = vst [vmem:[%s231 + $0x58] sm:$0xff] %v322
      %355 = vst [vmem:[%s231 + $0x60] sm:$0xff] %v323
      %356 = vst [vmem:[%s231 + $0x68] sm:$0xff] %v324
      %357 = vst [vmem:[%s231 + $0x70] sm:$0xff] %v325
      %358 = vst [vmem:[%s231 + $0x78] sm:$0xff] %v326
      %359 = vst [vmem:[%s231 + $0x80] sm:$0xff] %v327
      %360 = vst [vmem:[%s231 + $0x88] sm:$0xff] %v328
      %361 = vst [vmem:[%s231 + $0x90] sm:$0xff] %v329
      %362 = vst [vmem:[%s231 + $0x98] sm:$0xff] %v330
      %363 = vst [vmem:[%s231 + $0xa0] sm:$0xff] %v331
      %364 = vst [vmem:[%s231 + $0xa8] sm:$0xff] %v332
      %365 = vst [vmem:[%s231 + $0xb0] sm:$0xff] %v333
      %366 = vst [vmem:[%s231 + $0xb8] sm:$0xff] %v334
      %367 = vst [vmem:[%s231 + $0xc0] sm:$0xff] %v335
      %368 = vst [vmem:[%s231 + $0xc8] sm:$0xff] %v336
      %369 = vst [vmem:[%s231 + $0xd0] sm:$0xff] %v337
      %370 = vst [vmem:[%s231 + $0xd8] sm:$0xff] %v338
      %371 = vst [vmem:[%s231 + $0xe0] sm:$0xff] %v339
      %372 = vst [vmem:[%s231 + $0xe8] sm:$0xff] %v340
      %373 = vst [vmem:[%s231 + $0xf0] sm:$0xff] %v341
      %374 = vst [vmem:[%s231 + $0xf8] sm:$0xff] %v342
      %s375 = smul.u32 32, %s18
      %p376 = scmp.lt.s32.totalorder %s375, 63
      %s377 = scalar_select %p376, %s375, 63
      %p378 = scmp.lt.s32.totalorder %s19, 0
      %s379 = scalar_select %p378, %s19, 0
      %s380 = sadd.s32 %s379, %s377
      %s381 = smul.addr %s380, 8
      %s382 = scalar_lea.vmem %s3, %s381
      // Predicated region
      $region33: #{inception_forward.21} parent=31 // pred_check
        %p383 = pneg %p126
      $region34: #{inception_forward.21} parent=31 // pred_check_branch
        %385 = sbr.rel (%p383) target = $region36
      $region35: #{inception_forward.21} parent=31 // pred_region
        %s386 = smul.u32 32, %s18
      $region36: #{inception_forward.21} parent=31 // pred_fallthru
        _
    $region32: #{inception_forward.21} parent=5 // pred_fallthru
      _
    %p387 = scmp.le.s32.totalorder 2, %s9
    // Predicated region
    $region37: #{inception_forward.21} parent=5 // pred_check
      %p388 = pneg %p387
    $region38: #{inception_forward.21} parent=5 // pred_check_branch
      %390 = sbr.rel (%p388) target = $region40
    $region39: #{inception_forward.21} parent=5 // pred_region
      %s391 = ssub.s32 %s9, 2
      // Predicated region
      $region41: #{inception_forward.21} parent=39 // pred_check
        %p392 = pneg %p132
      $region42: #{inception_forward.21} parent=39 // pred_check_branch
        %394 = sbr.rel (%p392) target = $region44
      $region43: #{inception_forward.21} parent=39 // pred_region
        %s395 = smul.u32 32, %s20
        %p396 = scmp.lt.s32.totalorder %s395, 63
        %s397 = scalar_select %p396, %s395, 63
        %p398 = scmp.lt.s32.totalorder %s21, 0
        %s399 = scalar_select %p398, %s21, 0
        %s400 = sadd.s32 %s399, %s397
        %s401 = smul.addr %s400, 8
        %s402 = scalar_lea.vmem %s3, %s401
      $region44: #{inception_forward.21} parent=39 // pred_fallthru
        _
    $region40: #{inception_forward.21} parent=5 // pred_fallthru
      _
  $region6: #{inception_forward.21} parent=0 // loop_footer
    %s13 = sadd.s32 1, %s9
  $region7: #{inception_forward.21} parent=0 // loop_footer_branch
    %8 = sbr.rel target = $region3
  $region8: #{inception_forward.21} parent=0 // loop_exit
    _

// kernel: inception_forward.23
$region0: #{inception_forward.23}
  #allocation0 [shape = 'u32[]', space=smem, size = 0x4, offset = 0x4, fixed_abs, tag = 'smem constant byte address 0x4 - core index']
  #allocation1 [shape = 'u32[144,128]{1,0:T(1,128)}', space=vmem, size = 0x12000, scoped, tag = 'internal scratch']
  %s0 = inlined_call_operand.vmem [shape: f32[512,128], index: 0, kind: input, shape index: {}]
  %s1 = inlined_call_operand.vmem [shape: f32[1,128], index: 1, kind: input, shape index: {}]
  %s2 = inlined_call_operand.vmem [shape: f32[1,128], index: 2, kind: input, shape index: {}]
  %s3 = inlined_call_operand.vmem [shape: f32[512,128], index: 3, kind: input, shape index: {}]
  %s4 = inlined_call_operand.vmem [shape: f32[512,128], index: 4, kind: output, shape index: {}]
  %s5 = sld [smem:[#allocation0]]
  $region49: #{inception_forward.23} parent=0
    _
  %s7 = ssub.s32 1, %s5
  %s8 = scalar_select 0, %s7, %s5
  loop: start=0, step=1, limit=4
  $region2: #{inception_forward.23} parent=0 // loop_pre_header
    _
  $region3: #{inception_forward.23} parent=0 // loop_header
    %s10 = sphi 0, %s14
    %p11 = scmp.ge.s32.totalorder %s10, 4
    %s17 = sphi 0, %s29
    %s18 = sphi 0, %s25
    %s19 = sphi 0, %s17
    %s20 = sphi 0, %s18
    %s21 = sphi 0, %s19
    %s22 = sphi 0, %s20
    %s34 = sphi 0, %s36
    %s37 = sphi 0, %s34
    %s38 = sphi 0, %s37
    %s54 = sphi 0, %s38
    %s60 = sphi 0, %s62
    %s63 = sphi 0, %s60
    %s64 = sphi 0, %s63
    %s80 = sphi 0, %s64
    %s86 = sphi 0, %s88
    %s89 = sphi 0, %s86
    %s90 = sphi 0, %s89
    %s106 = sphi 0, %s90
    %s114 = sphi 0, %s116
    %s117 = sphi 0, %s114
    %s118 = sphi 0, %s117
    %s134 = sphi 0, %s118
    %s142 = sphi 0, %s144
    %s145 = sphi 0, %s142
    %s146 = sphi 0, %s145
    %s162 = sphi 0, %s146
  $region4: #{inception_forward.23} parent=0 // loop_header_branch
    %13 = sbr.rel (%p11) target = $region8
  $region5: #{inception_forward.23} parent=0 // loop_body
    %s15 = ssub.s32 %s10, 1
    %s16 = ssub.s32 %s10, 2
    %s23 = sadd.s32 1, %s18
    %p24 = scmp.ge.s32.totalorder %s23, 1
    %s25 = scalar_select %p24, 0, %s23
    %s26 = sadd.s32 1, %s17
    %s27 = scalar_select %p24, %s26, %s17
    %p28 = scmp.ge.s32.totalorder %s27, 2
    %s29 = scalar_select %p28, 0, %s27
    %s30 = ssub.s32 %s17, %s29
    %s31 = ssub.s32 %s18, %s25
    %s32 = sor.u32 %s30, %s31
    %p33 = scmp.eq.s32.totalorder %s32, 0
    %s35 = sadd.s32 %s34, 1
    %s36 = scalar_select %p33, %s34, %s35
    %p39 = pneg %p33
    %p40 = scmp.eq.s32.totalorder %s10, 1
    %p41 = por %p39, %p40
    %p42 = scmp.ne.s32.totalorder %s34, %s37
    %p43 = scmp.eq.s32.totalorder %s10, 0
    %p44 = por %p42, %p43
    %p45 = scmp.ne.s32.totalorder %s34, %s37
    %p46 = scmp.eq.s32.totalorder %s15, 1
    %p47 = por %p45, %p46
    %p48 = scmp.ne.s32.totalorder %s37, %s38
    %p49 = scmp.eq.s32.totalorder %s15, 0
    %p50 = por %p48, %p49
    %p51 = scmp.ne.s32.totalorder %s37, %s38
    %p52 = scmp.eq.s32.totalorder %s16, 1
    %p53 = por %p51, %p52
    %p55 = scmp.ne.s32.totalorder %s38, %s54
    %p56 = scmp.eq.s32.totalorder %s16, 0
    %p57 = por %p55, %p56
    %s58 = ssub.s32 %s18, %s25
    %p59 = scmp.eq.s32.totalorder %s58, 0
    %s61 = sadd.s32 %s60, 1
    %s62 = scalar_select %p59, %s60, %s61
    %p65 = pneg %p59
    %p66 = scmp.eq.s32.totalorder %s10, 1
    %p67 = por %p65, %p66
    %p68 = scmp.ne.s32.totalorder %s60, %s63
    %p69 = scmp.eq.s32.totalorder %s10, 0
    %p70 = por %p68, %p69
    %p71 = scmp.ne.s32.totalorder %s60, %s63
    %p72 = scmp.eq.s32.totalorder %s15, 1
    %p73 = por %p71, %p72
    %p74 = scmp.ne.s32.totalorder %s63, %s64
    %p75 = scmp.eq.s32.totalorder %s15, 0
    %p76 = por %p74, %p75
    %p77 = scmp.ne.s32.totalorder %s63, %s64
    %p78 = scmp.eq.s32.totalorder %s16, 1
    %p79 = por %p77, %p78
    %p81 = scmp.ne.s32.totalorder %s64, %s80
    %p82 = scmp.eq.s32.totalorder %s16, 0
    %p83 = por %p81, %p82
    %s84 = ssub.s32 %s18, %s25
    %p85 = scmp.eq.s32.totalorder %s84, 0
    %s87 = sadd.s32 %s86, 1
    %s88 = scalar_select %p85, %s86, %s87
    %p91 = pneg %p85
    %p92 = scmp.eq.s32.totalorder %s10, 1
    %p93 = por %p91, %p92
    %p94 = scmp.ne.s32.totalorder %s86, %s89
    %p95 = scmp.eq.s32.totalorder %s10, 0
    %p96 = por %p94, %p95
    %p97 = scmp.ne.s32.totalorder %s86, %s89
    %p98 = scmp.eq.s32.totalorder %s15, 1
    %p99 = por %p97, %p98
    %p100 = scmp.ne.s32.totalorder %s89, %s90
    %p101 = scmp.eq.s32.totalorder %s15, 0
    %p102 = por %p100, %p101
    %p103 = scmp.ne.s32.totalorder %s89, %s90
    %p104 = scmp.eq.s32.totalorder %s16, 1
    %p105 = por %p103, %p104
    %p107 = scmp.ne.s32.totalorder %s90, %s106
    %p108 = scmp.eq.s32.totalorder %s16, 0
    %p109 = por %p107, %p108
    %s110 = ssub.s32 %s17, %s29
    %s111 = ssub.s32 %s18, %s25
    %s112 = sor.u32 %s110, %s111
    %p113 = scmp.eq.s32.totalorder %s112, 0
    %s115 = sadd.s32 %s114, 1
    %s116 = scalar_select %p113, %s114, %s115
    %p119 = pneg %p113
    %p120 = scmp.eq.s32.totalorder %s10, 1
    %p121 = por %p119, %p120
    %p122 = scmp.ne.s32.totalorder %s114, %s117
    %p123 = scmp.eq.s32.totalorder %s10, 0
    %p124 = por %p122, %p123
    %p125 = scmp.ne.s32.totalorder %s114, %s117
    %p126 = scmp.eq.s32.totalorder %s15, 1
    %p127 = por %p125, %p126
    %p128 = scmp.ne.s32.totalorder %s117, %s118
    %p129 = scmp.eq.s32.totalorder %s15, 0
    %p130 = por %p128, %p129
    %p131 = scmp.ne.s32.totalorder %s117, %s118
    %p132 = scmp.eq.s32.totalorder %s16, 1
    %p133 = por %p131, %p132
    %p135 = scmp.ne.s32.totalorder %s118, %s134
    %p136 = scmp.eq.s32.totalorder %s16, 0
    %p137 = por %p135, %p136
    %s138 = ssub.s32 %s17, %s29
    %s139 = ssub.s32 %s18, %s25
    %s140 = sor.u32 %s138, %s139
    %p141 = scmp.eq.s32.totalorder %s140, 0
    %s143 = sadd.s32 %s142, 1
    %s144 = scalar_select %p141, %s142, %s143
    %p147 = pneg %p141
    %p148 = scmp.eq.s32.totalorder %s10, 1
    %p149 = por %p147, %p148
    %p150 = scmp.ne.s32.totalorder %s142, %s145
    %p151 = scmp.eq.s32.totalorder %s10, 0
    %p152 = por %p150, %p151
    %p153 = scmp.ne.s32.totalorder %s142, %s145
    %p154 = scmp.eq.s32.totalorder %s15, 1
    %p155 = por %p153, %p154
    %p156 = scmp.ne.s32.totalorder %s145, %s146
    %p157 = scmp.eq.s32.totalorder %s15, 0
    %p158 = por %p156, %p157
    %p159 = scmp.ne.s32.totalorder %s145, %s146
    %p160 = scmp.eq.s32.totalorder %s16, 1
    %p161 = por %p159, %p160
    %p163 = scmp.ne.s32.totalorder %s146, %s162
    %p164 = scmp.eq.s32.totalorder %s16, 0
    %p165 = por %p163, %p164
    %p166 = scmp.le.s32.totalorder 1, %s10
    %p167 = scmp.lt.s32.totalorder %s10, 3
    %p168 = pnand %p166, %p167
    %p169 = pneg %p168
    // Predicated region
    $region9: #{inception_forward.23} parent=5 // pred_check
      _
    $region10: #{inception_forward.23} parent=5 // pred_check_branch
      %171 = sbr.rel (%p168) target = $region12
    $region11: #{inception_forward.23} parent=5 // pred_region
      %s172 = ssub.s32 %s10, 1
      // Predicated region
      $region13: #{inception_forward.23} parent=11 // pred_check
        %p173 = pneg %p76
      $region14: #{inception_forward.23} parent=11 // pred_check_branch
        %175 = sbr.rel (%p173) target = $region16
      $region15: #{inception_forward.23} parent=11 // pred_region
        %p176 = scmp.lt.s32.totalorder %s20, 0
        %s177 = scalar_select %p176, %s20, 0
        %s178 = scalar_lea.vmem %s1, %s177
      $region16: #{inception_forward.23} parent=11 // pred_fallthru
        _
      // Predicated region
      $region17: #{inception_forward.23} parent=11 // pred_check
        %p179 = pneg %p102
      $region18: #{inception_forward.23} parent=11 // pred_check_branch
        %181 = sbr.rel (%p179) target = $region20
      $region19: #{inception_forward.23} parent=11 // pred_region
        %p182 = scmp.lt.s32.totalorder %s20, 0
        %s183 = scalar_select %p182, %s20, 0
        %s184 = scalar_lea.vmem %s2, %s183
      $region20: #{inception_forward.23} parent=11 // pred_fallthru
        _
    $region12: #{inception_forward.23} parent=5 // pred_fallthru
      _
    %p185 = scmp.lt.s32.totalorder %s10, 2
    // Predicated region
    $region21: #{inception_forward.23} parent=5 // pred_check
      %p186 = pneg %p185
    $region22: #{inception_forward.23} parent=5 // pred_check_branch
      %188 = sbr.rel (%p186) target = $region24
    $region23: #{inception_forward.23} parent=5 // pred_region
      // Predicated region
      $region25: #{inception_forward.23} parent=23 // pred_check
        %p189 = pneg %p44
      $region26: #{inception_forward.23} parent=23 // pred_check_branch
        %191 = sbr.rel (%p189) target = $region28
      $region27: #{inception_forward.23} parent=23 // pred_region
        %s192 = smul.u32 32, %s17
        %p193 = scmp.lt.s32.totalorder %s192, 63
        %s194 = scalar_select %p193, %s192, 63
        %p195 = scmp.lt.s32.totalorder %s18, 0
        %s196 = scalar_select %p195, %s18, 0
        %s197 = sadd.s32 %s196, %s194
        %s198 = smul.addr %s197, 8
        %s199 = scalar_lea.vmem %s0, %s198
        %s200 = smul.u32 32, %s17
      $region28: #{inception_forward.23} parent=23 // pred_fallthru
        _
      // Predicated region
      $region29: #{inception_forward.23} parent=23 // pred_check
        %p201 = pneg %p124
      $region30: #{inception_forward.23} parent=23 // pred_check_branch
        %203 = sbr.rel (%p201) target = $region32
      $region31: #{inception_forward.23} parent=23 // pred_region
        %s204 = smul.u32 32, %s17
        %p205 = scmp.lt.s32.totalorder %s204, 63
        %s206 = scalar_select %p205, %s204, 63
        %p207 = scmp.lt.s32.totalorder %s18, 0
        %s208 = scalar_select %p207, %s18, 0
        %s209 = sadd.s32 %s208, %s206
        %s210 = smul.addr %s209, 8
        %s211 = scalar_lea.vmem %s3, %s210
        %s212 = smul.u32 32, %s17
      $region32: #{inception_forward.23} parent=23 // pred_fallthru
        _
    $region24: #{inception_forward.23} parent=5 // pred_fallthru
      _
    %p213 = scmp.le.s32.totalorder 1, %s10
    %p214 = scmp.lt.s32.totalorder %s10, 3
    %p215 = pnand %p213, %p214
    %p216 = pneg %p215
    // Predicated region
    $region33: #{inception_forward.23} parent=5 // pred_check
      _
    $region34: #{inception_forward.23} parent=5 // pred_check_branch
      %218 = sbr.rel (%p215) target = $region36
    $region35: #{inception_forward.23} parent=5 // pred_region
      %s219 = ssub.s32 %s10, 1
      %s220 = smul.u32 32, %s19
      %p221 = scmp.lt.s32.totalorder %s220, 63
      %s222 = scalar_select %p221, %s220, 63
      %p223 = scmp.lt.s32.totalorder %s20, 0
      %s224 = scalar_select %p223, %s20, 0
      %s225 = sadd.s32 %s224, %s222
      %s226 = smul.addr %s225, 8
      %s227 = scalar_lea.vmem %s0, %s226
      %p228 = pneg %p50
      %p229 = pneg %p47
      %p230 = scmp.lt.s32.totalorder %s20, 0
      %s231 = scalar_select %p230, %s20, 0
      %s232 = scalar_lea.vmem %s1, %s231
      %p233 = pneg %p76
      %p234 = pneg %p73
      %p235 = scmp.lt.s32.totalorder %s20, 0
      %s236 = scalar_select %p235, %s20, 0
      %s237 = scalar_lea.vmem %s2, %s236
      %p238 = pneg %p102
      %p239 = pneg %p99
      %s240 = smul.u32 32, %s19
      %p241 = scmp.lt.s32.totalorder %s240, 63
      %s242 = scalar_select %p241, %s240, 63
      %p243 = scmp.lt.s32.totalorder %s20, 0
      %s244 = scalar_select %p243, %s20, 0
      %s245 = sadd.s32 %s244, %s242
      %s246 = smul.addr %s245, 8
      %s247 = scalar_lea.vmem %s3, %s246
      %p248 = pneg %p130
      %p249 = pneg %p127
      %p250 = pneg %p158
      %p251 = pneg %p155
      %s252 = smul.u32 32, %s19
      %p253 = scmp.lt.s32.totalorder %s252, 63
      %s254 = scalar_select %p253, %s252, 63
      %p255 = scmp.lt.s32.totalorder %s20, 0
      %s256 = scalar_select %p255, %s20, 0
      %s257 = sadd.s32 %s256, %s254
      %s258 = smul.addr %s257, 8
      %s259 = scalar_lea.vmem %s4, %s258
      %s260 = smul.u32 32, %s19
      %p261 = scmp.lt.s32.totalorder %s260, 63
      %s262 = scalar_select %p261, %s260, 63
      %p263 = scmp.lt.s32.totalorder %s20, 0
      %s264 = scalar_select %p263, %s20, 0
      %s265 = sadd.s32 %s264, %s262
      %s266 = smul.addr %s265, 8
      %s267 = scalar_lea.vmem %s0, %s266
      %s268 = smul.u32 32, %s19
      %p269 = scmp.lt.s32.totalorder %s20, 0
      %s270 = scalar_select %p269, %s20, 0
      %s271 = scalar_lea.vmem %s1, %s270
      %p272 = scmp.lt.s32.totalorder %s20, 0
      %s273 = scalar_select %p272, %s20, 0
      %s274 = scalar_lea.vmem %s2, %s273
      %s275 = smul.u32 32, %s19
      %p276 = scmp.lt.s32.totalorder %s275, 63
      %s277 = scalar_select %p276, %s275, 63
      %p278 = scmp.lt.s32.totalorder %s20, 0
      %s279 = scalar_select %p278, %s20, 0
      %s280 = sadd.s32 %s279, %s277
      %s281 = smul.addr %s280, 8
      %s282 = scalar_lea.vmem %s3, %s281
      %s283 = smul.u32 32, %s19
      %s284 = smul.u32 32, %s19
      %p285 = scmp.lt.s32.totalorder %s284, 63
      %s286 = scalar_select %p285, %s284, 63
      %p287 = scmp.lt.s32.totalorder %s20, 0
      %s288 = scalar_select %p287, %s20, 0
      %s289 = sadd.s32 %s288, %s286
      %s290 = smul.addr %s289, 8
      %s291 = scalar_lea.vmem %s4, %s290
      %s292 = smul.u32 32, %s19
      %v293 = vld [vmem:[%s267] sm:$0xff]
      %v294 = vld [vmem:[%s267 + $0x8] sm:$0xff]
      %v295 = vld [vmem:[%s267 + $0x10] sm:$0xff]
      %v296 = vld [vmem:[%s267 + $0x18] sm:$0xff]
      %v297 = vld [vmem:[%s267 + $0x20] sm:$0xff]
      %v298 = vld [vmem:[%s267 + $0x28] sm:$0xff]
      %v299 = vld [vmem:[%s267 + $0x30] sm:$0xff]
      %v300 = vld [vmem:[%s267 + $0x38] sm:$0xff]
      %v301 = vld [vmem:[%s267 + $0x40] sm:$0xff]
      %v302 = vld [vmem:[%s267 + $0x48] sm:$0xff]
      %v303 = vld [vmem:[%s267 + $0x50] sm:$0xff]
      %v304 = vld [vmem:[%s267 + $0x58] sm:$0xff]
      %v305 = vld [vmem:[%s267 + $0x60] sm:$0xff]
      %v306 = vld [vmem:[%s267 + $0x68] sm:$0xff]
      %v307 = vld [vmem:[%s267 + $0x70] sm:$0xff]
      %v308 = vld [vmem:[%s267 + $0x78] sm:$0xff]
      %v309 = vld [vmem:[%s267 + $0x80] sm:$0xff]
      %v310 = vld [vmem:[%s267 + $0x88] sm:$0xff]
      %v311 = vld [vmem:[%s267 + $0x90] sm:$0xff]
      %v312 = vld [vmem:[%s267 + $0x98] sm:$0xff]
      %v313 = vld [vmem:[%s267 + $0xa0] sm:$0xff]
      %v314 = vld [vmem:[%s267 + $0xa8] sm:$0xff]
      %v315 = vld [vmem:[%s267 + $0xb0] sm:$0xff]
      %v316 = vld [vmem:[%s267 + $0xb8] sm:$0xff]
      %v317 = vld [vmem:[%s267 + $0xc0] sm:$0xff]
      %v318 = vld [vmem:[%s267 + $0xc8] sm:$0xff]
      %v319 = vld [vmem:[%s267 + $0xd0] sm:$0xff]
      %v320 = vld [vmem:[%s267 + $0xd8] sm:$0xff]
      %v321 = vld [vmem:[%s267 + $0xe0] sm:$0xff]
      %v322 = vld [vmem:[%s267 + $0xe8] sm:$0xff]
      %v323 = vld [vmem:[%s267 + $0xf0] sm:$0xff]
      %v324 = vld [vmem:[%s267 + $0xf8] sm:$0xff]
      %v325 = vld [vmem:[%s271] sm:$0x1]
      %v327 = vlaneseq
      %v328 = vshrl.u32 %v327, 7
      %v329 = vsub.s32 0, %v328
      %v330 = vrot.slane %v325, %v329
      %v332 = vmul.f32 %v293, %v330
      %v333 = vmul.f32 %v294, %v330
      %v334 = vmul.f32 %v295, %v330
      %v335 = vmul.f32 %v296, %v330
      %v336 = vmul.f32 %v297, %v330
      %v337 = vmul.f32 %v298, %v330
      %v338 = vmul.f32 %v299, %v330
      %v339 = vmul.f32 %v300, %v330
      %v340 = vmul.f32 %v301, %v330
      %v341 = vmul.f32 %v302, %v330
      %v342 = vmul.f32 %v303, %v330
      %v343 = vmul.f32 %v304, %v330
      %v344 = vmul.f32 %v305, %v330
      %v345 = vmul.f32 %v306, %v330
      %v346 = vmul.f32 %v307, %v330
      %v347 = vmul.f32 %v308, %v330
      %v348 = vmul.f32 %v309, %v330
      %v349 = vmul.f32 %v310, %v330
      %v350 = vmul.f32 %v311, %v330
      %v351 = vmul.f32 %v312, %v330
      %v352 = vmul.f32 %v313, %v330
      %v353 = vmul.f32 %v314, %v330
      %v354 = vmul.f32 %v315, %v330
      %v355 = vmul.f32 %v316, %v330
      %v356 = vmul.f32 %v317, %v330
      %v357 = vmul.f32 %v318, %v330
      %v358 = vmul.f32 %v319, %v330
      %v359 = vmul.f32 %v320, %v330
      %v360 = vmul.f32 %v321, %v330
      %v361 = vmul.f32 %v322, %v330
      %v362 = vmul.f32 %v323, %v330
      %v363 = vmul.f32 %v324, %v330
      %v364 = vld [vmem:[%s274] sm:$0x1]
      %v366 = vlaneseq
      %v367 = vshrl.u32 %v366, 7
      %v368 = vsub.s32 0, %v367
      %v369 = vrot.slane %v364, %v368
      %v371 = vadd.f32 %v332, %v369
      %v372 = vadd.f32 %v333, %v369
      %v373 = vadd.f32 %v334, %v369
      %v374 = vadd.f32 %v335, %v369
      %v375 = vadd.f32 %v336, %v369
      %v376 = vadd.f32 %v337, %v369
      %v377 = vadd.f32 %v338, %v369
      %v378 = vadd.f32 %v339, %v369
      %v379 = vadd.f32 %v340, %v369
      %v380 = vadd.f32 %v341, %v369
      %v381 = vadd.f32 %v342, %v369
      %v382 = vadd.f32 %v343, %v369
      %v383 = vadd.f32 %v344, %v369
      %v384 = vadd.f32 %v345, %v369
      %v385 = vadd.f32 %v346, %v369
      %v386 = vadd.f32 %v347, %v369
      %v387 = vadd.f32 %v348, %v369
      %v388 = vadd.f32 %v349, %v369
      %v389 = vadd.f32 %v350, %v369
      %v390 = vadd.f32 %v351, %v369
      %v391 = vadd.f32 %v352, %v369
      %v392 = vadd.f32 %v353, %v369
      %v393 = vadd.f32 %v354, %v369
      %v394 = vadd.f32 %v355, %v369
      %v395 = vadd.f32 %v356, %v369
      %v396 = vadd.f32 %v357, %v369
      %v397 = vadd.f32 %v358, %v369
      %v398 = vadd.f32 %v359, %v369
      %v399 = vadd.f32 %v360, %v369
      %v400 = vadd.f32 %v361, %v369
      %v401 = vadd.f32 %v362, %v369
      %v402 = vadd.f32 %v363, %v369
      %v403 = vmax.f32 %v371, 0.0
      %v404 = vmax.f32 %v372, 0.0
      %v405 = vmax.f32 %v373, 0.0
      %v406 = vmax.f32 %v374, 0.0
      %v407 = vmax.f32 %v375, 0.0
      %v408 = vmax.f32 %v376, 0.0
      %v409 = vmax.f32 %v377, 0.0
      %v410 = vmax.f32 %v378, 0.0
      %v411 = vmax.f32 %v379, 0.0
      %v412 = vmax.f32 %v380, 0.0
      %v413 = vmax.f32 %v381, 0.0
      %v414 = vmax.f32 %v382, 0.0
      %v415 = vmax.f32 %v383, 0.0
      %v416 = vmax.f32 %v384, 0.0
      %v417 = vmax.f32 %v385, 0.0
      %v418 = vmax.f32 %v386, 0.0
      %v419 = vmax.f32 %v387, 0.0
      %v420 = vmax.f32 %v388, 0.0
      %v421 = vmax.f32 %v389, 0.0
      %v422 = vmax.f32 %v390, 0.0
      %v423 = vmax.f32 %v391, 0.0
      %v424 = vmax.f32 %v392, 0.0
      %v425 = vmax.f32 %v393, 0.0
      %v426 = vmax.f32 %v394, 0.0
      %v427 = vmax.f32 %v395, 0.0
      %v428 = vmax.f32 %v396, 0.0
      %v429 = vmax.f32 %v397, 0.0
      %v430 = vmax.f32 %v398, 0.0
      %v431 = vmax.f32 %v399, 0.0
      %v432 = vmax.f32 %v400, 0.0
      %v433 = vmax.f32 %v401, 0.0
      %v434 = vmax.f32 %v402, 0.0
      %v435 = vld [vmem:[%s282] sm:$0xff]
      %v436 = vld [vmem:[%s282 + $0x8] sm:$0xff]
      %v437 = vld [vmem:[%s282 + $0x10] sm:$0xff]
      %v438 = vld [vmem:[%s282 + $0x18] sm:$0xff]
      %v439 = vld [vmem:[%s282 + $0x20] sm:$0xff]
      %v440 = vld [vmem:[%s282 + $0x28] sm:$0xff]
      %v441 = vld [vmem:[%s282 + $0x30] sm:$0xff]
      %v442 = vld [vmem:[%s282 + $0x38] sm:$0xff]
      %v443 = vld [vmem:[%s282 + $0x40] sm:$0xff]
      %v444 = vld [vmem:[%s282 + $0x48] sm:$0xff]
      %v445 = vld [vmem:[%s282 + $0x50] sm:$0xff]
      %v446 = vld [vmem:[%s282 + $0x58] sm:$0xff]
      %v447 = vld [vmem:[%s282 + $0x60] sm:$0xff]
      %v448 = vld [vmem:[%s282 + $0x68] sm:$0xff]
      %v449 = vld [vmem:[%s282 + $0x70] sm:$0xff]
      %v450 = vld [vmem:[%s282 + $0x78] sm:$0xff]
      %v451 = vld [vmem:[%s282 + $0x80] sm:$0xff]
      %v452 = vld [vmem:[%s282 + $0x88] sm:$0xff]
      %v453 = vld [vmem:[%s282 + $0x90] sm:$0xff]
      %v454 = vld [vmem:[%s282 + $0x98] sm:$0xff]
      %v455 = vld [vmem:[%s282 + $0xa0] sm:$0xff]
      %v456 = vld [vmem:[%s282 + $0xa8] sm:$0xff]
      %v457 = vld [vmem:[%s282 + $0xb0] sm:$0xff]
      %v458 = vld [vmem:[%s282 + $0xb8] sm:$0xff]
      %v459 = vld [vmem:[%s282 + $0xc0] sm:$0xff]
      %v460 = vld [vmem:[%s282 + $0xc8] sm:$0xff]
      %v461 = vld [vmem:[%s282 + $0xd0] sm:$0xff]
      %v462 = vld [vmem:[%s282 + $0xd8] sm:$0xff]
      %v463 = vld [vmem:[%s282 + $0xe0] sm:$0xff]
      %v464 = vld [vmem:[%s282 + $0xe8] sm:$0xff]
      %v465 = vld [vmem:[%s282 + $0xf0] sm:$0xff]
      %v466 = vld [vmem:[%s282 + $0xf8] sm:$0xff]
      %v467 = vadd.f32 %v403, %v435
      %v468 = vadd.f32 %v404, %v436
      %v469 = vadd.f32 %v405, %v437
      %v470 = vadd.f32 %v406, %v438
      %v471 = vadd.f32 %v407, %v439
      %v472 = vadd.f32 %v408, %v440
      %v473 = vadd.f32 %v409, %v441
      %v474 = vadd.f32 %v410, %v442
      %v475 = vadd.f32 %v411, %v443
      %v476 = vadd.f32 %v412, %v444
      %v477 = vadd.f32 %v413, %v445
      %v478 = vadd.f32 %v414, %v446
      %v479 = vadd.f32 %v415, %v447
      %v480 = vadd.f32 %v416, %v448
      %v481 = vadd.f32 %v417, %v449
      %v482 = vadd.f32 %v418, %v450
      %v483 = vadd.f32 %v419, %v451
      %v484 = vadd.f32 %v420, %v452
      %v485 = vadd.f32 %v421, %v453
      %v486 = vadd.f32 %v422, %v454
      %v487 = vadd.f32 %v423, %v455
      %v488 = vadd.f32 %v424, %v456
      %v489 = vadd.f32 %v425, %v457
      %v490 = vadd.f32 %v426, %v458
      %v491 = vadd.f32 %v427, %v459
      %v492 = vadd.f32 %v428, %v460
      %v493 = vadd.f32 %v429, %v461
      %v494 = vadd.f32 %v430, %v462
      %v495 = vadd.f32 %v431, %v463
      %v496 = vadd.f32 %v432, %v464
      %v497 = vadd.f32 %v433, %v465
      %v498 = vadd.f32 %v434, %v466
      %499 = vst [vmem:[%s291] sm:$0xff] %v467
      %500 = vst [vmem:[%s291 + $0x8] sm:$0xff] %v468
      %501 = vst [vmem:[%s291 + $0x10] sm:$0xff] %v469
      %502 = vst [vmem:[%s291 + $0x18] sm:$0xff] %v470
      %503 = vst [vmem:[%s291 + $0x20] sm:$0xff] %v471
      %504 = vst [vmem:[%s291 + $0x28] sm:$0xff] %v472
      %505 = vst [vmem:[%s291 + $0x30] sm:$0xff] %v473
      %506 = vst [vmem:[%s291 + $0x38] sm:$0xff] %v474
      %507 = vst [vmem:[%s291 + $0x40] sm:$0xff] %v475
      %508 = vst [vmem:[%s291 + $0x48] sm:$0xff] %v476
      %509 = vst [vmem:[%s291 + $0x50] sm:$0xff] %v477
      %510 = vst [vmem:[%s291 + $0x58] sm:$0xff] %v478
      %511 = vst [vmem:[%s291 + $0x60] sm:$0xff] %v479
      %512 = vst [vmem:[%s291 + $0x68] sm:$0xff] %v480
      %513 = vst [vmem:[%s291 + $0x70] sm:$0xff] %v481
      %514 = vst [vmem:[%s291 + $0x78] sm:$0xff] %v482
      %515 = vst [vmem:[%s291 + $0x80] sm:$0xff] %v483
      %516 = vst [vmem:[%s291 + $0x88] sm:$0xff] %v484
      %517 = vst [vmem:[%s291 + $0x90] sm:$0xff] %v485
      %518 = vst [vmem:[%s291 + $0x98] sm:$0xff] %v486
      %519 = vst [vmem:[%s291 + $0xa0] sm:$0xff] %v487
      %520 = vst [vmem:[%s291 + $0xa8] sm:$0xff] %v488
      %521 = vst [vmem:[%s291 + $0xb0] sm:$0xff] %v489
      %522 = vst [vmem:[%s291 + $0xb8] sm:$0xff] %v490
      %523 = vst [vmem:[%s291 + $0xc0] sm:$0xff] %v491
      %524 = vst [vmem:[%s291 + $0xc8] sm:$0xff] %v492
      %525 = vst [vmem:[%s291 + $0xd0] sm:$0xff] %v493
      %526 = vst [vmem:[%s291 + $0xd8] sm:$0xff] %v494
      %527 = vst [vmem:[%s291 + $0xe0] sm:$0xff] %v495
      %528 = vst [vmem:[%s291 + $0xe8] sm:$0xff] %v496
      %529 = vst [vmem:[%s291 + $0xf0] sm:$0xff] %v497
      %530 = vst [vmem:[%s291 + $0xf8] sm:$0xff] %v498
      %s531 = smul.u32 32, %s19
      %p532 = scmp.lt.s32.totalorder %s531, 63
      %s533 = scalar_select %p532, %s531, 63
      %p534 = scmp.lt.s32.totalorder %s20, 0
      %s535 = scalar_select %p534, %s20, 0
      %s536 = sadd.s32 %s535, %s533
      %s537 = smul.addr %s536, 8
      %s538 = scalar_lea.vmem %s4, %s537
      // Predicated region
      $region37: #{inception_forward.23} parent=35 // pred_check
        %p539 = pneg %p155
      $region38: #{inception_forward.23} parent=35 // pred_check_branch
        %541 = sbr.rel (%p539) target = $region40
      $region39: #{inception_forward.23} parent=35 // pred_region
        %s542 = smul.u32 32, %s19
      $region40: #{inception_forward.23} parent=35 // pred_fallthru
        _
    $region36: #{inception_forward.23} parent=5 // pred_fallthru
      _
    %p543 = scmp.le.s32.totalorder 2, %s10
    // Predicated region
    $region41: #{inception_forward.23} parent=5 // pred_check
      %p544 = pneg %p543
    $region42: #{inception_forward.23} parent=5 // pred_check_branch
      %546 = sbr.rel (%p544) target = $region44
    $region43: #{inception_forward.23} parent=5 // pred_region
      %s547 = ssub.s32 %s10, 2
      // Predicated region
      $region45: #{inception_forward.23} parent=43 // pred_check
        %p548 = pneg %p161
      $region46: #{inception_forward.23} parent=43 // pred_check_branch
        %550 = sbr.rel (%p548) target = $region48
      $region47: #{inception_forward.23} parent=43 // pred_region
        %s551 = smul.u32 32, %s21
        %p552 = scmp.lt.s32.totalorder %s551, 63
        %s553 = scalar_select %p552, %s551, 63
        %p554 = scmp.lt.s32.totalorder %s22, 0
        %s555 = scalar_select %p554, %s22, 0
        %s556 = sadd.s32 %s555, %s553
        %s557 = smul.addr %s556, 8
        %s558 = scalar_lea.vmem %s4, %s557
      $region48: #{inception_forward.23} parent=43 // pred_fallthru
        _
    $region44: #{inception_forward.23} parent=5 // pred_fallthru
      _
  $region6: #{inception_forward.23} parent=0 // loop_footer
    %s14 = sadd.s32 1, %s10
  $region7: #{inception_forward.23} parent=0 // loop_footer_branch
    %9 = sbr.rel target = $region3
  $region8: #{inception_forward.23} parent=0 // loop_exit
    _

</llo_original>
